<compile_context>
chip_gen: v6e
topology: v6e:2x2x1
jax: 0.10.0
libtpu: 0.0.40
codegen_flags: <defaults>
</compile_context>

<pallas_src>
import jax
import jax.numpy as jnp
import numpy as np
from jax.experimental import pallas as pl
from jax.experimental.pallas import tpu as pltpu

INPUT_SIZE = 63          # fixed by the module's forward() (global `input_size`)
HIDDEN = 500             # hidden_size1 from the spec
HIDDEN_PAD = 512         # per-gate lane padding (multiple of 128)
GATES = 3 * HIDDEN_PAD   # pruned gate width: i | g | o (forget gate eliminated)
NUM_CLASSES = 8          # num_classes
OUT_PAD = 128            # lane-dense padded output width


def _lstm_head_kernel(x_ref, w1_ref, b1_ref, w2_ref, b2_ref, wl_ref, bl_ref, o_ref):
    Hp = HIDDEN_PAD

    def sigmoid(z):
        # single EUP tanh per sigmoid (avoids exp + reciprocal lowering)
        return 0.5 * (jnp.tanh(0.5 * z) + 1.0)

    # ---- LSTM layer 1, single timestep, h0 = c0 = 0 ----------------------
    # gates = x @ W_ih^T + (b_ih + b_hh); recurrent & forget-gate terms pruned.
    x = x_ref[...].astype(jnp.bfloat16)                                   # (tb, 63)
    g1 = jnp.dot(x, w1_ref[...], preferred_element_type=jnp.float32) + b1_ref[...]
    c1 = sigmoid(g1[:, 0:Hp]) * jnp.tanh(g1[:, Hp:2 * Hp])                # i * g
    h1 = sigmoid(g1[:, 2 * Hp:3 * Hp]) * jnp.tanh(c1)                     # o * tanh(c)

    # ---- LSTM layer 2 (input = layer-1 output), h0 = c0 = 0 --------------
    g2 = (jnp.dot(h1.astype(jnp.bfloat16), w2_ref[...],
                  preferred_element_type=jnp.float32) + b2_ref[...])
    c2 = sigmoid(g2[:, 0:Hp]) * jnp.tanh(g2[:, Hp:2 * Hp])
    h2 = sigmoid(g2[:, 2 * Hp:3 * Hp]) * jnp.tanh(c2)                     # (tb, Hp)

    # ---- Linear head (lane-dense, padded to 128 output lanes) ------------
    o_ref[...] = (jnp.dot(h2.astype(jnp.bfloat16), wl_ref[...],
                          preferred_element_type=jnp.float32) + bl_ref[...])


def _choose_tb(batch):
    if batch <= 8:
        return batch                          # one step; block dim == full batch dim
    cap = 512 if batch >= 1024 else 256       # big tiles amortize per-step overhead
    half = pl.cdiv(batch, 2)                  # >= 2 grid steps -> both v7x TCs busy
    return ((min(cap, half) + 7) // 8) * 8


def net_forward(x, params, *, tb=None):
    """x: (B, INPUT_SIZE) float32 -> logits (B, NUM_CLASSES) float32."""
    B = x.shape[0]
    w1t, b1, w2t, b2, wlt, bl = params
    if tb is None:
        tb = _choose_tb(B)
    grid = pl.cdiv(B, tb)

    out = pl.pallas_call(
        _lstm_head_kernel,
        out_shape=jax.ShapeDtypeStruct((B, OUT_PAD), jnp.float32),
        grid_spec=pltpu.PrefetchScalarGridSpec(
            num_scalar_prefetch=0,
            grid=(grid,),
            in_specs=[
                pl.BlockSpec((tb, INPUT_SIZE), lambda i: (i, 0)),       # x tile (no K-pad)
                pl.BlockSpec((INPUT_SIZE, GATES), lambda i: (0, 0)),    # W_ih_l0^T bf16 (i|g|o)
                pl.BlockSpec((1, GATES), lambda i: (0, 0)),             # b_ih_l0+b_hh_l0 (f32)
                pl.BlockSpec((HIDDEN_PAD, GATES), lambda i: (0, 0)),    # W_ih_l1^T bf16 (i|g|o)
                pl.BlockSpec((1, GATES), lambda i: (0, 0)),             # b_ih_l1+b_hh_l1 (f32)
                pl.BlockSpec((HIDDEN_PAD, OUT_PAD), lambda i: (0, 0)),  # W_lin^T bf16 (lane-pad)
                pl.BlockSpec((1, OUT_PAD), lambda i: (0, 0)),           # b_lin (lane-pad, f32)
            ],
            out_specs=pl.BlockSpec((tb, OUT_PAD), lambda i: (i, 0)),
        ),
        compiler_params=pltpu.CompilerParams(dimension_semantics=("parallel",)),
    )(x.astype(jnp.float32), w1t, b1, w2t, b2, wlt, bl)

    return out[:, :NUM_CLASSES]


def init_raw_params(key):
    """PyTorch-style uniform(-1/sqrt(H), 1/sqrt(H)) init, full (unpruned) layout."""
    H = HIDDEN
    k = 1.0 / np.sqrt(H)
    ks = jax.random.split(key, 10)
    u = lambda kk, shape: jax.random.uniform(kk, shape, jnp.float32, -k, k)
    w_ih0 = u(ks[0], (4 * H, INPUT_SIZE))
    w_hh0 = u(ks[1], (4 * H, H))
    b_ih0 = u(ks[2], (4 * H,))
    b_hh0 = u(ks[3], (4 * H,))
    w_ih1 = u(ks[4], (4 * H, H))
    w_hh1 = u(ks[5], (4 * H, H))
    b_ih1 = u(ks[6], (4 * H,))
    b_hh1 = u(ks[7], (4 * H,))
    w_lin = u(ks[8], (NUM_CLASSES, H))
    b_lin = u(ks[9], (NUM_CLASSES,))
    return (w_ih0, w_hh0, b_ih0, b_hh0, w_ih1, w_hh1, b_ih1, b_hh1, w_lin, b_lin)


def pack_params(raw):
    """PyTorch layout -> kernel layout: drop W_hh & forget gate, transpose, pad lanes, bf16."""
    (w_ih0, _w_hh0, b_ih0, b_hh0, w_ih1, _w_hh1, b_ih1, b_hh1, w_lin, b_lin) = raw
    H, Hp = HIDDEN, HIDDEN_PAD

    def pack_w(w_ih, k_in, k_pad):
        # (4H, k_in) -> keep i, g, o rows (PyTorch gate order i,f,g,o), transpose,
        # lane-pad each gate H -> Hp, zero-pad K rows -> k_pad, cast to bf16 for the MXU.
        wt = jnp.zeros((k_pad, 3 * Hp), jnp.float32)
        wt = wt.at[:k_in, 0 * Hp:0 * Hp + H].set(w_ih[0 * H:1 * H].T)   # i
        wt = wt.at[:k_in, 1 * Hp:1 * Hp + H].set(w_ih[2 * H:3 * H].T)   # g
        wt = wt.at[:k_in, 2 * Hp:2 * Hp + H].set(w_ih[3 * H:4 * H].T)   # o
        return wt.astype(jnp.bfloat16)

    def pack_b(b):
        bt = jnp.zeros((1, 3 * Hp), jnp.float32)
        bt = bt.at[0, 0 * Hp:0 * Hp + H].set(b[0 * H:1 * H])
        bt = bt.at[0, 1 * Hp:1 * Hp + H].set(b[2 * H:3 * H])
        bt = bt.at[0, 2 * Hp:2 * Hp + H].set(b[3 * H:4 * H])
        return bt

    w1t = pack_w(w_ih0, INPUT_SIZE, INPUT_SIZE)        # (63, 1536) bf16, no K-pad
    b1 = pack_b(b_ih0 + b_hh0)                         # (1, 1536) f32
    w2t = pack_w(w_ih1, H, Hp)                         # (512, 1536) bf16
    b2 = pack_b(b_ih1 + b_hh1)                         # (1, 1536) f32
    wlt = (jnp.zeros((Hp, OUT_PAD), jnp.float32)
           .at[:H, :NUM_CLASSES].set(w_lin.T)).astype(jnp.bfloat16)     # (512, 128) bf16
    bl = jnp.zeros((1, OUT_PAD), jnp.float32).at[0, :NUM_CLASSES].set(b_lin)
    return (w1t, b1, w2t, b2, wlt, bl)


def reference(x, raw):
    """Pure-numpy f32 reference of the FULL PyTorch forward (incl. forget gate & W_hh)."""
    (w_ih0, w_hh0, b_ih0, b_hh0, w_ih1, w_hh1, b_ih1, b_hh1, w_lin, b_lin) = [
        np.asarray(a, np.float32) for a in raw]
    x = np.asarray(x, np.float32)
    H = HIDDEN

    def sig(z):
        return 1.0 / (1.0 + np.exp(-z))

    def cell(inp, w_ih, w_hh, b_ih, b_hh, h0, c0):
        g = inp @ w_ih.T + h0 @ w_hh.T + b_ih + b_hh
        i = sig(g[:, 0:H])
        f = sig(g[:, H:2 * H])
        gg = np.tanh(g[:, 2 * H:3 * H])
        o = sig(g[:, 3 * H:4 * H])
        c = f * c0 + i * gg
        return o * np.tanh(c)

    z = np.zeros((x.shape[0], H), np.float32)
    h1 = cell(x, w_ih0, w_hh0, b_ih0, b_hh0, z, z)   # inter-layer dropout: eval no-op
    h2 = cell(h1, w_ih1, w_hh1, b_ih1, b_hh1, z, z)
    return h2 @ w_lin.T + b_lin


if __name__ == "__main__":
    key = jax.random.PRNGKey(0)
    kx, kp = jax.random.split(key)

    raw = init_raw_params(kp)
    params = pack_params(raw)

    # B=16 -> tb=8, grid=2 (dual-TC friendly); B=13 exercises the masked partial block.
    for B in (16, 13):
        x = jax.random.normal(jax.random.fold_in(kx, B), (B, INPUT_SIZE), dtype=jnp.float32)
        out = jax.block_until_ready(net_forward(x, params))
        ref = reference(x, raw)
        assert out.shape == (B, NUM_CLASSES)
        diff = float(np.max(np.abs(np.asarray(out) - ref)))
        assert np.allclose(np.asarray(out), ref, rtol=2e-2, atol=2e-2), \
            f"mismatch at B={B}, max_abs_err={diff}"
    print("KERNEL_OK")
</pallas_src>

<mosaic_0001>
module attributes {stable_mosaic.version = 11 : i64} {
  func.func @_lstm_head_kernel(%arg0: i32, %arg1: memref<8x63xf32, #tpu.memory_space<vmem>>, %arg2: memref<63x1536xbf16, #tpu.memory_space<vmem>>, %arg3: memref<1x1536xf32, #tpu.memory_space<vmem>>, %arg4: memref<512x1536xbf16, #tpu.memory_space<vmem>>, %arg5: memref<1x1536xf32, #tpu.memory_space<vmem>>, %arg6: memref<512x128xbf16, #tpu.memory_space<vmem>>, %arg7: memref<1x128xf32, #tpu.memory_space<vmem>>, %arg8: memref<8x128xf32, #tpu.memory_space<vmem>>) attributes {dimension_semantics = [#tpu.dimension_semantics<parallel>], iteration_bounds = array<i64: 2>, scalar_prefetch = 0 : i64, scratch_operands = 0 : i64, tpu.core_type = #tpu.core_type<tc>, window_params = [{transform_indices = @transform_0, window_bounds = array<i64: 8, 63>}, {pipeline_mode = #tpu.pipeline_mode<synchronous>, transform_indices = @transform_1, window_bounds = array<i64: 63, 1536>}, {pipeline_mode = #tpu.pipeline_mode<synchronous>, transform_indices = @transform_2, window_bounds = array<i64: 1, 1536>}, {pipeline_mode = #tpu.pipeline_mode<synchronous>, transform_indices = @transform_3, window_bounds = array<i64: 512, 1536>}, {pipeline_mode = #tpu.pipeline_mode<synchronous>, transform_indices = @transform_4, window_bounds = array<i64: 1, 1536>}, {pipeline_mode = #tpu.pipeline_mode<synchronous>, transform_indices = @transform_5, window_bounds = array<i64: 512, 128>}, {pipeline_mode = #tpu.pipeline_mode<synchronous>, transform_indices = @transform_6, window_bounds = array<i64: 1, 128>}, {transform_indices = @transform_7, window_bounds = array<i64: 8, 128>}]} {
    %c0 = arith.constant 0 : index
    %c0_0 = arith.constant 0 : index
    %0 = vector.load %arg1[%c0, %c0_0] : memref<8x63xf32, #tpu.memory_space<vmem>>, vector<8x63xf32>
    %1 = arith.truncf %0 : vector<8x63xf32> to vector<8x63xbf16>
    %c0_1 = arith.constant 0 : index
    %c0_2 = arith.constant 0 : index
    %2 = vector.load %arg2[%c0_1, %c0_2] : memref<63x1536xbf16, #tpu.memory_space<vmem>>, vector<63x1536xbf16>
    %cst = arith.constant dense<0.000000e+00> : vector<8x1536xf32>
    %3 = tpu.matmul %1, %2, %cst {dimension_numbers = #tpu.dot_dimension_numbers<[1], [0], [0], [1], [0, 0, 1, 1], [], []>} : vector<8x63xbf16>, vector<63x1536xbf16>, vector<8x1536xf32> -> vector<8x1536xf32>
    %c0_3 = arith.constant 0 : index
    %c0_4 = arith.constant 0 : index
    %4 = vector.load %arg3[%c0_3, %c0_4] : memref<1x1536xf32, #tpu.memory_space<vmem>>, vector<1x1536xf32>
    %5 = vector.broadcast %4 : vector<1x1536xf32> to vector<8x1536xf32>
    %6 = arith.addf %3, %5 : vector<8x1536xf32>
    %7 = vector.extract_strided_slice %6 {offsets = [0, 0], sizes = [8, 512], strides = [1, 1]} : vector<8x1536xf32> to vector<8x512xf32>
    %cst_5 = arith.constant 5.000000e-01 : f32
    %8 = vector.broadcast %cst_5 : f32 to vector<8x512xf32>
    %9 = arith.mulf %8, %7 : vector<8x512xf32>
    %10 = math.tanh %9 : vector<8x512xf32>
    %cst_6 = arith.constant 1.000000e+00 : f32
    %11 = vector.broadcast %cst_6 : f32 to vector<8x512xf32>
    %12 = arith.addf %10, %11 : vector<8x512xf32>
    %cst_7 = arith.constant 5.000000e-01 : f32
    %13 = vector.broadcast %cst_7 : f32 to vector<8x512xf32>
    %14 = arith.mulf %13, %12 : vector<8x512xf32>
    %15 = vector.extract_strided_slice %6 {offsets = [0, 512], sizes = [8, 512], strides = [1, 1]} : vector<8x1536xf32> to vector<8x512xf32>
    %16 = math.tanh %15 : vector<8x512xf32>
    %17 = arith.mulf %14, %16 : vector<8x512xf32>
    %18 = vector.extract_strided_slice %6 {offsets = [0, 1024], sizes = [8, 512], strides = [1, 1]} : vector<8x1536xf32> to vector<8x512xf32>
    %cst_8 = arith.constant 5.000000e-01 : f32
    %19 = vector.broadcast %cst_8 : f32 to vector<8x512xf32>
    %20 = arith.mulf %19, %18 : vector<8x512xf32>
    %21 = math.tanh %20 : vector<8x512xf32>
    %cst_9 = arith.constant 1.000000e+00 : f32
    %22 = vector.broadcast %cst_9 : f32 to vector<8x512xf32>
    %23 = arith.addf %21, %22 : vector<8x512xf32>
    %cst_10 = arith.constant 5.000000e-01 : f32
    %24 = vector.broadcast %cst_10 : f32 to vector<8x512xf32>
    %25 = arith.mulf %24, %23 : vector<8x512xf32>
    %26 = math.tanh %17 : vector<8x512xf32>
    %27 = arith.mulf %25, %26 : vector<8x512xf32>
    %28 = arith.truncf %27 : vector<8x512xf32> to vector<8x512xbf16>
    %c0_11 = arith.constant 0 : index
    %c0_12 = arith.constant 0 : index
    %29 = vector.load %arg4[%c0_11, %c0_12] : memref<512x1536xbf16, #tpu.memory_space<vmem>>, vector<512x1536xbf16>
    %cst_13 = arith.constant dense<0.000000e+00> : vector<8x1536xf32>
    %30 = tpu.matmul %28, %29, %cst_13 {dimension_numbers = #tpu.dot_dimension_numbers<[1], [0], [0], [1], [0, 0, 1, 1], [], []>} : vector<8x512xbf16>, vector<512x1536xbf16>, vector<8x1536xf32> -> vector<8x1536xf32>
    %c0_14 = arith.constant 0 : index
    %c0_15 = arith.constant 0 : index
    %31 = vector.load %arg5[%c0_14, %c0_15] : memref<1x1536xf32, #tpu.memory_space<vmem>>, vector<1x1536xf32>
    %32 = vector.broadcast %31 : vector<1x1536xf32> to vector<8x1536xf32>
    %33 = arith.addf %30, %32 : vector<8x1536xf32>
    %34 = vector.extract_strided_slice %33 {offsets = [0, 0], sizes = [8, 512], strides = [1, 1]} : vector<8x1536xf32> to vector<8x512xf32>
    %cst_16 = arith.constant 5.000000e-01 : f32
    %35 = vector.broadcast %cst_16 : f32 to vector<8x512xf32>
    %36 = arith.mulf %35, %34 : vector<8x512xf32>
    %37 = math.tanh %36 : vector<8x512xf32>
    %cst_17 = arith.constant 1.000000e+00 : f32
    %38 = vector.broadcast %cst_17 : f32 to vector<8x512xf32>
    %39 = arith.addf %37, %38 : vector<8x512xf32>
    %cst_18 = arith.constant 5.000000e-01 : f32
    %40 = vector.broadcast %cst_18 : f32 to vector<8x512xf32>
    %41 = arith.mulf %40, %39 : vector<8x512xf32>
    %42 = vector.extract_strided_slice %33 {offsets = [0, 512], sizes = [8, 512], strides = [1, 1]} : vector<8x1536xf32> to vector<8x512xf32>
    %43 = math.tanh %42 : vector<8x512xf32>
    %44 = arith.mulf %41, %43 : vector<8x512xf32>
    %45 = vector.extract_strided_slice %33 {offsets = [0, 1024], sizes = [8, 512], strides = [1, 1]} : vector<8x1536xf32> to vector<8x512xf32>
    %cst_19 = arith.constant 5.000000e-01 : f32
    %46 = vector.broadcast %cst_19 : f32 to vector<8x512xf32>
    %47 = arith.mulf %46, %45 : vector<8x512xf32>
    %48 = math.tanh %47 : vector<8x512xf32>
    %cst_20 = arith.constant 1.000000e+00 : f32
    %49 = vector.broadcast %cst_20 : f32 to vector<8x512xf32>
    %50 = arith.addf %48, %49 : vector<8x512xf32>
    %cst_21 = arith.constant 5.000000e-01 : f32
    %51 = vector.broadcast %cst_21 : f32 to vector<8x512xf32>
    %52 = arith.mulf %51, %50 : vector<8x512xf32>
    %53 = math.tanh %44 : vector<8x512xf32>
    %54 = arith.mulf %52, %53 : vector<8x512xf32>
    %55 = arith.truncf %54 : vector<8x512xf32> to vector<8x512xbf16>
    %c0_22 = arith.constant 0 : index
    %c0_23 = arith.constant 0 : index
    %56 = vector.load %arg6[%c0_22, %c0_23] : memref<512x128xbf16, #tpu.memory_space<vmem>>, vector<512x128xbf16>
    %cst_24 = arith.constant dense<0.000000e+00> : vector<8x128xf32>
    %57 = tpu.matmul %55, %56, %cst_24 {dimension_numbers = #tpu.dot_dimension_numbers<[1], [0], [0], [1], [0, 0, 1, 1], [], []>} : vector<8x512xbf16>, vector<512x128xbf16>, vector<8x128xf32> -> vector<8x128xf32>
    %c0_25 = arith.constant 0 : index
    %c0_26 = arith.constant 0 : index
    %58 = vector.load %arg7[%c0_25, %c0_26] : memref<1x128xf32, #tpu.memory_space<vmem>>, vector<1x128xf32>
    %59 = vector.broadcast %58 : vector<1x128xf32> to vector<8x128xf32>
    %60 = arith.addf %57, %59 : vector<8x128xf32>
    %c0_27 = arith.constant 0 : index
    %c0_28 = arith.constant 0 : index
    %61 = vector.load %arg8[%c0_27, %c0_28] : memref<8x128xf32, #tpu.memory_space<vmem>>, vector<8x128xf32>
    tpu.vector_store %arg8[%c0_27, %c0_28], %60 {strides = array<i32>} : memref<8x128xf32, #tpu.memory_space<vmem>>, vector<8x128xf32>,
    return
  }
  func.func @transform_0(%arg0: i32) -> (i32, i32) {
    %c0_i32 = arith.constant 0 : i32
    %c0_i32_0 = arith.constant 0 : i32
    return %arg0, %c0_i32 : i32, i32
  }
  func.func @transform_1(%arg0: i32) -> (i32, i32) {
    %c0_i32 = arith.constant 0 : i32
    %c0_i32_0 = arith.constant 0 : i32
    %c0_i32_1 = arith.constant 0 : i32
    return %c0_i32, %c0_i32_0 : i32, i32
  }
  func.func @transform_2(%arg0: i32) -> (i32, i32) {
    %c0_i32 = arith.constant 0 : i32
    %c0_i32_0 = arith.constant 0 : i32
    %c0_i32_1 = arith.constant 0 : i32
    return %c0_i32, %c0_i32_0 : i32, i32
  }
  func.func @transform_3(%arg0: i32) -> (i32, i32) {
    %c0_i32 = arith.constant 0 : i32
    %c0_i32_0 = arith.constant 0 : i32
    %c0_i32_1 = arith.constant 0 : i32
    return %c0_i32, %c0_i32_0 : i32, i32
  }
  func.func @transform_4(%arg0: i32) -> (i32, i32) {
    %c0_i32 = arith.constant 0 : i32
    %c0_i32_0 = arith.constant 0 : i32
    %c0_i32_1 = arith.constant 0 : i32
    return %c0_i32, %c0_i32_0 : i32, i32
  }
  func.func @transform_5(%arg0: i32) -> (i32, i32) {
    %c0_i32 = arith.constant 0 : i32
    %c0_i32_0 = arith.constant 0 : i32
    %c0_i32_1 = arith.constant 0 : i32
    return %c0_i32, %c0_i32_0 : i32, i32
  }
  func.func @transform_6(%arg0: i32) -> (i32, i32) {
    %c0_i32 = arith.constant 0 : i32
    %c0_i32_0 = arith.constant 0 : i32
    %c0_i32_1 = arith.constant 0 : i32
    return %c0_i32, %c0_i32_0 : i32, i32
  }
  func.func @transform_7(%arg0: i32) -> (i32, i32) {
    %c0_i32 = arith.constant 0 : i32
    %c0_i32_0 = arith.constant 0 : i32
    return %arg0, %c0_i32 : i32, i32
  }
}

</mosaic_0001>

<llo_original>
// kernel: tpu_custom_call.1
$region0: #{tpu_custom_call.1}
  #allocation0 [shape = 'u32[]', space=smem, size = 0x4, offset = 0x4, fixed_abs, tag = 'smem constant byte address 0x4 - core index']
  #allocation1 [shape = 'u32[144,128]{1,0:T(1,128)}', space=vmem, size = 0x12000, scoped, tag = 'internal scratch']
  %s0 = inlined_call_operand.hbm [shape: f32[16,63], index: 0, kind: input, shape index: {}]
  %s1 = inlined_call_operand.hbm [shape: bf16[63,1536], index: 1, kind: input, shape index: {}]
  %s2 = inlined_call_operand.hbm [shape: f32[1,1536], index: 2, kind: input, shape index: {}]
  %s3 = inlined_call_operand.hbm [shape: bf16[512,1536], index: 3, kind: input, shape index: {}]
  %s4 = inlined_call_operand.hbm [shape: f32[1,1536], index: 4, kind: input, shape index: {}]
  %s5 = inlined_call_operand.hbm [shape: bf16[512,128], index: 5, kind: input, shape index: {}]
  %s6 = inlined_call_operand.hbm [shape: f32[1,128], index: 6, kind: input, shape index: {}]
  %s7 = inlined_call_operand.hbm [shape: f32[16,128], index: 7, kind: output, shape index: {}]
  %s8 = sld [smem:[#allocation0]]
  $region89: #{tpu_custom_call.1} parent=0
    _
  %s10 = ssub.s32 1, %s8
  %s11 = scalar_select 0, %s10, %s8
  $region1: #{tpu_custom_call.1} parent=0
    #allocation2 [shape = 'u8[8192]{0}', space=vmem, size = 0x2000, scoped, tag = 'input window, operand 0']
    #allocation3 [shape = 's32[2]{0}', space=sflag, size = 0x8, scoped, tag = 'scoped memory for tpu_custom_call.1']
    #allocation4 [shape = 's32[2]{0}', space=sflag, size = 0x8, scoped, tag = 'scoped memory for tpu_custom_call.1']
    #allocation5 [shape = 'u8[196608]{0}', space=vmem, size = 0x30000, scoped, tag = 'input window, operand 1, single buffered']
    #allocation6 [shape = 's32[1]{0}', space=sflag, size = 0x4, scoped, tag = 'scoped memory for tpu_custom_call.1']
    #allocation7 [shape = 'u8[6144]{0}', space=vmem, size = 0x1800, scoped, tag = 'input window, operand 2, single buffered']
    #allocation8 [shape = 'u8[1572864]{0}', space=vmem, size = 0x180000, scoped, tag = 'input window, operand 3, single buffered']
    #allocation9 [shape = 's32[1]{0}', space=sflag, size = 0x4, scoped, tag = 'scoped memory for tpu_custom_call.1']
    #allocation10 [shape = 'u8[6144]{0}', space=vmem, size = 0x1800, scoped, tag = 'input window, operand 4, single buffered']
    #allocation11 [shape = 'u8[131072]{0}', space=vmem, size = 0x20000, scoped, tag = 'input window, operand 5, single buffered']
    #allocation12 [shape = 's32[1]{0}', space=sflag, size = 0x4, scoped, tag = 'scoped memory for tpu_custom_call.1']
    #allocation13 [shape = 'u8[512]{0}', space=vmem, size = 0x400, scoped, tag = 'input window, operand 6, single buffered']
    #allocation14 [shape = 'u8[8192]{0}', space=vmem, size = 0x2000, scoped, tag = 'output window, operand 0']
    %12 = vsyncpa [#allocation3], 0
    %s13 = scalar_lea.sflag [#allocation3], 1
    %14 = vsyncpa %s13, 0
    %15 = vsyncpa [#allocation6], 0
    %16 = vsyncpa [#allocation9], 0
    %17 = vsyncpa [#allocation12], 0
    %18 = vsyncpa [#allocation4], 0
    %s19 = scalar_lea.sflag [#allocation4], 1
    %20 = vsyncpa %s19, 0
    loop: start=0, step=1, limit=4
    $region2: #{tpu_custom_call.1} parent=1 // loop_pre_header
      _
    $region3: #{tpu_custom_call.1} parent=1 // loop_header
      %s22 = sphi 0, %s26
      %p23 = scmp.ge.s32.totalorder %s22, 4
      %s32 = sphi 0, %s34
      %s35 = sphi 0, %s32
      %s36 = sphi 0, %s35
      %s52 = sphi 0, %s36
      %s56 = sphi 0, %s56
      %s58 = sphi 0, %s56
      %s59 = sphi 0, %s58
      %s73 = sphi 0, %s59
      %s77 = sphi 0, %s77
      %s79 = sphi 0, %s77
      %s80 = sphi 0, %s79
      %s94 = sphi 0, %s80
      %s98 = sphi 0, %s98
      %s100 = sphi 0, %s98
      %s101 = sphi 0, %s100
      %s115 = sphi 0, %s101
      %s119 = sphi 0, %s119
      %s121 = sphi 0, %s119
      %s122 = sphi 0, %s121
      %s136 = sphi 0, %s122
      %s140 = sphi 0, %s140
      %s142 = sphi 0, %s140
      %s143 = sphi 0, %s142
      %s157 = sphi 0, %s143
      %s161 = sphi 0, %s161
      %s163 = sphi 0, %s161
      %s164 = sphi 0, %s163
      %s178 = sphi 0, %s164
      %s184 = sphi 0, %s186
      %s187 = sphi 0, %s184
      %s188 = sphi 0, %s187
      %s204 = sphi 0, %s188
    $region4: #{tpu_custom_call.1} parent=1 // loop_header_branch
      %25 = sbr.rel (%p23) target = $region8
    $region5: #{tpu_custom_call.1} parent=1 // loop_body
      %s27 = ssub.s32 %s22, 1
      %s28 = ssub.s32 %s22, 2
      %s29 = sadd.s32 %s22, 1
      %s30 = ssub.s32 %s22, %s29
      %p31 = scmp.eq.s32.totalorder %s30, 0
      %s33 = sadd.s32 %s32, 1
      %s34 = scalar_select %p31, %s32, %s33
      %p37 = pneg %p31
      %p38 = scmp.eq.s32.totalorder %s22, 1
      %p39 = por %p37, %p38
      %p40 = scmp.ne.s32.totalorder %s32, %s35
      %p41 = scmp.eq.s32.totalorder %s22, 0
      %p42 = por %p40, %p41
      %p43 = scmp.ne.s32.totalorder %s32, %s35
      %p44 = scmp.eq.s32.totalorder %s27, 1
      %p45 = por %p43, %p44
      %p46 = scmp.ne.s32.totalorder %s35, %s36
      %p47 = scmp.eq.s32.totalorder %s27, 0
      %p48 = por %p46, %p47
      %p49 = scmp.ne.s32.totalorder %s35, %s36
      %p50 = scmp.eq.s32.totalorder %s28, 1
      %p51 = por %p49, %p50
      %p53 = scmp.ne.s32.totalorder %s36, %s52
      %p54 = scmp.eq.s32.totalorder %s28, 0
      %p55 = por %p53, %p54
      %s57 = sadd.s32 %s56, 1
      %p60 = scmp.eq.s32.totalorder %s22, 1
      %p61 = scmp.ne.s32.totalorder %s56, %s58
      %p62 = scmp.eq.s32.totalorder %s22, 0
      %p63 = por %p61, %p62
      %p64 = scmp.ne.s32.totalorder %s56, %s58
      %p65 = scmp.eq.s32.totalorder %s27, 1
      %p66 = por %p64, %p65
      %p67 = scmp.ne.s32.totalorder %s58, %s59
      %p68 = scmp.eq.s32.totalorder %s27, 0
      %p69 = por %p67, %p68
      %p70 = scmp.ne.s32.totalorder %s58, %s59
      %p71 = scmp.eq.s32.totalorder %s28, 1
      %p72 = por %p70, %p71
      %p74 = scmp.ne.s32.totalorder %s59, %s73
      %p75 = scmp.eq.s32.totalorder %s28, 0
      %p76 = por %p74, %p75
      %s78 = sadd.s32 %s77, 1
      %p81 = scmp.eq.s32.totalorder %s22, 1
      %p82 = scmp.ne.s32.totalorder %s77, %s79
      %p83 = scmp.eq.s32.totalorder %s22, 0
      %p84 = por %p82, %p83
      %p85 = scmp.ne.s32.totalorder %s77, %s79
      %p86 = scmp.eq.s32.totalorder %s27, 1
      %p87 = por %p85, %p86
      %p88 = scmp.ne.s32.totalorder %s79, %s80
      %p89 = scmp.eq.s32.totalorder %s27, 0
      %p90 = por %p88, %p89
      %p91 = scmp.ne.s32.totalorder %s79, %s80
      %p92 = scmp.eq.s32.totalorder %s28, 1
      %p93 = por %p91, %p92
      %p95 = scmp.ne.s32.totalorder %s80, %s94
      %p96 = scmp.eq.s32.totalorder %s28, 0
      %p97 = por %p95, %p96
      %s99 = sadd.s32 %s98, 1
      %p102 = scmp.eq.s32.totalorder %s22, 1
      %p103 = scmp.ne.s32.totalorder %s98, %s100
      %p104 = scmp.eq.s32.totalorder %s22, 0
      %p105 = por %p103, %p104
      %p106 = scmp.ne.s32.totalorder %s98, %s100
      %p107 = scmp.eq.s32.totalorder %s27, 1
      %p108 = por %p106, %p107
      %p109 = scmp.ne.s32.totalorder %s100, %s101
      %p110 = scmp.eq.s32.totalorder %s27, 0
      %p111 = por %p109, %p110
      %p112 = scmp.ne.s32.totalorder %s100, %s101
      %p113 = scmp.eq.s32.totalorder %s28, 1
      %p114 = por %p112, %p113
      %p116 = scmp.ne.s32.totalorder %s101, %s115
      %p117 = scmp.eq.s32.totalorder %s28, 0
      %p118 = por %p116, %p117
      %s120 = sadd.s32 %s119, 1
      %p123 = scmp.eq.s32.totalorder %s22, 1
      %p124 = scmp.ne.s32.totalorder %s119, %s121
      %p125 = scmp.eq.s32.totalorder %s22, 0
      %p126 = por %p124, %p125
      %p127 = scmp.ne.s32.totalorder %s119, %s121
      %p128 = scmp.eq.s32.totalorder %s27, 1
      %p129 = por %p127, %p128
      %p130 = scmp.ne.s32.totalorder %s121, %s122
      %p131 = scmp.eq.s32.totalorder %s27, 0
      %p132 = por %p130, %p131
      %p133 = scmp.ne.s32.totalorder %s121, %s122
      %p134 = scmp.eq.s32.totalorder %s28, 1
      %p135 = por %p133, %p134
      %p137 = scmp.ne.s32.totalorder %s122, %s136
      %p138 = scmp.eq.s32.totalorder %s28, 0
      %p139 = por %p137, %p138
      %s141 = sadd.s32 %s140, 1
      %p144 = scmp.eq.s32.totalorder %s22, 1
      %p145 = scmp.ne.s32.totalorder %s140, %s142
      %p146 = scmp.eq.s32.totalorder %s22, 0
      %p147 = por %p145, %p146
      %p148 = scmp.ne.s32.totalorder %s140, %s142
      %p149 = scmp.eq.s32.totalorder %s27, 1
      %p150 = por %p148, %p149
      %p151 = scmp.ne.s32.totalorder %s142, %s143
      %p152 = scmp.eq.s32.totalorder %s27, 0
      %p153 = por %p151, %p152
      %p154 = scmp.ne.s32.totalorder %s142, %s143
      %p155 = scmp.eq.s32.totalorder %s28, 1
      %p156 = por %p154, %p155
      %p158 = scmp.ne.s32.totalorder %s143, %s157
      %p159 = scmp.eq.s32.totalorder %s28, 0
      %p160 = por %p158, %p159
      %s162 = sadd.s32 %s161, 1
      %p165 = scmp.eq.s32.totalorder %s22, 1
      %p166 = scmp.ne.s32.totalorder %s161, %s163
      %p167 = scmp.eq.s32.totalorder %s22, 0
      %p168 = por %p166, %p167
      %p169 = scmp.ne.s32.totalorder %s161, %s163
      %p170 = scmp.eq.s32.totalorder %s27, 1
      %p171 = por %p169, %p170
      %p172 = scmp.ne.s32.totalorder %s163, %s164
      %p173 = scmp.eq.s32.totalorder %s27, 0
      %p174 = por %p172, %p173
      %p175 = scmp.ne.s32.totalorder %s163, %s164
      %p176 = scmp.eq.s32.totalorder %s28, 1
      %p177 = por %p175, %p176
      %p179 = scmp.ne.s32.totalorder %s164, %s178
      %p180 = scmp.eq.s32.totalorder %s28, 0
      %p181 = por %p179, %p180
      %s182 = ssub.s32 %s22, %s29
      %p183 = scmp.eq.s32.totalorder %s182, 0
      %s185 = sadd.s32 %s184, 1
      %s186 = scalar_select %p183, %s184, %s185
      %p189 = pneg %p183
      %p190 = scmp.eq.s32.totalorder %s22, 1
      %p191 = por %p189, %p190
      %p192 = scmp.ne.s32.totalorder %s184, %s187
      %p193 = scmp.eq.s32.totalorder %s22, 0
      %p194 = por %p192, %p193
      %p195 = scmp.ne.s32.totalorder %s184, %s187
      %p196 = scmp.eq.s32.totalorder %s27, 1
      %p197 = por %p195, %p196
      %p198 = scmp.ne.s32.totalorder %s187, %s188
      %p199 = scmp.eq.s32.totalorder %s27, 0
      %p200 = por %p198, %p199
      %p201 = scmp.ne.s32.totalorder %s187, %s188
      %p202 = scmp.eq.s32.totalorder %s28, 1
      %p203 = por %p201, %p202
      %p205 = scmp.ne.s32.totalorder %s188, %s204
      %p206 = scmp.eq.s32.totalorder %s28, 0
      %p207 = por %p205, %p206
      %p208 = scmp.le.s32.totalorder 1, %s22
      %p209 = scmp.lt.s32.totalorder %s22, 3
      %p210 = pnand %p208, %p209
      %p211 = pneg %p210
      // Predicated region
      $region9: #{tpu_custom_call.1} parent=5 // pred_check
        _
      $region10: #{tpu_custom_call.1} parent=5 // pred_check_branch
        %213 = sbr.rel (%p210) target = $region12
      $region11: #{tpu_custom_call.1} parent=5 // pred_region
        %s214 = ssub.s32 %s22, 1
        // Predicated region
        $region13: #{tpu_custom_call.1} parent=11 // pred_check
          %p215 = pneg %p69
        $region14: #{tpu_custom_call.1} parent=11 // pred_check_branch
          %217 = sbr.rel (%p215) target = $region16
        $region15: #{tpu_custom_call.1} parent=11 // pred_region
          %s219 = ssub.s32 6144, 6144
          %220 = vsyncadd [#allocation6], %s219
          %s221 = sshll.u32 [#allocation5], 4
          %s222 = int_to_ptr.vmem [resolvable:$true] %s221
          %227 = dma.hbm_to_vmem [thread:$0]  %s1, 6144, %s222, [#allocation6], 768, 768, 48
        $region16: #{tpu_custom_call.1} parent=11 // pred_fallthru
          _
        // Predicated region
        $region17: #{tpu_custom_call.1} parent=11 // pred_check
          %p228 = pneg %p90
        $region18: #{tpu_custom_call.1} parent=11 // pred_check_branch
          %230 = sbr.rel (%p228) target = $region20
        $region19: #{tpu_custom_call.1} parent=11 // pred_region
          %s232 = ssub.s32 192, 192
          %233 = vsyncadd [#allocation6], %s232
          %s235 = sshll.u32 [#allocation7], 4
          %s236 = int_to_ptr.vmem [resolvable:$true] %s235
          %238 = dma.hbm_to_vmem [thread:$0]  %s2, 192, %s236, [#allocation6]
        $region20: #{tpu_custom_call.1} parent=11 // pred_fallthru
          _
        // Predicated region
        $region21: #{tpu_custom_call.1} parent=11 // pred_check
          %p239 = pneg %p111
        $region22: #{tpu_custom_call.1} parent=11 // pred_check_branch
          %241 = sbr.rel (%p239) target = $region24
        $region23: #{tpu_custom_call.1} parent=11 // pred_region
          %s243 = ssub.s32 49152, 49152
          %244 = vsyncadd [#allocation9], %s243
          %s245 = sshll.u32 [#allocation8], 4
          %s246 = int_to_ptr.vmem [resolvable:$true] %s245
          %251 = dma.hbm_to_vmem [thread:$0]  %s3, 49152, %s246, [#allocation9], 768, 768, 48
        $region24: #{tpu_custom_call.1} parent=11 // pred_fallthru
          _
        // Predicated region
        $region25: #{tpu_custom_call.1} parent=11 // pred_check
          %p252 = pneg %p132
        $region26: #{tpu_custom_call.1} parent=11 // pred_check_branch
          %254 = sbr.rel (%p252) target = $region28
        $region27: #{tpu_custom_call.1} parent=11 // pred_region
          %s256 = ssub.s32 192, 192
          %257 = vsyncadd [#allocation9], %s256
          %s259 = sshll.u32 [#allocation10], 4
          %s260 = int_to_ptr.vmem [resolvable:$true] %s259
          %262 = dma.hbm_to_vmem [thread:$0]  %s4, 192, %s260, [#allocation9]
        $region28: #{tpu_custom_call.1} parent=11 // pred_fallthru
          _
        // Predicated region
        $region29: #{tpu_custom_call.1} parent=11 // pred_check
          %p263 = pneg %p153
        $region30: #{tpu_custom_call.1} parent=11 // pred_check_branch
          %265 = sbr.rel (%p263) target = $region32
        $region31: #{tpu_custom_call.1} parent=11 // pred_region
          %s267 = ssub.s32 4096, 4096
          %268 = vsyncadd [#allocation12], %s267
          %s269 = sshll.u32 [#allocation11], 4
          %s270 = int_to_ptr.vmem [resolvable:$true] %s269
          %275 = dma.hbm_to_vmem [thread:$0]  %s5, 4096, %s270, [#allocation12], 64, 64, 4
        $region32: #{tpu_custom_call.1} parent=11 // pred_fallthru
          _
        // Predicated region
        $region33: #{tpu_custom_call.1} parent=11 // pred_check
          %p276 = pneg %p174
        $region34: #{tpu_custom_call.1} parent=11 // pred_check_branch
          %278 = sbr.rel (%p276) target = $region36
        $region35: #{tpu_custom_call.1} parent=11 // pred_region
          %s280 = ssub.s32 16, 16
          %281 = vsyncadd [#allocation12], %s280
          %s283 = sshll.u32 [#allocation13], 4
          %s284 = int_to_ptr.vmem [resolvable:$true] %s283
          %286 = dma.hbm_to_vmem [thread:$0]  %s6, 16, %s284, [#allocation12]
        $region36: #{tpu_custom_call.1} parent=11 // pred_fallthru
          _
      $region12: #{tpu_custom_call.1} parent=5 // pred_fallthru
        _
      %p287 = scmp.lt.s32.totalorder %s22, 2
      // Predicated region
      $region37: #{tpu_custom_call.1} parent=5 // pred_check
        %p288 = pneg %p287
      $region38: #{tpu_custom_call.1} parent=5 // pred_check_branch
        %290 = sbr.rel (%p288) target = $region40
      $region39: #{tpu_custom_call.1} parent=5 // pred_region
        // Predicated region
        $region41: #{tpu_custom_call.1} parent=39 // pred_check
          %p291 = pneg %p42
        $region42: #{tpu_custom_call.1} parent=39 // pred_check_branch
          %293 = sbr.rel (%p291) target = $region44
        $region43: #{tpu_custom_call.1} parent=39 // pred_region
          %s294 = sand.u32 %s32, 1
          %s295 = scalar_lea.sflag [#allocation3], %s294
          %s296 = sand.u32 %s32, 1
          %s297 = smul.addr %s296, 8
          %s298 = scalar_lea.vmem [#allocation2], %s297
          %s300 = ssub.s32 128, 128
          %301 = vsyncadd %s295, %s300
          %s302 = smul.addr %s22, 128
          %s303 = scalar_lea.hbm %s0, %s302
          %s305 = sshll.u32 %s298, 4
          %s306 = int_to_ptr.vmem [resolvable:$true] %s305
          %308 = dma.hbm_to_vmem [thread:$0]  %s303, 128, %s306, %s295
        $region44: #{tpu_custom_call.1} parent=39 // pred_fallthru
          _
      $region40: #{tpu_custom_call.1} parent=5 // pred_fallthru
        _
      %p309 = scmp.le.s32.totalorder 1, %s22
      %p310 = scmp.lt.s32.totalorder %s22, 3
      %p311 = pnand %p309, %p310
      %p312 = pneg %p311
      // Predicated region
      $region45: #{tpu_custom_call.1} parent=5 // pred_check
        _
      $region46: #{tpu_custom_call.1} parent=5 // pred_check_branch
        %314 = sbr.rel (%p311) target = $region48
      $region47: #{tpu_custom_call.1} parent=5 // pred_region
        %s315 = ssub.s32 %s22, 1
        %s316 = sand.u32 %s35, 1
        %s317 = scalar_lea.sflag [#allocation3], %s316
        %s318 = sand.u32 %s35, 1
        %s319 = smul.addr %s318, 8
        %s320 = scalar_lea.vmem [#allocation2], %s319
        // Predicated region
        $region49: #{tpu_custom_call.1} parent=47 // pred_check
          %p321 = pneg %p48
        $region50: #{tpu_custom_call.1} parent=47 // pred_check_branch
          %323 = sbr.rel (%p321) target = $region52
        $region51: #{tpu_custom_call.1} parent=47 // pred_region
          %324 = dma.done %s317, 128
        $region52: #{tpu_custom_call.1} parent=47 // pred_fallthru
          _
        // Predicated region
        $region53: #{tpu_custom_call.1} parent=47 // pred_check
          %p325 = pneg %p69
        $region54: #{tpu_custom_call.1} parent=47 // pred_check_branch
          %327 = sbr.rel (%p325) target = $region56
        $region55: #{tpu_custom_call.1} parent=47 // pred_region
          %328 = dma.done [#allocation6], 6144
        $region56: #{tpu_custom_call.1} parent=47 // pred_fallthru
          _
        // Predicated region
        $region57: #{tpu_custom_call.1} parent=47 // pred_check
          %p329 = pneg %p90
        $region58: #{tpu_custom_call.1} parent=47 // pred_check_branch
          %331 = sbr.rel (%p329) target = $region60
        $region59: #{tpu_custom_call.1} parent=47 // pred_region
          %332 = dma.done [#allocation6], 192
        $region60: #{tpu_custom_call.1} parent=47 // pred_fallthru
          _
        // Predicated region
        $region61: #{tpu_custom_call.1} parent=47 // pred_check
          %p333 = pneg %p111
        $region62: #{tpu_custom_call.1} parent=47 // pred_check_branch
          %335 = sbr.rel (%p333) target = $region64
        $region63: #{tpu_custom_call.1} parent=47 // pred_region
          %336 = dma.done [#allocation9], 49152
        $region64: #{tpu_custom_call.1} parent=47 // pred_fallthru
          _
        // Predicated region
        $region65: #{tpu_custom_call.1} parent=47 // pred_check
          %p337 = pneg %p132
        $region66: #{tpu_custom_call.1} parent=47 // pred_check_branch
          %339 = sbr.rel (%p337) target = $region68
        $region67: #{tpu_custom_call.1} parent=47 // pred_region
          %340 = dma.done [#allocation9], 192
        $region68: #{tpu_custom_call.1} parent=47 // pred_fallthru
          _
        // Predicated region
        $region69: #{tpu_custom_call.1} parent=47 // pred_check
          %p341 = pneg %p153
        $region70: #{tpu_custom_call.1} parent=47 // pred_check_branch
          %343 = sbr.rel (%p341) target = $region72
        $region71: #{tpu_custom_call.1} parent=47 // pred_region
          %344 = dma.done [#allocation12], 4096
        $region72: #{tpu_custom_call.1} parent=47 // pred_fallthru
          _
        // Predicated region
        $region73: #{tpu_custom_call.1} parent=47 // pred_check
          %p345 = pneg %p174
        $region74: #{tpu_custom_call.1} parent=47 // pred_check_branch
          %347 = sbr.rel (%p345) target = $region76
        $region75: #{tpu_custom_call.1} parent=47 // pred_region
          %348 = dma.done [#allocation12], 16
        $region76: #{tpu_custom_call.1} parent=47 // pred_fallthru
          _
        %s349 = sand.u32 %s35, 1
        %s350 = scalar_lea.sflag [#allocation3], %s349
        %s351 = sand.u32 %s35, 1
        %s352 = smul.addr %s351, 8
        %s353 = scalar_lea.vmem [#allocation2], %s352
        %p354 = pneg %p48
        %p355 = pneg %p45
        %p356 = pneg %p69
        %p357 = pneg %p66
        %p358 = pneg %p90
        %p359 = pneg %p87
        %p360 = pneg %p111
        %p361 = pneg %p108
        %p362 = pneg %p132
        %p363 = pneg %p129
        %p364 = pneg %p153
        %p365 = pneg %p150
        %p366 = pneg %p174
        %p367 = pneg %p171
        %p368 = pneg %p200
        %p369 = pneg %p197
        %s370 = sand.u32 %s187, 1
        %s371 = scalar_lea.sflag [#allocation4], %s370
        %s372 = sand.u32 %s187, 1
        %s373 = smul.addr %s372, 8
        %s374 = scalar_lea.vmem [#allocation14], %s373
        %v376 = vld [vmem:[%s320] sm:$0xff]
        %v377 = vpack.c.bf16 %v376, %v376
        %v378 = vld [vmem:[#allocation5] sm:$0xff]
        %v379 = vld [vmem:[#allocation5 + $0x8] sm:$0xff]
        %v380 = vld [vmem:[#allocation5 + $0x10] sm:$0xff]
        %v381 = vld [vmem:[#allocation5 + $0x18] sm:$0xff]
        %v382 = vld [vmem:[#allocation5 + $0x20] sm:$0xff]
        %v383 = vld [vmem:[#allocation5 + $0x28] sm:$0xff]
        %v384 = vld [vmem:[#allocation5 + $0x30] sm:$0xff]
        %v385 = vld [vmem:[#allocation5 + $0x38] sm:$0xff]
        %v386 = vld [vmem:[#allocation5 + $0x40] sm:$0xff]
        %v387 = vld [vmem:[#allocation5 + $0x48] sm:$0xff]
        %v388 = vld [vmem:[#allocation5 + $0x50] sm:$0xff]
        %v389 = vld [vmem:[#allocation5 + $0x58] sm:$0xff]
        %v390 = vld [vmem:[#allocation5 + $0x60] sm:$0xff]
        %v391 = vld [vmem:[#allocation5 + $0x68] sm:$0xff]
        %v392 = vld [vmem:[#allocation5 + $0x70] sm:$0xff]
        %v393 = vld [vmem:[#allocation5 + $0x78] sm:$0xff]
        %v394 = vld [vmem:[#allocation5 + $0x80] sm:$0xff]
        %v395 = vld [vmem:[#allocation5 + $0x88] sm:$0xff]
        %v396 = vld [vmem:[#allocation5 + $0x90] sm:$0xff]
        %v397 = vld [vmem:[#allocation5 + $0x98] sm:$0xff]
        %v398 = vld [vmem:[#allocation5 + $0xa0] sm:$0xff]
        %v399 = vld [vmem:[#allocation5 + $0xa8] sm:$0xff]
        %v400 = vld [vmem:[#allocation5 + $0xb0] sm:$0xff]
        %v401 = vld [vmem:[#allocation5 + $0xb8] sm:$0xff]
        %v402 = vld [vmem:[#allocation5 + $0xc0] sm:$0xff]
        %v403 = vld [vmem:[#allocation5 + $0xc8] sm:$0xff]
        %v404 = vld [vmem:[#allocation5 + $0xd0] sm:$0xff]
        %v405 = vld [vmem:[#allocation5 + $0xd8] sm:$0xff]
        %v406 = vld [vmem:[#allocation5 + $0xe0] sm:$0xff]
        %v407 = vld [vmem:[#allocation5 + $0xe8] sm:$0xff]
        %v408 = vld [vmem:[#allocation5 + $0xf0] sm:$0xff]
        %v409 = vld [vmem:[#allocation5 + $0xf8] sm:$0xff]
        %v410 = vld [vmem:[#allocation5 + $0x100] sm:$0xff]
        %v411 = vld [vmem:[#allocation5 + $0x108] sm:$0xff]
        %v412 = vld [vmem:[#allocation5 + $0x110] sm:$0xff]
        %v413 = vld [vmem:[#allocation5 + $0x118] sm:$0xff]
        %v414 = vld [vmem:[#allocation5 + $0x120] sm:$0xff]
        %v415 = vld [vmem:[#allocation5 + $0x128] sm:$0xff]
        %v416 = vld [vmem:[#allocation5 + $0x130] sm:$0xff]
        %v417 = vld [vmem:[#allocation5 + $0x138] sm:$0xff]
        %v418 = vld [vmem:[#allocation5 + $0x140] sm:$0xff]
        %v419 = vld [vmem:[#allocation5 + $0x148] sm:$0xff]
        %v420 = vld [vmem:[#allocation5 + $0x150] sm:$0xff]
        %v421 = vld [vmem:[#allocation5 + $0x158] sm:$0xff]
        %v422 = vld [vmem:[#allocation5 + $0x160] sm:$0xff]
        %v423 = vld [vmem:[#allocation5 + $0x168] sm:$0xff]
        %v424 = vld [vmem:[#allocation5 + $0x170] sm:$0xff]
        %v425 = vld [vmem:[#allocation5 + $0x178] sm:$0xff]
        %v426 = vld [vmem:[#allocation7] sm:$0xff]
        %v427 = vld [vmem:[#allocation7 + $0x8] sm:$0xf]
        %v430 = vlaneseq
        %v431 = vshrl.u32 %v430, 7
        %v432 = vsub.s32 0, %v431
        %v433 = vrot.slane %v426, %v432
        %v434 = vlaneseq
        %v435 = vshrl.u32 %v434, 7
        %v436 = vsub.s32 1, %v435
        %v437 = vrot.slane %v426, %v436
        %v438 = vlaneseq
        %v439 = vshrl.u32 %v438, 7
        %v440 = vsub.s32 2, %v439
        %v441 = vrot.slane %v426, %v440
        %v442 = vlaneseq
        %v443 = vshrl.u32 %v442, 7
        %v444 = vsub.s32 3, %v443
        %v445 = vrot.slane %v426, %v444
        %v446 = vlaneseq
        %v447 = vshrl.u32 %v446, 7
        %v448 = vsub.s32 4, %v447
        %v449 = vrot.slane %v426, %v448
        %v450 = vlaneseq
        %v451 = vshrl.u32 %v450, 7
        %v452 = vsub.s32 5, %v451
        %v453 = vrot.slane %v426, %v452
        %v454 = vlaneseq
        %v455 = vshrl.u32 %v454, 7
        %v456 = vsub.s32 6, %v455
        %v457 = vrot.slane %v426, %v456
        %v458 = vlaneseq
        %v459 = vshrl.u32 %v458, 7
        %v460 = vsub.s32 7, %v459
        %v461 = vrot.slane %v426, %v460
        %v462 = vlaneseq
        %v463 = vshrl.u32 %v462, 7
        %v464 = vsub.s32 0, %v463
        %v465 = vrot.slane %v427, %v464
        %v466 = vlaneseq
        %v467 = vshrl.u32 %v466, 7
        %v468 = vsub.s32 1, %v467
        %v469 = vrot.slane %v427, %v468
        %v470 = vlaneseq
        %v471 = vshrl.u32 %v470, 7
        %v472 = vsub.s32 2, %v471
        %v473 = vrot.slane %v427, %v472
        %v474 = vlaneseq
        %v475 = vshrl.u32 %v474, 7
        %v476 = vsub.s32 3, %v475
        %v477 = vrot.slane %v427, %v476
        %v538 = vunpack.c.l.b16 %v378
        %v539 = vunpack.c.h.b16 %v378
        %v540 = vunpack.c.l.b16 %v379
        %v541 = vunpack.c.h.b16 %v379
        %v542 = vunpack.c.l.b16 %v380
        %v543 = vunpack.c.h.b16 %v380
        %v544 = vunpack.c.l.b16 %v381
        %v545 = vunpack.c.h.b16 %v381
        %v546 = vunpack.c.l.b16 %v382
        %v547 = vunpack.c.h.b16 %v382
        %v548 = vunpack.c.l.b16 %v383
        %v549 = vunpack.c.h.b16 %v383
        %v550 = vunpack.c.l.b16 %v384
        %v551 = vunpack.c.h.b16 %v384
        %v552 = vunpack.c.l.b16 %v385
        %v553 = vunpack.c.h.b16 %v385
        %v554 = vunpack.c.l.b16 %v386
        %v555 = vunpack.c.h.b16 %v386
        %v556 = vunpack.c.l.b16 %v387
        %v557 = vunpack.c.h.b16 %v387
        %v558 = vunpack.c.l.b16 %v388
        %v559 = vunpack.c.h.b16 %v388
        %v560 = vunpack.c.l.b16 %v389
        %v561 = vunpack.c.h.b16 %v389
        %v562 = vunpack.c.l.b16 %v390
        %v563 = vunpack.c.h.b16 %v390
        %v564 = vunpack.c.l.b16 %v391
        %v565 = vunpack.c.h.b16 %v391
        %v566 = vunpack.c.l.b16 %v392
        %v567 = vunpack.c.h.b16 %v392
        %v568 = vunpack.c.l.b16 %v393
        %v569 = vunpack.c.h.b16 %v393
        %v570 = vunpack.c.l.b16 %v394
        %v571 = vunpack.c.h.b16 %v394
        %v572 = vunpack.c.l.b16 %v395
        %v573 = vunpack.c.h.b16 %v395
        %v574 = vunpack.c.l.b16 %v396
        %v575 = vunpack.c.h.b16 %v396
        %v576 = vunpack.c.l.b16 %v397
        %v577 = vunpack.c.h.b16 %v397
        %v578 = vunpack.c.l.b16 %v398
        %v579 = vunpack.c.h.b16 %v398
        %v580 = vunpack.c.l.b16 %v399
        %v581 = vunpack.c.h.b16 %v399
        %v582 = vunpack.c.l.b16 %v400
        %v583 = vunpack.c.h.b16 %v400
        %v584 = vunpack.c.l.b16 %v401
        %v585 = vunpack.c.h.b16 %v401
        %v586 = vunpack.c.l.b16 %v402
        %v587 = vunpack.c.h.b16 %v402
        %v588 = vunpack.c.l.b16 %v403
        %v589 = vunpack.c.h.b16 %v403
        %v590 = vunpack.c.l.b16 %v404
        %v591 = vunpack.c.h.b16 %v404
        %v592 = vunpack.c.l.b16 %v405
        %v593 = vunpack.c.h.b16 %v405
        %v594 = vunpack.c.l.b16 %v406
        %v595 = vunpack.c.h.b16 %v406
        %v596 = vunpack.c.l.b16 %v407
        %v597 = vunpack.c.h.b16 %v407
        %v598 = vunpack.c.l.b16 %v408
        %v599 = vunpack.c.h.b16 %v408
        %v600 = vunpack.c.l.b16 %v409
        %v601 = vunpack.c.h.b16 %v409
        %v602 = vunpack.c.l.b16 %v410
        %v603 = vunpack.c.h.b16 %v410
        %v604 = vunpack.c.l.b16 %v411
        %v605 = vunpack.c.h.b16 %v411
        %v606 = vunpack.c.l.b16 %v412
        %v607 = vunpack.c.h.b16 %v412
        %v608 = vunpack.c.l.b16 %v413
        %v609 = vunpack.c.h.b16 %v413
        %v610 = vunpack.c.l.b16 %v414
        %v611 = vunpack.c.h.b16 %v414
        %v612 = vunpack.c.l.b16 %v415
        %v613 = vunpack.c.h.b16 %v415
        %v614 = vunpack.c.l.b16 %v416
        %v615 = vunpack.c.h.b16 %v416
        %v616 = vunpack.c.l.b16 %v417
        %v617 = vunpack.c.h.b16 %v417
        %v618 = vunpack.c.l.b16 %v418
        %v619 = vunpack.c.h.b16 %v418
        %v620 = vunpack.c.l.b16 %v419
        %v621 = vunpack.c.h.b16 %v419
        %v622 = vunpack.c.l.b16 %v420
        %v623 = vunpack.c.h.b16 %v420
        %v624 = vunpack.c.l.b16 %v421
        %v625 = vunpack.c.h.b16 %v421
        %v626 = vunpack.c.l.b16 %v422
        %v627 = vunpack.c.h.b16 %v422
        %v628 = vunpack.c.l.b16 %v423
        %v629 = vunpack.c.h.b16 %v423
        %v630 = vunpack.c.l.b16 %v424
        %v631 = vunpack.c.h.b16 %v424
        %v632 = vunpack.c.l.b16 %v425
        %v633 = vunpack.c.h.b16 %v425
        %v634 = vpack.c.b16 %v550, %v538
        %v635 = vpack.c.b16 %v551, %v539
        %v636 = vpack.c.b16 %v552, %v540
        %v637 = vpack.c.b16 %v553, %v541
        %v638 = vpack.c.b16 %v554, %v542
        %v639 = vpack.c.b16 %v555, %v543
        %v640 = vpack.c.b16 %v556, %v544
        %v641 = vpack.c.b16 %v557, %v545
        %v642 = vpack.c.b16 %v558, %v546
        %v643 = vpack.c.b16 %v559, %v547
        %v644 = vpack.c.b16 %v560, %v548
        %v645 = vpack.c.b16 %v561, %v549
        %v646 = vpack.c.b16 %v574, %v562
        %v647 = vpack.c.b16 %v575, %v563
        %v648 = vpack.c.b16 %v576, %v564
        %v649 = vpack.c.b16 %v577, %v565
        %v650 = vpack.c.b16 %v578, %v566
        %v651 = vpack.c.b16 %v579, %v567
        %v652 = vpack.c.b16 %v580, %v568
        %v653 = vpack.c.b16 %v581, %v569
        %v654 = vpack.c.b16 %v582, %v570
        %v655 = vpack.c.b16 %v583, %v571
        %v656 = vpack.c.b16 %v584, %v572
        %v657 = vpack.c.b16 %v585, %v573
        %v658 = vpack.c.b16 %v598, %v586
        %v659 = vpack.c.b16 %v599, %v587
        %v660 = vpack.c.b16 %v600, %v588
        %v661 = vpack.c.b16 %v601, %v589
        %v662 = vpack.c.b16 %v602, %v590
        %v663 = vpack.c.b16 %v603, %v591
        %v664 = vpack.c.b16 %v604, %v592
        %v665 = vpack.c.b16 %v605, %v593
        %v666 = vpack.c.b16 %v606, %v594
        %v667 = vpack.c.b16 %v607, %v595
        %v668 = vpack.c.b16 %v608, %v596
        %v669 = vpack.c.b16 %v609, %v597
        %v670 = vpack.c.b16 %v622, %v610
        %v671 = vpack.c.b16 %v623, %v611
        %v672 = vpack.c.b16 %v624, %v612
        %v673 = vpack.c.b16 %v625, %v613
        %v674 = vpack.c.b16 %v626, %v614
        %v675 = vpack.c.b16 %v627, %v615
        %v676 = vpack.c.b16 %v628, %v616
        %v677 = vpack.c.b16 %v629, %v617
        %v678 = vpack.c.b16 %v630, %v618
        %v679 = vpack.c.b16 %v631, %v619
        %v680 = vpack.c.b16 %v632, %v620
        %v681 = vpack.c.b16 %v633, %v621
        %vm718 = vcmask 515072
        %v720 = vsel %vm718, %v377, 0
        %vm722 = vcmask 1046528
        %vm723 = vcmask 1047552
        %v724 = vsel %vm722, 4294967295, 65535
        %v725 = vsel %vm723, %v724, 0
        %v727 = vand.u32 %v670, %v725
        %v730 = vand.u32 %v671, %v725
        %v733 = vand.u32 %v672, %v725
        %v736 = vand.u32 %v673, %v725
        %v739 = vand.u32 %v674, %v725
        %v742 = vand.u32 %v675, %v725
        %v745 = vand.u32 %v676, %v725
        %v748 = vand.u32 %v677, %v725
        %v751 = vand.u32 %v678, %v725
        %v754 = vand.u32 %v679, %v725
        %v757 = vand.u32 %v680, %v725
        %v760 = vand.u32 %v681, %v725
        %762 = vmatprep.subr.bf16.mxu0 0
        %763 = vmatpush1.bf16.msra.mxu0 0
        %764 = vmatprep.subr.bf16.mxu0 0
        %765 = vmatpush1.bf16.msra.mxu0 0
        %766 = vmatprep.subr.bf16.mxu0 0
        %767 = vmatpush1.bf16.msra.mxu0 0
        %768 = vmatprep.subr.bf16.mxu0 0
        %769 = vmatpush1.bf16.msra.mxu0 0
        %770 = vmatprep.subr.bf16.mxu0 %v730
        %771 = vmatpush1.bf16.msra.mxu0 %v727
        %772 = vmatprep.subr.bf16.mxu0 %v659
        %773 = vmatpush1.bf16.msra.mxu0 %v658
        %774 = vmatprep.subr.bf16.mxu0 %v647
        %775 = vmatpush1.bf16.msra.mxu0 %v646
        %776 = vmatprep.subr.bf16.mxu0 %v635
        %777 = vmatpush1.bf16.msra.mxu0 %v634
        %778 = vmatprep.subr.bf16.mxu0 0
        %779 = vmatpush2.bf16.msra.mxu0 0
        %780 = vmatprep.subr.bf16.mxu0 0
        %781 = vmatpush2.bf16.msra.mxu0 0
        %782 = vmatprep.subr.bf16.mxu0 0
        %783 = vmatpush2.bf16.msra.mxu0 0
        %784 = vmatprep.subr.bf16.mxu0 0
        %785 = vmatpush2.bf16.msra.mxu0 0
        %786 = vmatprep.subr.bf16.mxu0 0
        %787 = vmatpush2.bf16.msra.mxu0 0
        %788 = vmatprep.subr.bf16.mxu0 0
        %789 = vmatpush2.bf16.msra.mxu0 0
        %790 = vmatprep.subr.bf16.mxu0 0
        %791 = vmatpush2.bf16.msra.mxu0 0
        %792 = vmatprep.subr.bf16.mxu0 0
        %793 = vmatpush2.bf16.msra.mxu0 0
        %794 = vmatprep.mubr.bf16.mxu0 0
        %795 = vmatmul.mubr.bf16.gmra.mxu0 %v720
        %v796 = vpop.f32.mrf.mxu0
        %v797 = vadd.f32 %v433, %v796
        %v798 = vpop.f32.mrf.mxu0
        %v799 = vadd.f32 %v437, %v798
        %v800 = vpop.f32.mrf.mxu0
        %v801 = vpop.f32.mrf.mxu0
        %802 = vdwg.mxu0
        %803 = vmatprep.subr.bf16.mxu0 0
        %804 = vmatpush1.bf16.msra.mxu0 0
        %805 = vmatprep.subr.bf16.mxu0 0
        %806 = vmatpush1.bf16.msra.mxu0 0
        %807 = vmatprep.subr.bf16.mxu0 0
        %808 = vmatpush1.bf16.msra.mxu0 0
        %809 = vmatprep.subr.bf16.mxu0 0
        %810 = vmatpush1.bf16.msra.mxu0 0
        %811 = vmatprep.subr.bf16.mxu0 %v736
        %812 = vmatpush1.bf16.msra.mxu0 %v733
        %813 = vmatprep.subr.bf16.mxu0 %v661
        %814 = vmatpush1.bf16.msra.mxu0 %v660
        %815 = vmatprep.subr.bf16.mxu0 %v649
        %816 = vmatpush1.bf16.msra.mxu0 %v648
        %817 = vmatprep.subr.bf16.mxu0 %v637
        %818 = vmatpush1.bf16.msra.mxu0 %v636
        %819 = vmatprep.subr.bf16.mxu0 0
        %820 = vmatpush2.bf16.msra.mxu0 0
        %821 = vmatprep.subr.bf16.mxu0 0
        %822 = vmatpush2.bf16.msra.mxu0 0
        %823 = vmatprep.subr.bf16.mxu0 0
        %824 = vmatpush2.bf16.msra.mxu0 0
        %825 = vmatprep.subr.bf16.mxu0 0
        %826 = vmatpush2.bf16.msra.mxu0 0
        %827 = vmatprep.subr.bf16.mxu0 0
        %828 = vmatpush2.bf16.msra.mxu0 0
        %829 = vmatprep.subr.bf16.mxu0 0
        %830 = vmatpush2.bf16.msra.mxu0 0
        %831 = vmatprep.subr.bf16.mxu0 0
        %832 = vmatpush2.bf16.msra.mxu0 0
        %833 = vmatprep.subr.bf16.mxu0 0
        %834 = vmatpush2.bf16.msra.mxu0 0
        %835 = vmatprep.mubr.bf16.mxu0 0
        %836 = vmatmul.mubr.bf16.gmra.mxu0 %v720
        %v837 = vpop.f32.mrf.mxu0
        %v838 = vadd.f32 %v441, %v837
        %v839 = vpop.f32.mrf.mxu0
        %v840 = vadd.f32 %v445, %v839
        %v841 = vpop.f32.mrf.mxu0
        %v842 = vpop.f32.mrf.mxu0
        %843 = vdwg.mxu0
        %844 = vmatprep.subr.bf16.mxu0 0
        %845 = vmatpush1.bf16.msra.mxu0 0
        %846 = vmatprep.subr.bf16.mxu0 0
        %847 = vmatpush1.bf16.msra.mxu0 0
        %848 = vmatprep.subr.bf16.mxu0 0
        %849 = vmatpush1.bf16.msra.mxu0 0
        %850 = vmatprep.subr.bf16.mxu0 0
        %851 = vmatpush1.bf16.msra.mxu0 0
        %852 = vmatprep.subr.bf16.mxu0 %v742
        %853 = vmatpush1.bf16.msra.mxu0 %v739
        %854 = vmatprep.subr.bf16.mxu0 %v663
        %855 = vmatpush1.bf16.msra.mxu0 %v662
        %856 = vmatprep.subr.bf16.mxu0 %v651
        %857 = vmatpush1.bf16.msra.mxu0 %v650
        %858 = vmatprep.subr.bf16.mxu0 %v639
        %859 = vmatpush1.bf16.msra.mxu0 %v638
        %860 = vmatprep.subr.bf16.mxu0 0
        %861 = vmatpush2.bf16.msra.mxu0 0
        %862 = vmatprep.subr.bf16.mxu0 0
        %863 = vmatpush2.bf16.msra.mxu0 0
        %864 = vmatprep.subr.bf16.mxu0 0
        %865 = vmatpush2.bf16.msra.mxu0 0
        %866 = vmatprep.subr.bf16.mxu0 0
        %867 = vmatpush2.bf16.msra.mxu0 0
        %868 = vmatprep.subr.bf16.mxu0 0
        %869 = vmatpush2.bf16.msra.mxu0 0
        %870 = vmatprep.subr.bf16.mxu0 0
        %871 = vmatpush2.bf16.msra.mxu0 0
        %872 = vmatprep.subr.bf16.mxu0 0
        %873 = vmatpush2.bf16.msra.mxu0 0
        %874 = vmatprep.subr.bf16.mxu0 0
        %875 = vmatpush2.bf16.msra.mxu0 0
        %876 = vmatprep.mubr.bf16.mxu0 0
        %877 = vmatmul.mubr.bf16.gmra.mxu0 %v720
        %v878 = vpop.f32.mrf.mxu0
        %v879 = vadd.f32 %v449, %v878
        %v880 = vpop.f32.mrf.mxu0
        %v881 = vadd.f32 %v453, %v880
        %v882 = vpop.f32.mrf.mxu0
        %v883 = vpop.f32.mrf.mxu0
        %884 = vdwg.mxu0
        %885 = vmatprep.subr.bf16.mxu0 0
        %886 = vmatpush1.bf16.msra.mxu0 0
        %887 = vmatprep.subr.bf16.mxu0 0
        %888 = vmatpush1.bf16.msra.mxu0 0
        %889 = vmatprep.subr.bf16.mxu0 0
        %890 = vmatpush1.bf16.msra.mxu0 0
        %891 = vmatprep.subr.bf16.mxu0 0
        %892 = vmatpush1.bf16.msra.mxu0 0
        %893 = vmatprep.subr.bf16.mxu0 %v748
        %894 = vmatpush1.bf16.msra.mxu0 %v745
        %895 = vmatprep.subr.bf16.mxu0 %v665
        %896 = vmatpush1.bf16.msra.mxu0 %v664
        %897 = vmatprep.subr.bf16.mxu0 %v653
        %898 = vmatpush1.bf16.msra.mxu0 %v652
        %899 = vmatprep.subr.bf16.mxu0 %v641
        %900 = vmatpush1.bf16.msra.mxu0 %v640
        %901 = vmatprep.subr.bf16.mxu0 0
        %902 = vmatpush2.bf16.msra.mxu0 0
        %903 = vmatprep.subr.bf16.mxu0 0
        %904 = vmatpush2.bf16.msra.mxu0 0
        %905 = vmatprep.subr.bf16.mxu0 0
        %906 = vmatpush2.bf16.msra.mxu0 0
        %907 = vmatprep.subr.bf16.mxu0 0
        %908 = vmatpush2.bf16.msra.mxu0 0
        %909 = vmatprep.subr.bf16.mxu0 0
        %910 = vmatpush2.bf16.msra.mxu0 0
        %911 = vmatprep.subr.bf16.mxu0 0
        %912 = vmatpush2.bf16.msra.mxu0 0
        %913 = vmatprep.subr.bf16.mxu0 0
        %914 = vmatpush2.bf16.msra.mxu0 0
        %915 = vmatprep.subr.bf16.mxu0 0
        %916 = vmatpush2.bf16.msra.mxu0 0
        %917 = vmatprep.mubr.bf16.mxu0 0
        %918 = vmatmul.mubr.bf16.gmra.mxu0 %v720
        %v919 = vpop.f32.mrf.mxu0
        %v920 = vadd.f32 %v457, %v919
        %v921 = vpop.f32.mrf.mxu0
        %v922 = vadd.f32 %v461, %v921
        %v923 = vpop.f32.mrf.mxu0
        %v924 = vpop.f32.mrf.mxu0
        %925 = vdwg.mxu0
        %926 = vmatprep.subr.bf16.mxu0 0
        %927 = vmatpush1.bf16.msra.mxu0 0
        %928 = vmatprep.subr.bf16.mxu0 0
        %929 = vmatpush1.bf16.msra.mxu0 0
        %930 = vmatprep.subr.bf16.mxu0 0
        %931 = vmatpush1.bf16.msra.mxu0 0
        %932 = vmatprep.subr.bf16.mxu0 0
        %933 = vmatpush1.bf16.msra.mxu0 0
        %934 = vmatprep.subr.bf16.mxu0 %v754
        %935 = vmatpush1.bf16.msra.mxu0 %v751
        %936 = vmatprep.subr.bf16.mxu0 %v667
        %937 = vmatpush1.bf16.msra.mxu0 %v666
        %938 = vmatprep.subr.bf16.mxu0 %v655
        %939 = vmatpush1.bf16.msra.mxu0 %v654
        %940 = vmatprep.subr.bf16.mxu0 %v643
        %941 = vmatpush1.bf16.msra.mxu0 %v642
        %942 = vmatprep.subr.bf16.mxu0 0
        %943 = vmatpush2.bf16.msra.mxu0 0
        %944 = vmatprep.subr.bf16.mxu0 0
        %945 = vmatpush2.bf16.msra.mxu0 0
        %946 = vmatprep.subr.bf16.mxu0 0
        %947 = vmatpush2.bf16.msra.mxu0 0
        %948 = vmatprep.subr.bf16.mxu0 0
        %949 = vmatpush2.bf16.msra.mxu0 0
        %950 = vmatprep.subr.bf16.mxu0 0
        %951 = vmatpush2.bf16.msra.mxu0 0
        %952 = vmatprep.subr.bf16.mxu0 0
        %953 = vmatpush2.bf16.msra.mxu0 0
        %954 = vmatprep.subr.bf16.mxu0 0
        %955 = vmatpush2.bf16.msra.mxu0 0
        %956 = vmatprep.subr.bf16.mxu0 0
        %957 = vmatpush2.bf16.msra.mxu0 0
        %958 = vmatprep.mubr.bf16.mxu0 0
        %959 = vmatmul.mubr.bf16.gmra.mxu0 %v720
        %v960 = vpop.f32.mrf.mxu0
        %v961 = vadd.f32 %v465, %v960
        %v962 = vpop.f32.mrf.mxu0
        %v963 = vadd.f32 %v469, %v962
        %v964 = vpop.f32.mrf.mxu0
        %v965 = vpop.f32.mrf.mxu0
        %966 = vdwg.mxu0
        %967 = vmatprep.subr.bf16.mxu0 0
        %968 = vmatpush1.bf16.msra.mxu0 0
        %969 = vmatprep.subr.bf16.mxu0 0
        %970 = vmatpush1.bf16.msra.mxu0 0
        %971 = vmatprep.subr.bf16.mxu0 0
        %972 = vmatpush1.bf16.msra.mxu0 0
        %973 = vmatprep.subr.bf16.mxu0 0
        %974 = vmatpush1.bf16.msra.mxu0 0
        %975 = vmatprep.subr.bf16.mxu0 %v760
        %976 = vmatpush1.bf16.msra.mxu0 %v757
        %977 = vmatprep.subr.bf16.mxu0 %v669
        %978 = vmatpush1.bf16.msra.mxu0 %v668
        %979 = vmatprep.subr.bf16.mxu0 %v657
        %980 = vmatpush1.bf16.msra.mxu0 %v656
        %981 = vmatprep.subr.bf16.mxu0 %v645
        %982 = vmatpush1.bf16.msra.mxu0 %v644
        %983 = vmatprep.subr.bf16.mxu0 0
        %984 = vmatpush2.bf16.msra.mxu0 0
        %985 = vmatprep.subr.bf16.mxu0 0
        %986 = vmatpush2.bf16.msra.mxu0 0
        %987 = vmatprep.subr.bf16.mxu0 0
        %988 = vmatpush2.bf16.msra.mxu0 0
        %989 = vmatprep.subr.bf16.mxu0 0
        %990 = vmatpush2.bf16.msra.mxu0 0
        %991 = vmatprep.subr.bf16.mxu0 0
        %992 = vmatpush2.bf16.msra.mxu0 0
        %993 = vmatprep.subr.bf16.mxu0 0
        %994 = vmatpush2.bf16.msra.mxu0 0
        %995 = vmatprep.subr.bf16.mxu0 0
        %996 = vmatpush2.bf16.msra.mxu0 0
        %997 = vmatprep.subr.bf16.mxu0 0
        %998 = vmatpush2.bf16.msra.mxu0 0
        %999 = vmatprep.mubr.bf16.mxu0 0
        %1000 = vmatmul.mubr.bf16.gmra.mxu0 %v720
        %v1001 = vpop.f32.mrf.mxu0
        %v1002 = vadd.f32 %v473, %v1001
        %v1003 = vpop.f32.mrf.mxu0
        %v1004 = vadd.f32 %v477, %v1003
        %v1005 = vpop.f32.mrf.mxu0
        %v1006 = vpop.f32.mrf.mxu0
        %1007 = vdwg.mxu0
        %v1008 = vmul.f32 %v797, 0.5
        %v1009 = vmul.f32 %v799, 0.5
        %v1010 = vmul.f32 %v838, 0.5
        %v1011 = vmul.f32 %v840, 0.5
        %v1012 = vtanh.pop %v1008
        %v1013 = vtanh.pop %v1009
        %v1014 = vtanh.pop %v1010
        %v1015 = vtanh.pop %v1011
        %v1016 = vadd.f32 %v1012, 1.0
        %v1017 = vadd.f32 %v1013, 1.0
        %v1018 = vadd.f32 %v1014, 1.0
        %v1019 = vadd.f32 %v1015, 1.0
        %v1020 = vmul.f32 %v1016, 0.5
        %v1021 = vmul.f32 %v1017, 0.5
        %v1022 = vmul.f32 %v1018, 0.5
        %v1023 = vmul.f32 %v1019, 0.5
        %v1024 = vtanh.pop %v879
        %v1025 = vtanh.pop %v881
        %v1026 = vtanh.pop %v920
        %v1027 = vtanh.pop %v922
        %v1028 = vmul.f32 %v1020, %v1024
        %v1029 = vmul.f32 %v1021, %v1025
        %v1030 = vmul.f32 %v1022, %v1026
        %v1031 = vmul.f32 %v1023, %v1027
        %v1032 = vmul.f32 %v961, 0.5
        %v1033 = vmul.f32 %v963, 0.5
        %v1034 = vmul.f32 %v1002, 0.5
        %v1035 = vmul.f32 %v1004, 0.5
        %v1036 = vtanh.pop %v1032
        %v1037 = vtanh.pop %v1033
        %v1038 = vtanh.pop %v1034
        %v1039 = vtanh.pop %v1035
        %v1040 = vadd.f32 %v1036, 1.0
        %v1041 = vadd.f32 %v1037, 1.0
        %v1042 = vadd.f32 %v1038, 1.0
        %v1043 = vadd.f32 %v1039, 1.0
        %v1044 = vmul.f32 %v1040, 0.5
        %v1045 = vmul.f32 %v1041, 0.5
        %v1046 = vmul.f32 %v1042, 0.5
        %v1047 = vmul.f32 %v1043, 0.5
        %v1048 = vtanh.pop %v1028
        %v1049 = vtanh.pop %v1029
        %v1050 = vtanh.pop %v1030
        %v1051 = vtanh.pop %v1031
        %v1052 = vmul.f32 %v1044, %v1048
        %v1053 = vmul.f32 %v1045, %v1049
        %v1054 = vmul.f32 %v1046, %v1050
        %v1055 = vmul.f32 %v1047, %v1051
        %v1056 = vpack.c.bf16 %v1052, %v1052
        %v1057 = vpack.c.bf16 %v1053, %v1053
        %v1058 = vpack.c.bf16 %v1054, %v1054
        %v1059 = vpack.c.bf16 %v1055, %v1055
        %v1060 = vld [vmem:[#allocation8] sm:$0xff]
        %v1061 = vld [vmem:[#allocation8 + $0x8] sm:$0xff]
        %v1062 = vld [vmem:[#allocation8 + $0x10] sm:$0xff]
        %v1063 = vld [vmem:[#allocation8 + $0x18] sm:$0xff]
        %v1064 = vld [vmem:[#allocation8 + $0x20] sm:$0xff]
        %v1065 = vld [vmem:[#allocation8 + $0x28] sm:$0xff]
        %v1066 = vld [vmem:[#allocation8 + $0x30] sm:$0xff]
        %v1067 = vld [vmem:[#allocation8 + $0x38] sm:$0xff]
        %v1068 = vld [vmem:[#allocation8 + $0x40] sm:$0xff]
        %v1069 = vld [vmem:[#allocation8 + $0x48] sm:$0xff]
        %v1070 = vld [vmem:[#allocation8 + $0x50] sm:$0xff]
        %v1071 = vld [vmem:[#allocation8 + $0x58] sm:$0xff]
        %v1072 = vld [vmem:[#allocation8 + $0x60] sm:$0xff]
        %v1073 = vld [vmem:[#allocation8 + $0x68] sm:$0xff]
        %v1074 = vld [vmem:[#allocation8 + $0x70] sm:$0xff]
        %v1075 = vld [vmem:[#allocation8 + $0x78] sm:$0xff]
        %v1076 = vld [vmem:[#allocation8 + $0x80] sm:$0xff]
        %v1077 = vld [vmem:[#allocation8 + $0x88] sm:$0xff]
        %v1078 = vld [vmem:[#allocation8 + $0x90] sm:$0xff]
        %v1079 = vld [vmem:[#allocation8 + $0x98] sm:$0xff]
        %v1080 = vld [vmem:[#allocation8 + $0xa0] sm:$0xff]
        %v1081 = vld [vmem:[#allocation8 + $0xa8] sm:$0xff]
        %v1082 = vld [vmem:[#allocation8 + $0xb0] sm:$0xff]
        %v1083 = vld [vmem:[#allocation8 + $0xb8] sm:$0xff]
        %v1084 = vld [vmem:[#allocation8 + $0xc0] sm:$0xff]
        %v1085 = vld [vmem:[#allocation8 + $0xc8] sm:$0xff]
        %v1086 = vld [vmem:[#allocation8 + $0xd0] sm:$0xff]
        %v1087 = vld [vmem:[#allocation8 + $0xd8] sm:$0xff]
        %v1088 = vld [vmem:[#allocation8 + $0xe0] sm:$0xff]
        %v1089 = vld [vmem:[#allocation8 + $0xe8] sm:$0xff]
        %v1090 = vld [vmem:[#allocation8 + $0xf0] sm:$0xff]
        %v1091 = vld [vmem:[#allocation8 + $0xf8] sm:$0xff]
        %v1092 = vld [vmem:[#allocation8 + $0x100] sm:$0xff]
        %v1093 = vld [vmem:[#allocation8 + $0x108] sm:$0xff]
        %v1094 = vld [vmem:[#allocation8 + $0x110] sm:$0xff]
        %v1095 = vld [vmem:[#allocation8 + $0x118] sm:$0xff]
        %v1096 = vld [vmem:[#allocation8 + $0x120] sm:$0xff]
        %v1097 = vld [vmem:[#allocation8 + $0x128] sm:$0xff]
        %v1098 = vld [vmem:[#allocation8 + $0x130] sm:$0xff]
        %v1099 = vld [vmem:[#allocation8 + $0x138] sm:$0xff]
        %v1100 = vld [vmem:[#allocation8 + $0x140] sm:$0xff]
        %v1101 = vld [vmem:[#allocation8 + $0x148] sm:$0xff]
        %v1102 = vld [vmem:[#allocation8 + $0x150] sm:$0xff]
        %v1103 = vld [vmem:[#allocation8 + $0x158] sm:$0xff]
        %v1104 = vld [vmem:[#allocation8 + $0x160] sm:$0xff]
        %v1105 = vld [vmem:[#allocation8 + $0x168] sm:$0xff]
        %v1106 = vld [vmem:[#allocation8 + $0x170] sm:$0xff]
        %v1107 = vld [vmem:[#allocation8 + $0x178] sm:$0xff]
        %v1108 = vld [vmem:[#allocation8 + $0x180] sm:$0xff]
        %v1109 = vld [vmem:[#allocation8 + $0x188] sm:$0xff]
        %v1110 = vld [vmem:[#allocation8 + $0x190] sm:$0xff]
        %v1111 = vld [vmem:[#allocation8 + $0x198] sm:$0xff]
        %v1112 = vld [vmem:[#allocation8 + $0x1a0] sm:$0xff]
        %v1113 = vld [vmem:[#allocation8 + $0x1a8] sm:$0xff]
        %v1114 = vld [vmem:[#allocation8 + $0x1b0] sm:$0xff]
        %v1115 = vld [vmem:[#allocation8 + $0x1b8] sm:$0xff]
        %v1116 = vld [vmem:[#allocation8 + $0x1c0] sm:$0xff]
        %v1117 = vld [vmem:[#allocation8 + $0x1c8] sm:$0xff]
        %v1118 = vld [vmem:[#allocation8 + $0x1d0] sm:$0xff]
        %v1119 = vld [vmem:[#allocation8 + $0x1d8] sm:$0xff]
        %v1120 = vld [vmem:[#allocation8 + $0x1e0] sm:$0xff]
        %v1121 = vld [vmem:[#allocation8 + $0x1e8] sm:$0xff]
        %v1122 = vld [vmem:[#allocation8 + $0x1f0] sm:$0xff]
        %v1123 = vld [vmem:[#allocation8 + $0x1f8] sm:$0xff]
        %v1124 = vld [vmem:[#allocation8 + $0x200] sm:$0xff]
        %v1125 = vld [vmem:[#allocation8 + $0x208] sm:$0xff]
        %v1126 = vld [vmem:[#allocation8 + $0x210] sm:$0xff]
        %v1127 = vld [vmem:[#allocation8 + $0x218] sm:$0xff]
        %v1128 = vld [vmem:[#allocation8 + $0x220] sm:$0xff]
        %v1129 = vld [vmem:[#allocation8 + $0x228] sm:$0xff]
        %v1130 = vld [vmem:[#allocation8 + $0x230] sm:$0xff]
        %v1131 = vld [vmem:[#allocation8 + $0x238] sm:$0xff]
        %v1132 = vld [vmem:[#allocation8 + $0x240] sm:$0xff]
        %v1133 = vld [vmem:[#allocation8 + $0x248] sm:$0xff]
        %v1134 = vld [vmem:[#allocation8 + $0x250] sm:$0xff]
        %v1135 = vld [vmem:[#allocation8 + $0x258] sm:$0xff]
        %v1136 = vld [vmem:[#allocation8 + $0x260] sm:$0xff]
        %v1137 = vld [vmem:[#allocation8 + $0x268] sm:$0xff]
        %v1138 = vld [vmem:[#allocation8 + $0x270] sm:$0xff]
        %v1139 = vld [vmem:[#allocation8 + $0x278] sm:$0xff]
        %v1140 = vld [vmem:[#allocation8 + $0x280] sm:$0xff]
        %v1141 = vld [vmem:[#allocation8 + $0x288] sm:$0xff]
        %v1142 = vld [vmem:[#allocation8 + $0x290] sm:$0xff]
        %v1143 = vld [vmem:[#allocation8 + $0x298] sm:$0xff]
        %v1144 = vld [vmem:[#allocation8 + $0x2a0] sm:$0xff]
        %v1145 = vld [vmem:[#allocation8 + $0x2a8] sm:$0xff]
        %v1146 = vld [vmem:[#allocation8 + $0x2b0] sm:$0xff]
        %v1147 = vld [vmem:[#allocation8 + $0x2b8] sm:$0xff]
        %v1148 = vld [vmem:[#allocation8 + $0x2c0] sm:$0xff]
        %v1149 = vld [vmem:[#allocation8 + $0x2c8] sm:$0xff]
        %v1150 = vld [vmem:[#allocation8 + $0x2d0] sm:$0xff]
        %v1151 = vld [vmem:[#allocation8 + $0x2d8] sm:$0xff]
        %v1152 = vld [vmem:[#allocation8 + $0x2e0] sm:$0xff]
        %v1153 = vld [vmem:[#allocation8 + $0x2e8] sm:$0xff]
        %v1154 = vld [vmem:[#allocation8 + $0x2f0] sm:$0xff]
        %v1155 = vld [vmem:[#allocation8 + $0x2f8] sm:$0xff]
        %v1156 = vld [vmem:[#allocation8 + $0x300] sm:$0xff]
        %v1157 = vld [vmem:[#allocation8 + $0x308] sm:$0xff]
        %v1158 = vld [vmem:[#allocation8 + $0x310] sm:$0xff]
        %v1159 = vld [vmem:[#allocation8 + $0x318] sm:$0xff]
        %v1160 = vld [vmem:[#allocation8 + $0x320] sm:$0xff]
        %v1161 = vld [vmem:[#allocation8 + $0x328] sm:$0xff]
        %v1162 = vld [vmem:[#allocation8 + $0x330] sm:$0xff]
        %v1163 = vld [vmem:[#allocation8 + $0x338] sm:$0xff]
        %v1164 = vld [vmem:[#allocation8 + $0x340] sm:$0xff]
        %v1165 = vld [vmem:[#allocation8 + $0x348] sm:$0xff]
        %v1166 = vld [vmem:[#allocation8 + $0x350] sm:$0xff]
        %v1167 = vld [vmem:[#allocation8 + $0x358] sm:$0xff]
        %v1168 = vld [vmem:[#allocation8 + $0x360] sm:$0xff]
        %v1169 = vld [vmem:[#allocation8 + $0x368] sm:$0xff]
        %v1170 = vld [vmem:[#allocation8 + $0x370] sm:$0xff]
        %v1171 = vld [vmem:[#allocation8 + $0x378] sm:$0xff]
        %v1172 = vld [vmem:[#allocation8 + $0x380] sm:$0xff]
        %v1173 = vld [vmem:[#allocation8 + $0x388] sm:$0xff]
        %v1174 = vld [vmem:[#allocation8 + $0x390] sm:$0xff]
        %v1175 = vld [vmem:[#allocation8 + $0x398] sm:$0xff]
        %v1176 = vld [vmem:[#allocation8 + $0x3a0] sm:$0xff]
        %v1177 = vld [vmem:[#allocation8 + $0x3a8] sm:$0xff]
        %v1178 = vld [vmem:[#allocation8 + $0x3b0] sm:$0xff]
        %v1179 = vld [vmem:[#allocation8 + $0x3b8] sm:$0xff]
        %v1180 = vld [vmem:[#allocation8 + $0x3c0] sm:$0xff]
        %v1181 = vld [vmem:[#allocation8 + $0x3c8] sm:$0xff]
        %v1182 = vld [vmem:[#allocation8 + $0x3d0] sm:$0xff]
        %v1183 = vld [vmem:[#allocation8 + $0x3d8] sm:$0xff]
        %v1184 = vld [vmem:[#allocation8 + $0x3e0] sm:$0xff]
        %v1185 = vld [vmem:[#allocation8 + $0x3e8] sm:$0xff]
        %v1186 = vld [vmem:[#allocation8 + $0x3f0] sm:$0xff]
        %v1187 = vld [vmem:[#allocation8 + $0x3f8] sm:$0xff]
        %v1188 = vld [vmem:[#allocation8 + $0x400] sm:$0xff]
        %v1189 = vld [vmem:[#allocation8 + $0x408] sm:$0xff]
        %v1190 = vld [vmem:[#allocation8 + $0x410] sm:$0xff]
        %v1191 = vld [vmem:[#allocation8 + $0x418] sm:$0xff]
        %v1192 = vld [vmem:[#allocation8 + $0x420] sm:$0xff]
        %v1193 = vld [vmem:[#allocation8 + $0x428] sm:$0xff]
        %v1194 = vld [vmem:[#allocation8 + $0x430] sm:$0xff]
        %v1195 = vld [vmem:[#allocation8 + $0x438] sm:$0xff]
        %v1196 = vld [vmem:[#allocation8 + $0x440] sm:$0xff]
        %v1197 = vld [vmem:[#allocation8 + $0x448] sm:$0xff]
        %v1198 = vld [vmem:[#allocation8 + $0x450] sm:$0xff]
        %v1199 = vld [vmem:[#allocation8 + $0x458] sm:$0xff]
        %v1200 = vld [vmem:[#allocation8 + $0x460] sm:$0xff]
        %v1201 = vld [vmem:[#allocation8 + $0x468] sm:$0xff]
        %v1202 = vld [vmem:[#allocation8 + $0x470] sm:$0xff]
        %v1203 = vld [vmem:[#allocation8 + $0x478] sm:$0xff]
        %v1204 = vld [vmem:[#allocation8 + $0x480] sm:$0xff]
        %v1205 = vld [vmem:[#allocation8 + $0x488] sm:$0xff]
        %v1206 = vld [vmem:[#allocation8 + $0x490] sm:$0xff]
        %v1207 = vld [vmem:[#allocation8 + $0x498] sm:$0xff]
        %v1208 = vld [vmem:[#allocation8 + $0x4a0] sm:$0xff]
        %v1209 = vld [vmem:[#allocation8 + $0x4a8] sm:$0xff]
        %v1210 = vld [vmem:[#allocation8 + $0x4b0] sm:$0xff]
        %v1211 = vld [vmem:[#allocation8 + $0x4b8] sm:$0xff]
        %v1212 = vld [vmem:[#allocation8 + $0x4c0] sm:$0xff]
        %v1213 = vld [vmem:[#allocation8 + $0x4c8] sm:$0xff]
        %v1214 = vld [vmem:[#allocation8 + $0x4d0] sm:$0xff]
        %v1215 = vld [vmem:[#allocation8 + $0x4d8] sm:$0xff]
        %v1216 = vld [vmem:[#allocation8 + $0x4e0] sm:$0xff]
        %v1217 = vld [vmem:[#allocation8 + $0x4e8] sm:$0xff]
        %v1218 = vld [vmem:[#allocation8 + $0x4f0] sm:$0xff]
        %v1219 = vld [vmem:[#allocation8 + $0x4f8] sm:$0xff]
        %v1220 = vld [vmem:[#allocation8 + $0x500] sm:$0xff]
        %v1221 = vld [vmem:[#allocation8 + $0x508] sm:$0xff]
        %v1222 = vld [vmem:[#allocation8 + $0x510] sm:$0xff]
        %v1223 = vld [vmem:[#allocation8 + $0x518] sm:$0xff]
        %v1224 = vld [vmem:[#allocation8 + $0x520] sm:$0xff]
        %v1225 = vld [vmem:[#allocation8 + $0x528] sm:$0xff]
        %v1226 = vld [vmem:[#allocation8 + $0x530] sm:$0xff]
        %v1227 = vld [vmem:[#allocation8 + $0x538] sm:$0xff]
        %v1228 = vld [vmem:[#allocation8 + $0x540] sm:$0xff]
        %v1229 = vld [vmem:[#allocation8 + $0x548] sm:$0xff]
        %v1230 = vld [vmem:[#allocation8 + $0x550] sm:$0xff]
        %v1231 = vld [vmem:[#allocation8 + $0x558] sm:$0xff]
        %v1232 = vld [vmem:[#allocation8 + $0x560] sm:$0xff]
        %v1233 = vld [vmem:[#allocation8 + $0x568] sm:$0xff]
        %v1234 = vld [vmem:[#allocation8 + $0x570] sm:$0xff]
        %v1235 = vld [vmem:[#allocation8 + $0x578] sm:$0xff]
        %v1236 = vld [vmem:[#allocation8 + $0x580] sm:$0xff]
        %v1237 = vld [vmem:[#allocation8 + $0x588] sm:$0xff]
        %v1238 = vld [vmem:[#allocation8 + $0x590] sm:$0xff]
        %v1239 = vld [vmem:[#allocation8 + $0x598] sm:$0xff]
        %v1240 = vld [vmem:[#allocation8 + $0x5a0] sm:$0xff]
        %v1241 = vld [vmem:[#allocation8 + $0x5a8] sm:$0xff]
        %v1242 = vld [vmem:[#allocation8 + $0x5b0] sm:$0xff]
        %v1243 = vld [vmem:[#allocation8 + $0x5b8] sm:$0xff]
        %v1244 = vld [vmem:[#allocation8 + $0x5c0] sm:$0xff]
        %v1245 = vld [vmem:[#allocation8 + $0x5c8] sm:$0xff]
        %v1246 = vld [vmem:[#allocation8 + $0x5d0] sm:$0xff]
        %v1247 = vld [vmem:[#allocation8 + $0x5d8] sm:$0xff]
        %v1248 = vld [vmem:[#allocation8 + $0x5e0] sm:$0xff]
        %v1249 = vld [vmem:[#allocation8 + $0x5e8] sm:$0xff]
        %v1250 = vld [vmem:[#allocation8 + $0x5f0] sm:$0xff]
        %v1251 = vld [vmem:[#allocation8 + $0x5f8] sm:$0xff]
        %v1252 = vld [vmem:[#allocation8 + $0x600] sm:$0xff]
        %v1253 = vld [vmem:[#allocation8 + $0x608] sm:$0xff]
        %v1254 = vld [vmem:[#allocation8 + $0x610] sm:$0xff]
        %v1255 = vld [vmem:[#allocation8 + $0x618] sm:$0xff]
        %v1256 = vld [vmem:[#allocation8 + $0x620] sm:$0xff]
        %v1257 = vld [vmem:[#allocation8 + $0x628] sm:$0xff]
        %v1258 = vld [vmem:[#allocation8 + $0x630] sm:$0xff]
        %v1259 = vld [vmem:[#allocation8 + $0x638] sm:$0xff]
        %v1260 = vld [vmem:[#allocation8 + $0x640] sm:$0xff]
        %v1261 = vld [vmem:[#allocation8 + $0x648] sm:$0xff]
        %v1262 = vld [vmem:[#allocation8 + $0x650] sm:$0xff]
        %v1263 = vld [vmem:[#allocation8 + $0x658] sm:$0xff]
        %v1264 = vld [vmem:[#allocation8 + $0x660] sm:$0xff]
        %v1265 = vld [vmem:[#allocation8 + $0x668] sm:$0xff]
        %v1266 = vld [vmem:[#allocation8 + $0x670] sm:$0xff]
        %v1267 = vld [vmem:[#allocation8 + $0x678] sm:$0xff]
        %v1268 = vld [vmem:[#allocation8 + $0x680] sm:$0xff]
        %v1269 = vld [vmem:[#allocation8 + $0x688] sm:$0xff]
        %v1270 = vld [vmem:[#allocation8 + $0x690] sm:$0xff]
        %v1271 = vld [vmem:[#allocation8 + $0x698] sm:$0xff]
        %v1272 = vld [vmem:[#allocation8 + $0x6a0] sm:$0xff]
        %v1273 = vld [vmem:[#allocation8 + $0x6a8] sm:$0xff]
        %v1274 = vld [vmem:[#allocation8 + $0x6b0] sm:$0xff]
        %v1275 = vld [vmem:[#allocation8 + $0x6b8] sm:$0xff]
        %v1276 = vld [vmem:[#allocation8 + $0x6c0] sm:$0xff]
        %v1277 = vld [vmem:[#allocation8 + $0x6c8] sm:$0xff]
        %v1278 = vld [vmem:[#allocation8 + $0x6d0] sm:$0xff]
        %v1279 = vld [vmem:[#allocation8 + $0x6d8] sm:$0xff]
        %v1280 = vld [vmem:[#allocation8 + $0x6e0] sm:$0xff]
        %v1281 = vld [vmem:[#allocation8 + $0x6e8] sm:$0xff]
        %v1282 = vld [vmem:[#allocation8 + $0x6f0] sm:$0xff]
        %v1283 = vld [vmem:[#allocation8 + $0x6f8] sm:$0xff]
        %v1284 = vld [vmem:[#allocation8 + $0x700] sm:$0xff]
        %v1285 = vld [vmem:[#allocation8 + $0x708] sm:$0xff]
        %v1286 = vld [vmem:[#allocation8 + $0x710] sm:$0xff]
        %v1287 = vld [vmem:[#allocation8 + $0x718] sm:$0xff]
        %v1288 = vld [vmem:[#allocation8 + $0x720] sm:$0xff]
        %v1289 = vld [vmem:[#allocation8 + $0x728] sm:$0xff]
        %v1290 = vld [vmem:[#allocation8 + $0x730] sm:$0xff]
        %v1291 = vld [vmem:[#allocation8 + $0x738] sm:$0xff]
        %v1292 = vld [vmem:[#allocation8 + $0x740] sm:$0xff]
        %v1293 = vld [vmem:[#allocation8 + $0x748] sm:$0xff]
        %v1294 = vld [vmem:[#allocation8 + $0x750] sm:$0xff]
        %v1295 = vld [vmem:[#allocation8 + $0x758] sm:$0xff]
        %v1296 = vld [vmem:[#allocation8 + $0x760] sm:$0xff]
        %v1297 = vld [vmem:[#allocation8 + $0x768] sm:$0xff]
        %v1298 = vld [vmem:[#allocation8 + $0x770] sm:$0xff]
        %v1299 = vld [vmem:[#allocation8 + $0x778] sm:$0xff]
        %v1300 = vld [vmem:[#allocation8 + $0x780] sm:$0xff]
        %v1301 = vld [vmem:[#allocation8 + $0x788] sm:$0xff]
        %v1302 = vld [vmem:[#allocation8 + $0x790] sm:$0xff]
        %v1303 = vld [vmem:[#allocation8 + $0x798] sm:$0xff]
        %v1304 = vld [vmem:[#allocation8 + $0x7a0] sm:$0xff]
        %v1305 = vld [vmem:[#allocation8 + $0x7a8] sm:$0xff]
        %v1306 = vld [vmem:[#allocation8 + $0x7b0] sm:$0xff]
        %v1307 = vld [vmem:[#allocation8 + $0x7b8] sm:$0xff]
        %v1308 = vld [vmem:[#allocation8 + $0x7c0] sm:$0xff]
        %v1309 = vld [vmem:[#allocation8 + $0x7c8] sm:$0xff]
        %v1310 = vld [vmem:[#allocation8 + $0x7d0] sm:$0xff]
        %v1311 = vld [vmem:[#allocation8 + $0x7d8] sm:$0xff]
        %v1312 = vld [vmem:[#allocation8 + $0x7e0] sm:$0xff]
        %v1313 = vld [vmem:[#allocation8 + $0x7e8] sm:$0xff]
        %v1314 = vld [vmem:[#allocation8 + $0x7f0] sm:$0xff]
        %v1315 = vld [vmem:[#allocation8 + $0x7f8] sm:$0xff]
        %v1316 = vld [vmem:[#allocation8 + $0x800] sm:$0xff]
        %v1317 = vld [vmem:[#allocation8 + $0x808] sm:$0xff]
        %v1318 = vld [vmem:[#allocation8 + $0x810] sm:$0xff]
        %v1319 = vld [vmem:[#allocation8 + $0x818] sm:$0xff]
        %v1320 = vld [vmem:[#allocation8 + $0x820] sm:$0xff]
        %v1321 = vld [vmem:[#allocation8 + $0x828] sm:$0xff]
        %v1322 = vld [vmem:[#allocation8 + $0x830] sm:$0xff]
        %v1323 = vld [vmem:[#allocation8 + $0x838] sm:$0xff]
        %v1324 = vld [vmem:[#allocation8 + $0x840] sm:$0xff]
        %v1325 = vld [vmem:[#allocation8 + $0x848] sm:$0xff]
        %v1326 = vld [vmem:[#allocation8 + $0x850] sm:$0xff]
        %v1327 = vld [vmem:[#allocation8 + $0x858] sm:$0xff]
        %v1328 = vld [vmem:[#allocation8 + $0x860] sm:$0xff]
        %v1329 = vld [vmem:[#allocation8 + $0x868] sm:$0xff]
        %v1330 = vld [vmem:[#allocation8 + $0x870] sm:$0xff]
        %v1331 = vld [vmem:[#allocation8 + $0x878] sm:$0xff]
        %v1332 = vld [vmem:[#allocation8 + $0x880] sm:$0xff]
        %v1333 = vld [vmem:[#allocation8 + $0x888] sm:$0xff]
        %v1334 = vld [vmem:[#allocation8 + $0x890] sm:$0xff]
        %v1335 = vld [vmem:[#allocation8 + $0x898] sm:$0xff]
        %v1336 = vld [vmem:[#allocation8 + $0x8a0] sm:$0xff]
        %v1337 = vld [vmem:[#allocation8 + $0x8a8] sm:$0xff]
        %v1338 = vld [vmem:[#allocation8 + $0x8b0] sm:$0xff]
        %v1339 = vld [vmem:[#allocation8 + $0x8b8] sm:$0xff]
        %v1340 = vld [vmem:[#allocation8 + $0x8c0] sm:$0xff]
        %v1341 = vld [vmem:[#allocation8 + $0x8c8] sm:$0xff]
        %v1342 = vld [vmem:[#allocation8 + $0x8d0] sm:$0xff]
        %v1343 = vld [vmem:[#allocation8 + $0x8d8] sm:$0xff]
        %v1344 = vld [vmem:[#allocation8 + $0x8e0] sm:$0xff]
        %v1345 = vld [vmem:[#allocation8 + $0x8e8] sm:$0xff]
        %v1346 = vld [vmem:[#allocation8 + $0x8f0] sm:$0xff]
        %v1347 = vld [vmem:[#allocation8 + $0x8f8] sm:$0xff]
        %v1348 = vld [vmem:[#allocation8 + $0x900] sm:$0xff]
        %v1349 = vld [vmem:[#allocation8 + $0x908] sm:$0xff]
        %v1350 = vld [vmem:[#allocation8 + $0x910] sm:$0xff]
        %v1351 = vld [vmem:[#allocation8 + $0x918] sm:$0xff]
        %v1352 = vld [vmem:[#allocation8 + $0x920] sm:$0xff]
        %v1353 = vld [vmem:[#allocation8 + $0x928] sm:$0xff]
        %v1354 = vld [vmem:[#allocation8 + $0x930] sm:$0xff]
        %v1355 = vld [vmem:[#allocation8 + $0x938] sm:$0xff]
        %v1356 = vld [vmem:[#allocation8 + $0x940] sm:$0xff]
        %v1357 = vld [vmem:[#allocation8 + $0x948] sm:$0xff]
        %v1358 = vld [vmem:[#allocation8 + $0x950] sm:$0xff]
        %v1359 = vld [vmem:[#allocation8 + $0x958] sm:$0xff]
        %v1360 = vld [vmem:[#allocation8 + $0x960] sm:$0xff]
        %v1361 = vld [vmem:[#allocation8 + $0x968] sm:$0xff]
        %v1362 = vld [vmem:[#allocation8 + $0x970] sm:$0xff]
        %v1363 = vld [vmem:[#allocation8 + $0x978] sm:$0xff]
        %v1364 = vld [vmem:[#allocation8 + $0x980] sm:$0xff]
        %v1365 = vld [vmem:[#allocation8 + $0x988] sm:$0xff]
        %v1366 = vld [vmem:[#allocation8 + $0x990] sm:$0xff]
        %v1367 = vld [vmem:[#allocation8 + $0x998] sm:$0xff]
        %v1368 = vld [vmem:[#allocation8 + $0x9a0] sm:$0xff]
        %v1369 = vld [vmem:[#allocation8 + $0x9a8] sm:$0xff]
        %v1370 = vld [vmem:[#allocation8 + $0x9b0] sm:$0xff]
        %v1371 = vld [vmem:[#allocation8 + $0x9b8] sm:$0xff]
        %v1372 = vld [vmem:[#allocation8 + $0x9c0] sm:$0xff]
        %v1373 = vld [vmem:[#allocation8 + $0x9c8] sm:$0xff]
        %v1374 = vld [vmem:[#allocation8 + $0x9d0] sm:$0xff]
        %v1375 = vld [vmem:[#allocation8 + $0x9d8] sm:$0xff]
        %v1376 = vld [vmem:[#allocation8 + $0x9e0] sm:$0xff]
        %v1377 = vld [vmem:[#allocation8 + $0x9e8] sm:$0xff]
        %v1378 = vld [vmem:[#allocation8 + $0x9f0] sm:$0xff]
        %v1379 = vld [vmem:[#allocation8 + $0x9f8] sm:$0xff]
        %v1380 = vld [vmem:[#allocation8 + $0xa00] sm:$0xff]
        %v1381 = vld [vmem:[#allocation8 + $0xa08] sm:$0xff]
        %v1382 = vld [vmem:[#allocation8 + $0xa10] sm:$0xff]
        %v1383 = vld [vmem:[#allocation8 + $0xa18] sm:$0xff]
        %v1384 = vld [vmem:[#allocation8 + $0xa20] sm:$0xff]
        %v1385 = vld [vmem:[#allocation8 + $0xa28] sm:$0xff]
        %v1386 = vld [vmem:[#allocation8 + $0xa30] sm:$0xff]
        %v1387 = vld [vmem:[#allocation8 + $0xa38] sm:$0xff]
        %v1388 = vld [vmem:[#allocation8 + $0xa40] sm:$0xff]
        %v1389 = vld [vmem:[#allocation8 + $0xa48] sm:$0xff]
        %v1390 = vld [vmem:[#allocation8 + $0xa50] sm:$0xff]
        %v1391 = vld [vmem:[#allocation8 + $0xa58] sm:$0xff]
        %v1392 = vld [vmem:[#allocation8 + $0xa60] sm:$0xff]
        %v1393 = vld [vmem:[#allocation8 + $0xa68] sm:$0xff]
        %v1394 = vld [vmem:[#allocation8 + $0xa70] sm:$0xff]
        %v1395 = vld [vmem:[#allocation8 + $0xa78] sm:$0xff]
        %v1396 = vld [vmem:[#allocation8 + $0xa80] sm:$0xff]
        %v1397 = vld [vmem:[#allocation8 + $0xa88] sm:$0xff]
        %v1398 = vld [vmem:[#allocation8 + $0xa90] sm:$0xff]
        %v1399 = vld [vmem:[#allocation8 + $0xa98] sm:$0xff]
        %v1400 = vld [vmem:[#allocation8 + $0xaa0] sm:$0xff]
        %v1401 = vld [vmem:[#allocation8 + $0xaa8] sm:$0xff]
        %v1402 = vld [vmem:[#allocation8 + $0xab0] sm:$0xff]
        %v1403 = vld [vmem:[#allocation8 + $0xab8] sm:$0xff]
        %v1404 = vld [vmem:[#allocation8 + $0xac0] sm:$0xff]
        %v1405 = vld [vmem:[#allocation8 + $0xac8] sm:$0xff]
        %v1406 = vld [vmem:[#allocation8 + $0xad0] sm:$0xff]
        %v1407 = vld [vmem:[#allocation8 + $0xad8] sm:$0xff]
        %v1408 = vld [vmem:[#allocation8 + $0xae0] sm:$0xff]
        %v1409 = vld [vmem:[#allocation8 + $0xae8] sm:$0xff]
        %v1410 = vld [vmem:[#allocation8 + $0xaf0] sm:$0xff]
        %v1411 = vld [vmem:[#allocation8 + $0xaf8] sm:$0xff]
        %v1412 = vld [vmem:[#allocation8 + $0xb00] sm:$0xff]
        %v1413 = vld [vmem:[#allocation8 + $0xb08] sm:$0xff]
        %v1414 = vld [vmem:[#allocation8 + $0xb10] sm:$0xff]
        %v1415 = vld [vmem:[#allocation8 + $0xb18] sm:$0xff]
        %v1416 = vld [vmem:[#allocation8 + $0xb20] sm:$0xff]
        %v1417 = vld [vmem:[#allocation8 + $0xb28] sm:$0xff]
        %v1418 = vld [vmem:[#allocation8 + $0xb30] sm:$0xff]
        %v1419 = vld [vmem:[#allocation8 + $0xb38] sm:$0xff]
        %v1420 = vld [vmem:[#allocation8 + $0xb40] sm:$0xff]
        %v1421 = vld [vmem:[#allocation8 + $0xb48] sm:$0xff]
        %v1422 = vld [vmem:[#allocation8 + $0xb50] sm:$0xff]
        %v1423 = vld [vmem:[#allocation8 + $0xb58] sm:$0xff]
        %v1424 = vld [vmem:[#allocation8 + $0xb60] sm:$0xff]
        %v1425 = vld [vmem:[#allocation8 + $0xb68] sm:$0xff]
        %v1426 = vld [vmem:[#allocation8 + $0xb70] sm:$0xff]
        %v1427 = vld [vmem:[#allocation8 + $0xb78] sm:$0xff]
        %v1428 = vld [vmem:[#allocation8 + $0xb80] sm:$0xff]
        %v1429 = vld [vmem:[#allocation8 + $0xb88] sm:$0xff]
        %v1430 = vld [vmem:[#allocation8 + $0xb90] sm:$0xff]
        %v1431 = vld [vmem:[#allocation8 + $0xb98] sm:$0xff]
        %v1432 = vld [vmem:[#allocation8 + $0xba0] sm:$0xff]
        %v1433 = vld [vmem:[#allocation8 + $0xba8] sm:$0xff]
        %v1434 = vld [vmem:[#allocation8 + $0xbb0] sm:$0xff]
        %v1435 = vld [vmem:[#allocation8 + $0xbb8] sm:$0xff]
        %v1436 = vld [vmem:[#allocation8 + $0xbc0] sm:$0xff]
        %v1437 = vld [vmem:[#allocation8 + $0xbc8] sm:$0xff]
        %v1438 = vld [vmem:[#allocation8 + $0xbd0] sm:$0xff]
        %v1439 = vld [vmem:[#allocation8 + $0xbd8] sm:$0xff]
        %v1440 = vld [vmem:[#allocation8 + $0xbe0] sm:$0xff]
        %v1441 = vld [vmem:[#allocation8 + $0xbe8] sm:$0xff]
        %v1442 = vld [vmem:[#allocation8 + $0xbf0] sm:$0xff]
        %v1443 = vld [vmem:[#allocation8 + $0xbf8] sm:$0xff]
        %v1444 = vld [vmem:[#allocation10] sm:$0xff]
        %v1445 = vld [vmem:[#allocation10 + $0x8] sm:$0xf]
        %v1448 = vlaneseq
        %v1449 = vshrl.u32 %v1448, 7
        %v1450 = vsub.s32 0, %v1449
        %v1451 = vrot.slane %v1444, %v1450
        %v1452 = vlaneseq
        %v1453 = vshrl.u32 %v1452, 7
        %v1454 = vsub.s32 1, %v1453
        %v1455 = vrot.slane %v1444, %v1454
        %v1456 = vlaneseq
        %v1457 = vshrl.u32 %v1456, 7
        %v1458 = vsub.s32 2, %v1457
        %v1459 = vrot.slane %v1444, %v1458
        %v1460 = vlaneseq
        %v1461 = vshrl.u32 %v1460, 7
        %v1462 = vsub.s32 3, %v1461
        %v1463 = vrot.slane %v1444, %v1462
        %v1464 = vlaneseq
        %v1465 = vshrl.u32 %v1464, 7
        %v1466 = vsub.s32 4, %v1465
        %v1467 = vrot.slane %v1444, %v1466
        %v1468 = vlaneseq
        %v1469 = vshrl.u32 %v1468, 7
        %v1470 = vsub.s32 5, %v1469
        %v1471 = vrot.slane %v1444, %v1470
        %v1472 = vlaneseq
        %v1473 = vshrl.u32 %v1472, 7
        %v1474 = vsub.s32 6, %v1473
        %v1475 = vrot.slane %v1444, %v1474
        %v1476 = vlaneseq
        %v1477 = vshrl.u32 %v1476, 7
        %v1478 = vsub.s32 7, %v1477
        %v1479 = vrot.slane %v1444, %v1478
        %v1480 = vlaneseq
        %v1481 = vshrl.u32 %v1480, 7
        %v1482 = vsub.s32 0, %v1481
        %v1483 = vrot.slane %v1445, %v1482
        %v1484 = vlaneseq
        %v1485 = vshrl.u32 %v1484, 7
        %v1486 = vsub.s32 1, %v1485
        %v1487 = vrot.slane %v1445, %v1486
        %v1488 = vlaneseq
        %v1489 = vshrl.u32 %v1488, 7
        %v1490 = vsub.s32 2, %v1489
        %v1491 = vrot.slane %v1445, %v1490
        %v1492 = vlaneseq
        %v1493 = vshrl.u32 %v1492, 7
        %v1494 = vsub.s32 3, %v1493
        %v1495 = vrot.slane %v1445, %v1494
        %v1892 = vunpack.c.l.b16 %v1060
        %v1893 = vunpack.c.h.b16 %v1060
        %v1894 = vunpack.c.l.b16 %v1061
        %v1895 = vunpack.c.h.b16 %v1061
        %v1896 = vunpack.c.l.b16 %v1062
        %v1897 = vunpack.c.h.b16 %v1062
        %v1898 = vunpack.c.l.b16 %v1063
        %v1899 = vunpack.c.h.b16 %v1063
        %v1900 = vunpack.c.l.b16 %v1064
        %v1901 = vunpack.c.h.b16 %v1064
        %v1902 = vunpack.c.l.b16 %v1065
        %v1903 = vunpack.c.h.b16 %v1065
        %v1904 = vunpack.c.l.b16 %v1066
        %v1905 = vunpack.c.h.b16 %v1066
        %v1906 = vunpack.c.l.b16 %v1067
        %v1907 = vunpack.c.h.b16 %v1067
        %v1908 = vunpack.c.l.b16 %v1068
        %v1909 = vunpack.c.h.b16 %v1068
        %v1910 = vunpack.c.l.b16 %v1069
        %v1911 = vunpack.c.h.b16 %v1069
        %v1912 = vunpack.c.l.b16 %v1070
        %v1913 = vunpack.c.h.b16 %v1070
        %v1914 = vunpack.c.l.b16 %v1071
        %v1915 = vunpack.c.h.b16 %v1071
        %v1916 = vunpack.c.l.b16 %v1072
        %v1917 = vunpack.c.h.b16 %v1072
        %v1918 = vunpack.c.l.b16 %v1073
        %v1919 = vunpack.c.h.b16 %v1073
        %v1920 = vunpack.c.l.b16 %v1074
        %v1921 = vunpack.c.h.b16 %v1074
        %v1922 = vunpack.c.l.b16 %v1075
        %v1923 = vunpack.c.h.b16 %v1075
        %v1924 = vunpack.c.l.b16 %v1076
        %v1925 = vunpack.c.h.b16 %v1076
        %v1926 = vunpack.c.l.b16 %v1077
        %v1927 = vunpack.c.h.b16 %v1077
        %v1928 = vunpack.c.l.b16 %v1078
        %v1929 = vunpack.c.h.b16 %v1078
        %v1930 = vunpack.c.l.b16 %v1079
        %v1931 = vunpack.c.h.b16 %v1079
        %v1932 = vunpack.c.l.b16 %v1080
        %v1933 = vunpack.c.h.b16 %v1080
        %v1934 = vunpack.c.l.b16 %v1081
        %v1935 = vunpack.c.h.b16 %v1081
        %v1936 = vunpack.c.l.b16 %v1082
        %v1937 = vunpack.c.h.b16 %v1082
        %v1938 = vunpack.c.l.b16 %v1083
        %v1939 = vunpack.c.h.b16 %v1083
        %v1940 = vunpack.c.l.b16 %v1084
        %v1941 = vunpack.c.h.b16 %v1084
        %v1942 = vunpack.c.l.b16 %v1085
        %v1943 = vunpack.c.h.b16 %v1085
        %v1944 = vunpack.c.l.b16 %v1086
        %v1945 = vunpack.c.h.b16 %v1086
        %v1946 = vunpack.c.l.b16 %v1087
        %v1947 = vunpack.c.h.b16 %v1087
        %v1948 = vunpack.c.l.b16 %v1088
        %v1949 = vunpack.c.h.b16 %v1088
        %v1950 = vunpack.c.l.b16 %v1089
        %v1951 = vunpack.c.h.b16 %v1089
        %v1952 = vunpack.c.l.b16 %v1090
        %v1953 = vunpack.c.h.b16 %v1090
        %v1954 = vunpack.c.l.b16 %v1091
        %v1955 = vunpack.c.h.b16 %v1091
        %v1956 = vunpack.c.l.b16 %v1092
        %v1957 = vunpack.c.h.b16 %v1092
        %v1958 = vunpack.c.l.b16 %v1093
        %v1959 = vunpack.c.h.b16 %v1093
        %v1960 = vunpack.c.l.b16 %v1094
        %v1961 = vunpack.c.h.b16 %v1094
        %v1962 = vunpack.c.l.b16 %v1095
        %v1963 = vunpack.c.h.b16 %v1095
        %v1964 = vunpack.c.l.b16 %v1096
        %v1965 = vunpack.c.h.b16 %v1096
        %v1966 = vunpack.c.l.b16 %v1097
        %v1967 = vunpack.c.h.b16 %v1097
        %v1968 = vunpack.c.l.b16 %v1098
        %v1969 = vunpack.c.h.b16 %v1098
        %v1970 = vunpack.c.l.b16 %v1099
        %v1971 = vunpack.c.h.b16 %v1099
        %v1972 = vunpack.c.l.b16 %v1100
        %v1973 = vunpack.c.h.b16 %v1100
        %v1974 = vunpack.c.l.b16 %v1101
        %v1975 = vunpack.c.h.b16 %v1101
        %v1976 = vunpack.c.l.b16 %v1102
        %v1977 = vunpack.c.h.b16 %v1102
        %v1978 = vunpack.c.l.b16 %v1103
        %v1979 = vunpack.c.h.b16 %v1103
        %v1980 = vunpack.c.l.b16 %v1104
        %v1981 = vunpack.c.h.b16 %v1104
        %v1982 = vunpack.c.l.b16 %v1105
        %v1983 = vunpack.c.h.b16 %v1105
        %v1984 = vunpack.c.l.b16 %v1106
        %v1985 = vunpack.c.h.b16 %v1106
        %v1986 = vunpack.c.l.b16 %v1107
        %v1987 = vunpack.c.h.b16 %v1107
        %v1988 = vunpack.c.l.b16 %v1108
        %v1989 = vunpack.c.h.b16 %v1108
        %v1990 = vunpack.c.l.b16 %v1109
        %v1991 = vunpack.c.h.b16 %v1109
        %v1992 = vunpack.c.l.b16 %v1110
        %v1993 = vunpack.c.h.b16 %v1110
        %v1994 = vunpack.c.l.b16 %v1111
        %v1995 = vunpack.c.h.b16 %v1111
        %v1996 = vunpack.c.l.b16 %v1112
        %v1997 = vunpack.c.h.b16 %v1112
        %v1998 = vunpack.c.l.b16 %v1113
        %v1999 = vunpack.c.h.b16 %v1113
        %v2000 = vunpack.c.l.b16 %v1114
        %v2001 = vunpack.c.h.b16 %v1114
        %v2002 = vunpack.c.l.b16 %v1115
        %v2003 = vunpack.c.h.b16 %v1115
        %v2004 = vunpack.c.l.b16 %v1116
        %v2005 = vunpack.c.h.b16 %v1116
        %v2006 = vunpack.c.l.b16 %v1117
        %v2007 = vunpack.c.h.b16 %v1117
        %v2008 = vunpack.c.l.b16 %v1118
        %v2009 = vunpack.c.h.b16 %v1118
        %v2010 = vunpack.c.l.b16 %v1119
        %v2011 = vunpack.c.h.b16 %v1119
        %v2012 = vunpack.c.l.b16 %v1120
        %v2013 = vunpack.c.h.b16 %v1120
        %v2014 = vunpack.c.l.b16 %v1121
        %v2015 = vunpack.c.h.b16 %v1121
        %v2016 = vunpack.c.l.b16 %v1122
        %v2017 = vunpack.c.h.b16 %v1122
        %v2018 = vunpack.c.l.b16 %v1123
        %v2019 = vunpack.c.h.b16 %v1123
        %v2020 = vunpack.c.l.b16 %v1124
        %v2021 = vunpack.c.h.b16 %v1124
        %v2022 = vunpack.c.l.b16 %v1125
        %v2023 = vunpack.c.h.b16 %v1125
        %v2024 = vunpack.c.l.b16 %v1126
        %v2025 = vunpack.c.h.b16 %v1126
        %v2026 = vunpack.c.l.b16 %v1127
        %v2027 = vunpack.c.h.b16 %v1127
        %v2028 = vunpack.c.l.b16 %v1128
        %v2029 = vunpack.c.h.b16 %v1128
        %v2030 = vunpack.c.l.b16 %v1129
        %v2031 = vunpack.c.h.b16 %v1129
        %v2032 = vunpack.c.l.b16 %v1130
        %v2033 = vunpack.c.h.b16 %v1130
        %v2034 = vunpack.c.l.b16 %v1131
        %v2035 = vunpack.c.h.b16 %v1131
        %v2036 = vunpack.c.l.b16 %v1132
        %v2037 = vunpack.c.h.b16 %v1132
        %v2038 = vunpack.c.l.b16 %v1133
        %v2039 = vunpack.c.h.b16 %v1133
        %v2040 = vunpack.c.l.b16 %v1134
        %v2041 = vunpack.c.h.b16 %v1134
        %v2042 = vunpack.c.l.b16 %v1135
        %v2043 = vunpack.c.h.b16 %v1135
        %v2044 = vunpack.c.l.b16 %v1136
        %v2045 = vunpack.c.h.b16 %v1136
        %v2046 = vunpack.c.l.b16 %v1137
        %v2047 = vunpack.c.h.b16 %v1137
        %v2048 = vunpack.c.l.b16 %v1138
        %v2049 = vunpack.c.h.b16 %v1138
        %v2050 = vunpack.c.l.b16 %v1139
        %v2051 = vunpack.c.h.b16 %v1139
        %v2052 = vunpack.c.l.b16 %v1140
        %v2053 = vunpack.c.h.b16 %v1140
        %v2054 = vunpack.c.l.b16 %v1141
        %v2055 = vunpack.c.h.b16 %v1141
        %v2056 = vunpack.c.l.b16 %v1142
        %v2057 = vunpack.c.h.b16 %v1142
        %v2058 = vunpack.c.l.b16 %v1143
        %v2059 = vunpack.c.h.b16 %v1143
        %v2060 = vunpack.c.l.b16 %v1144
        %v2061 = vunpack.c.h.b16 %v1144
        %v2062 = vunpack.c.l.b16 %v1145
        %v2063 = vunpack.c.h.b16 %v1145
        %v2064 = vunpack.c.l.b16 %v1146
        %v2065 = vunpack.c.h.b16 %v1146
        %v2066 = vunpack.c.l.b16 %v1147
        %v2067 = vunpack.c.h.b16 %v1147
        %v2068 = vunpack.c.l.b16 %v1148
        %v2069 = vunpack.c.h.b16 %v1148
        %v2070 = vunpack.c.l.b16 %v1149
        %v2071 = vunpack.c.h.b16 %v1149
        %v2072 = vunpack.c.l.b16 %v1150
        %v2073 = vunpack.c.h.b16 %v1150
        %v2074 = vunpack.c.l.b16 %v1151
        %v2075 = vunpack.c.h.b16 %v1151
        %v2076 = vunpack.c.l.b16 %v1152
        %v2077 = vunpack.c.h.b16 %v1152
        %v2078 = vunpack.c.l.b16 %v1153
        %v2079 = vunpack.c.h.b16 %v1153
        %v2080 = vunpack.c.l.b16 %v1154
        %v2081 = vunpack.c.h.b16 %v1154
        %v2082 = vunpack.c.l.b16 %v1155
        %v2083 = vunpack.c.h.b16 %v1155
        %v2084 = vunpack.c.l.b16 %v1156
        %v2085 = vunpack.c.h.b16 %v1156
        %v2086 = vunpack.c.l.b16 %v1157
        %v2087 = vunpack.c.h.b16 %v1157
        %v2088 = vunpack.c.l.b16 %v1158
        %v2089 = vunpack.c.h.b16 %v1158
        %v2090 = vunpack.c.l.b16 %v1159
        %v2091 = vunpack.c.h.b16 %v1159
        %v2092 = vunpack.c.l.b16 %v1160
        %v2093 = vunpack.c.h.b16 %v1160
        %v2094 = vunpack.c.l.b16 %v1161
        %v2095 = vunpack.c.h.b16 %v1161
        %v2096 = vunpack.c.l.b16 %v1162
        %v2097 = vunpack.c.h.b16 %v1162
        %v2098 = vunpack.c.l.b16 %v1163
        %v2099 = vunpack.c.h.b16 %v1163
        %v2100 = vunpack.c.l.b16 %v1164
        %v2101 = vunpack.c.h.b16 %v1164
        %v2102 = vunpack.c.l.b16 %v1165
        %v2103 = vunpack.c.h.b16 %v1165
        %v2104 = vunpack.c.l.b16 %v1166
        %v2105 = vunpack.c.h.b16 %v1166
        %v2106 = vunpack.c.l.b16 %v1167
        %v2107 = vunpack.c.h.b16 %v1167
        %v2108 = vunpack.c.l.b16 %v1168
        %v2109 = vunpack.c.h.b16 %v1168
        %v2110 = vunpack.c.l.b16 %v1169
        %v2111 = vunpack.c.h.b16 %v1169
        %v2112 = vunpack.c.l.b16 %v1170
        %v2113 = vunpack.c.h.b16 %v1170
        %v2114 = vunpack.c.l.b16 %v1171
        %v2115 = vunpack.c.h.b16 %v1171
        %v2116 = vunpack.c.l.b16 %v1172
        %v2117 = vunpack.c.h.b16 %v1172
        %v2118 = vunpack.c.l.b16 %v1173
        %v2119 = vunpack.c.h.b16 %v1173
        %v2120 = vunpack.c.l.b16 %v1174
        %v2121 = vunpack.c.h.b16 %v1174
        %v2122 = vunpack.c.l.b16 %v1175
        %v2123 = vunpack.c.h.b16 %v1175
        %v2124 = vunpack.c.l.b16 %v1176
        %v2125 = vunpack.c.h.b16 %v1176
        %v2126 = vunpack.c.l.b16 %v1177
        %v2127 = vunpack.c.h.b16 %v1177
        %v2128 = vunpack.c.l.b16 %v1178
        %v2129 = vunpack.c.h.b16 %v1178
        %v2130 = vunpack.c.l.b16 %v1179
        %v2131 = vunpack.c.h.b16 %v1179
        %v2132 = vunpack.c.l.b16 %v1180
        %v2133 = vunpack.c.h.b16 %v1180
        %v2134 = vunpack.c.l.b16 %v1181
        %v2135 = vunpack.c.h.b16 %v1181
        %v2136 = vunpack.c.l.b16 %v1182
        %v2137 = vunpack.c.h.b16 %v1182
        %v2138 = vunpack.c.l.b16 %v1183
        %v2139 = vunpack.c.h.b16 %v1183
        %v2140 = vunpack.c.l.b16 %v1184
        %v2141 = vunpack.c.h.b16 %v1184
        %v2142 = vunpack.c.l.b16 %v1185
        %v2143 = vunpack.c.h.b16 %v1185
        %v2144 = vunpack.c.l.b16 %v1186
        %v2145 = vunpack.c.h.b16 %v1186
        %v2146 = vunpack.c.l.b16 %v1187
        %v2147 = vunpack.c.h.b16 %v1187
        %v2148 = vunpack.c.l.b16 %v1188
        %v2149 = vunpack.c.h.b16 %v1188
        %v2150 = vunpack.c.l.b16 %v1189
        %v2151 = vunpack.c.h.b16 %v1189
        %v2152 = vunpack.c.l.b16 %v1190
        %v2153 = vunpack.c.h.b16 %v1190
        %v2154 = vunpack.c.l.b16 %v1191
        %v2155 = vunpack.c.h.b16 %v1191
        %v2156 = vunpack.c.l.b16 %v1192
        %v2157 = vunpack.c.h.b16 %v1192
        %v2158 = vunpack.c.l.b16 %v1193
        %v2159 = vunpack.c.h.b16 %v1193
        %v2160 = vunpack.c.l.b16 %v1194
        %v2161 = vunpack.c.h.b16 %v1194
        %v2162 = vunpack.c.l.b16 %v1195
        %v2163 = vunpack.c.h.b16 %v1195
        %v2164 = vunpack.c.l.b16 %v1196
        %v2165 = vunpack.c.h.b16 %v1196
        %v2166 = vunpack.c.l.b16 %v1197
        %v2167 = vunpack.c.h.b16 %v1197
        %v2168 = vunpack.c.l.b16 %v1198
        %v2169 = vunpack.c.h.b16 %v1198
        %v2170 = vunpack.c.l.b16 %v1199
        %v2171 = vunpack.c.h.b16 %v1199
        %v2172 = vunpack.c.l.b16 %v1200
        %v2173 = vunpack.c.h.b16 %v1200
        %v2174 = vunpack.c.l.b16 %v1201
        %v2175 = vunpack.c.h.b16 %v1201
        %v2176 = vunpack.c.l.b16 %v1202
        %v2177 = vunpack.c.h.b16 %v1202
        %v2178 = vunpack.c.l.b16 %v1203
        %v2179 = vunpack.c.h.b16 %v1203
        %v2180 = vunpack.c.l.b16 %v1204
        %v2181 = vunpack.c.h.b16 %v1204
        %v2182 = vunpack.c.l.b16 %v1205
        %v2183 = vunpack.c.h.b16 %v1205
        %v2184 = vunpack.c.l.b16 %v1206
        %v2185 = vunpack.c.h.b16 %v1206
        %v2186 = vunpack.c.l.b16 %v1207
        %v2187 = vunpack.c.h.b16 %v1207
        %v2188 = vunpack.c.l.b16 %v1208
        %v2189 = vunpack.c.h.b16 %v1208
        %v2190 = vunpack.c.l.b16 %v1209
        %v2191 = vunpack.c.h.b16 %v1209
        %v2192 = vunpack.c.l.b16 %v1210
        %v2193 = vunpack.c.h.b16 %v1210
        %v2194 = vunpack.c.l.b16 %v1211
        %v2195 = vunpack.c.h.b16 %v1211
        %v2196 = vunpack.c.l.b16 %v1212
        %v2197 = vunpack.c.h.b16 %v1212
        %v2198 = vunpack.c.l.b16 %v1213
        %v2199 = vunpack.c.h.b16 %v1213
        %v2200 = vunpack.c.l.b16 %v1214
        %v2201 = vunpack.c.h.b16 %v1214
        %v2202 = vunpack.c.l.b16 %v1215
        %v2203 = vunpack.c.h.b16 %v1215
        %v2204 = vunpack.c.l.b16 %v1216
        %v2205 = vunpack.c.h.b16 %v1216
        %v2206 = vunpack.c.l.b16 %v1217
        %v2207 = vunpack.c.h.b16 %v1217
        %v2208 = vunpack.c.l.b16 %v1218
        %v2209 = vunpack.c.h.b16 %v1218
        %v2210 = vunpack.c.l.b16 %v1219
        %v2211 = vunpack.c.h.b16 %v1219
        %v2212 = vunpack.c.l.b16 %v1220
        %v2213 = vunpack.c.h.b16 %v1220
        %v2214 = vunpack.c.l.b16 %v1221
        %v2215 = vunpack.c.h.b16 %v1221
        %v2216 = vunpack.c.l.b16 %v1222
        %v2217 = vunpack.c.h.b16 %v1222
        %v2218 = vunpack.c.l.b16 %v1223
        %v2219 = vunpack.c.h.b16 %v1223
        %v2220 = vunpack.c.l.b16 %v1224
        %v2221 = vunpack.c.h.b16 %v1224
        %v2222 = vunpack.c.l.b16 %v1225
        %v2223 = vunpack.c.h.b16 %v1225
        %v2224 = vunpack.c.l.b16 %v1226
        %v2225 = vunpack.c.h.b16 %v1226
        %v2226 = vunpack.c.l.b16 %v1227
        %v2227 = vunpack.c.h.b16 %v1227
        %v2228 = vunpack.c.l.b16 %v1228
        %v2229 = vunpack.c.h.b16 %v1228
        %v2230 = vunpack.c.l.b16 %v1229
        %v2231 = vunpack.c.h.b16 %v1229
        %v2232 = vunpack.c.l.b16 %v1230
        %v2233 = vunpack.c.h.b16 %v1230
        %v2234 = vunpack.c.l.b16 %v1231
        %v2235 = vunpack.c.h.b16 %v1231
        %v2236 = vunpack.c.l.b16 %v1232
        %v2237 = vunpack.c.h.b16 %v1232
        %v2238 = vunpack.c.l.b16 %v1233
        %v2239 = vunpack.c.h.b16 %v1233
        %v2240 = vunpack.c.l.b16 %v1234
        %v2241 = vunpack.c.h.b16 %v1234
        %v2242 = vunpack.c.l.b16 %v1235
        %v2243 = vunpack.c.h.b16 %v1235
        %v2244 = vunpack.c.l.b16 %v1236
        %v2245 = vunpack.c.h.b16 %v1236
        %v2246 = vunpack.c.l.b16 %v1237
        %v2247 = vunpack.c.h.b16 %v1237
        %v2248 = vunpack.c.l.b16 %v1238
        %v2249 = vunpack.c.h.b16 %v1238
        %v2250 = vunpack.c.l.b16 %v1239
        %v2251 = vunpack.c.h.b16 %v1239
        %v2252 = vunpack.c.l.b16 %v1240
        %v2253 = vunpack.c.h.b16 %v1240
        %v2254 = vunpack.c.l.b16 %v1241
        %v2255 = vunpack.c.h.b16 %v1241
        %v2256 = vunpack.c.l.b16 %v1242
        %v2257 = vunpack.c.h.b16 %v1242
        %v2258 = vunpack.c.l.b16 %v1243
        %v2259 = vunpack.c.h.b16 %v1243
        %v2260 = vunpack.c.l.b16 %v1244
        %v2261 = vunpack.c.h.b16 %v1244
        %v2262 = vunpack.c.l.b16 %v1245
        %v2263 = vunpack.c.h.b16 %v1245
        %v2264 = vunpack.c.l.b16 %v1246
        %v2265 = vunpack.c.h.b16 %v1246
        %v2266 = vunpack.c.l.b16 %v1247
        %v2267 = vunpack.c.h.b16 %v1247
        %v2268 = vunpack.c.l.b16 %v1248
        %v2269 = vunpack.c.h.b16 %v1248
        %v2270 = vunpack.c.l.b16 %v1249
        %v2271 = vunpack.c.h.b16 %v1249
        %v2272 = vunpack.c.l.b16 %v1250
        %v2273 = vunpack.c.h.b16 %v1250
        %v2274 = vunpack.c.l.b16 %v1251
        %v2275 = vunpack.c.h.b16 %v1251
        %v2276 = vunpack.c.l.b16 %v1252
        %v2277 = vunpack.c.h.b16 %v1252
        %v2278 = vunpack.c.l.b16 %v1253
        %v2279 = vunpack.c.h.b16 %v1253
        %v2280 = vunpack.c.l.b16 %v1254
        %v2281 = vunpack.c.h.b16 %v1254
        %v2282 = vunpack.c.l.b16 %v1255
        %v2283 = vunpack.c.h.b16 %v1255
        %v2284 = vunpack.c.l.b16 %v1256
        %v2285 = vunpack.c.h.b16 %v1256
        %v2286 = vunpack.c.l.b16 %v1257
        %v2287 = vunpack.c.h.b16 %v1257
        %v2288 = vunpack.c.l.b16 %v1258
        %v2289 = vunpack.c.h.b16 %v1258
        %v2290 = vunpack.c.l.b16 %v1259
        %v2291 = vunpack.c.h.b16 %v1259
        %v2292 = vunpack.c.l.b16 %v1260
        %v2293 = vunpack.c.h.b16 %v1260
        %v2294 = vunpack.c.l.b16 %v1261
        %v2295 = vunpack.c.h.b16 %v1261
        %v2296 = vunpack.c.l.b16 %v1262
        %v2297 = vunpack.c.h.b16 %v1262
        %v2298 = vunpack.c.l.b16 %v1263
        %v2299 = vunpack.c.h.b16 %v1263
        %v2300 = vunpack.c.l.b16 %v1264
        %v2301 = vunpack.c.h.b16 %v1264
        %v2302 = vunpack.c.l.b16 %v1265
        %v2303 = vunpack.c.h.b16 %v1265
        %v2304 = vunpack.c.l.b16 %v1266
        %v2305 = vunpack.c.h.b16 %v1266
        %v2306 = vunpack.c.l.b16 %v1267
        %v2307 = vunpack.c.h.b16 %v1267
        %v2308 = vunpack.c.l.b16 %v1268
        %v2309 = vunpack.c.h.b16 %v1268
        %v2310 = vunpack.c.l.b16 %v1269
        %v2311 = vunpack.c.h.b16 %v1269
        %v2312 = vunpack.c.l.b16 %v1270
        %v2313 = vunpack.c.h.b16 %v1270
        %v2314 = vunpack.c.l.b16 %v1271
        %v2315 = vunpack.c.h.b16 %v1271
        %v2316 = vunpack.c.l.b16 %v1272
        %v2317 = vunpack.c.h.b16 %v1272
        %v2318 = vunpack.c.l.b16 %v1273
        %v2319 = vunpack.c.h.b16 %v1273
        %v2320 = vunpack.c.l.b16 %v1274
        %v2321 = vunpack.c.h.b16 %v1274
        %v2322 = vunpack.c.l.b16 %v1275
        %v2323 = vunpack.c.h.b16 %v1275
        %v2324 = vunpack.c.l.b16 %v1276
        %v2325 = vunpack.c.h.b16 %v1276
        %v2326 = vunpack.c.l.b16 %v1277
        %v2327 = vunpack.c.h.b16 %v1277
        %v2328 = vunpack.c.l.b16 %v1278
        %v2329 = vunpack.c.h.b16 %v1278
        %v2330 = vunpack.c.l.b16 %v1279
        %v2331 = vunpack.c.h.b16 %v1279
        %v2332 = vunpack.c.l.b16 %v1280
        %v2333 = vunpack.c.h.b16 %v1280
        %v2334 = vunpack.c.l.b16 %v1281
        %v2335 = vunpack.c.h.b16 %v1281
        %v2336 = vunpack.c.l.b16 %v1282
        %v2337 = vunpack.c.h.b16 %v1282
        %v2338 = vunpack.c.l.b16 %v1283
        %v2339 = vunpack.c.h.b16 %v1283
        %v2340 = vunpack.c.l.b16 %v1284
        %v2341 = vunpack.c.h.b16 %v1284
        %v2342 = vunpack.c.l.b16 %v1285
        %v2343 = vunpack.c.h.b16 %v1285
        %v2344 = vunpack.c.l.b16 %v1286
        %v2345 = vunpack.c.h.b16 %v1286
        %v2346 = vunpack.c.l.b16 %v1287
        %v2347 = vunpack.c.h.b16 %v1287
        %v2348 = vunpack.c.l.b16 %v1288
        %v2349 = vunpack.c.h.b16 %v1288
        %v2350 = vunpack.c.l.b16 %v1289
        %v2351 = vunpack.c.h.b16 %v1289
        %v2352 = vunpack.c.l.b16 %v1290
        %v2353 = vunpack.c.h.b16 %v1290
        %v2354 = vunpack.c.l.b16 %v1291
        %v2355 = vunpack.c.h.b16 %v1291
        %v2356 = vunpack.c.l.b16 %v1292
        %v2357 = vunpack.c.h.b16 %v1292
        %v2358 = vunpack.c.l.b16 %v1293
        %v2359 = vunpack.c.h.b16 %v1293
        %v2360 = vunpack.c.l.b16 %v1294
        %v2361 = vunpack.c.h.b16 %v1294
        %v2362 = vunpack.c.l.b16 %v1295
        %v2363 = vunpack.c.h.b16 %v1295
        %v2364 = vunpack.c.l.b16 %v1296
        %v2365 = vunpack.c.h.b16 %v1296
        %v2366 = vunpack.c.l.b16 %v1297
        %v2367 = vunpack.c.h.b16 %v1297
        %v2368 = vunpack.c.l.b16 %v1298
        %v2369 = vunpack.c.h.b16 %v1298
        %v2370 = vunpack.c.l.b16 %v1299
        %v2371 = vunpack.c.h.b16 %v1299
        %v2372 = vunpack.c.l.b16 %v1300
        %v2373 = vunpack.c.h.b16 %v1300
        %v2374 = vunpack.c.l.b16 %v1301
        %v2375 = vunpack.c.h.b16 %v1301
        %v2376 = vunpack.c.l.b16 %v1302
        %v2377 = vunpack.c.h.b16 %v1302
        %v2378 = vunpack.c.l.b16 %v1303
        %v2379 = vunpack.c.h.b16 %v1303
        %v2380 = vunpack.c.l.b16 %v1304
        %v2381 = vunpack.c.h.b16 %v1304
        %v2382 = vunpack.c.l.b16 %v1305
        %v2383 = vunpack.c.h.b16 %v1305
        %v2384 = vunpack.c.l.b16 %v1306
        %v2385 = vunpack.c.h.b16 %v1306
        %v2386 = vunpack.c.l.b16 %v1307
        %v2387 = vunpack.c.h.b16 %v1307
        %v2388 = vunpack.c.l.b16 %v1308
        %v2389 = vunpack.c.h.b16 %v1308
        %v2390 = vunpack.c.l.b16 %v1309
        %v2391 = vunpack.c.h.b16 %v1309
        %v2392 = vunpack.c.l.b16 %v1310
        %v2393 = vunpack.c.h.b16 %v1310
        %v2394 = vunpack.c.l.b16 %v1311
        %v2395 = vunpack.c.h.b16 %v1311
        %v2396 = vunpack.c.l.b16 %v1312
        %v2397 = vunpack.c.h.b16 %v1312
        %v2398 = vunpack.c.l.b16 %v1313
        %v2399 = vunpack.c.h.b16 %v1313
        %v2400 = vunpack.c.l.b16 %v1314
        %v2401 = vunpack.c.h.b16 %v1314
        %v2402 = vunpack.c.l.b16 %v1315
        %v2403 = vunpack.c.h.b16 %v1315
        %v2404 = vunpack.c.l.b16 %v1316
        %v2405 = vunpack.c.h.b16 %v1316
        %v2406 = vunpack.c.l.b16 %v1317
        %v2407 = vunpack.c.h.b16 %v1317
        %v2408 = vunpack.c.l.b16 %v1318
        %v2409 = vunpack.c.h.b16 %v1318
        %v2410 = vunpack.c.l.b16 %v1319
        %v2411 = vunpack.c.h.b16 %v1319
        %v2412 = vunpack.c.l.b16 %v1320
        %v2413 = vunpack.c.h.b16 %v1320
        %v2414 = vunpack.c.l.b16 %v1321
        %v2415 = vunpack.c.h.b16 %v1321
        %v2416 = vunpack.c.l.b16 %v1322
        %v2417 = vunpack.c.h.b16 %v1322
        %v2418 = vunpack.c.l.b16 %v1323
        %v2419 = vunpack.c.h.b16 %v1323
        %v2420 = vunpack.c.l.b16 %v1324
        %v2421 = vunpack.c.h.b16 %v1324
        %v2422 = vunpack.c.l.b16 %v1325
        %v2423 = vunpack.c.h.b16 %v1325
        %v2424 = vunpack.c.l.b16 %v1326
        %v2425 = vunpack.c.h.b16 %v1326
        %v2426 = vunpack.c.l.b16 %v1327
        %v2427 = vunpack.c.h.b16 %v1327
        %v2428 = vunpack.c.l.b16 %v1328
        %v2429 = vunpack.c.h.b16 %v1328
        %v2430 = vunpack.c.l.b16 %v1329
        %v2431 = vunpack.c.h.b16 %v1329
        %v2432 = vunpack.c.l.b16 %v1330
        %v2433 = vunpack.c.h.b16 %v1330
        %v2434 = vunpack.c.l.b16 %v1331
        %v2435 = vunpack.c.h.b16 %v1331
        %v2436 = vunpack.c.l.b16 %v1332
        %v2437 = vunpack.c.h.b16 %v1332
        %v2438 = vunpack.c.l.b16 %v1333
        %v2439 = vunpack.c.h.b16 %v1333
        %v2440 = vunpack.c.l.b16 %v1334
        %v2441 = vunpack.c.h.b16 %v1334
        %v2442 = vunpack.c.l.b16 %v1335
        %v2443 = vunpack.c.h.b16 %v1335
        %v2444 = vunpack.c.l.b16 %v1336
        %v2445 = vunpack.c.h.b16 %v1336
        %v2446 = vunpack.c.l.b16 %v1337
        %v2447 = vunpack.c.h.b16 %v1337
        %v2448 = vunpack.c.l.b16 %v1338
        %v2449 = vunpack.c.h.b16 %v1338
        %v2450 = vunpack.c.l.b16 %v1339
        %v2451 = vunpack.c.h.b16 %v1339
        %v2452 = vunpack.c.l.b16 %v1340
        %v2453 = vunpack.c.h.b16 %v1340
        %v2454 = vunpack.c.l.b16 %v1341
        %v2455 = vunpack.c.h.b16 %v1341
        %v2456 = vunpack.c.l.b16 %v1342
        %v2457 = vunpack.c.h.b16 %v1342
        %v2458 = vunpack.c.l.b16 %v1343
        %v2459 = vunpack.c.h.b16 %v1343
        %v2460 = vunpack.c.l.b16 %v1344
        %v2461 = vunpack.c.h.b16 %v1344
        %v2462 = vunpack.c.l.b16 %v1345
        %v2463 = vunpack.c.h.b16 %v1345
        %v2464 = vunpack.c.l.b16 %v1346
        %v2465 = vunpack.c.h.b16 %v1346
        %v2466 = vunpack.c.l.b16 %v1347
        %v2467 = vunpack.c.h.b16 %v1347
        %v2468 = vunpack.c.l.b16 %v1348
        %v2469 = vunpack.c.h.b16 %v1348
        %v2470 = vunpack.c.l.b16 %v1349
        %v2471 = vunpack.c.h.b16 %v1349
        %v2472 = vunpack.c.l.b16 %v1350
        %v2473 = vunpack.c.h.b16 %v1350
        %v2474 = vunpack.c.l.b16 %v1351
        %v2475 = vunpack.c.h.b16 %v1351
        %v2476 = vunpack.c.l.b16 %v1352
        %v2477 = vunpack.c.h.b16 %v1352
        %v2478 = vunpack.c.l.b16 %v1353
        %v2479 = vunpack.c.h.b16 %v1353
        %v2480 = vunpack.c.l.b16 %v1354
        %v2481 = vunpack.c.h.b16 %v1354
        %v2482 = vunpack.c.l.b16 %v1355
        %v2483 = vunpack.c.h.b16 %v1355
        %v2484 = vunpack.c.l.b16 %v1356
        %v2485 = vunpack.c.h.b16 %v1356
        %v2486 = vunpack.c.l.b16 %v1357
        %v2487 = vunpack.c.h.b16 %v1357
        %v2488 = vunpack.c.l.b16 %v1358
        %v2489 = vunpack.c.h.b16 %v1358
        %v2490 = vunpack.c.l.b16 %v1359
        %v2491 = vunpack.c.h.b16 %v1359
        %v2492 = vunpack.c.l.b16 %v1360
        %v2493 = vunpack.c.h.b16 %v1360
        %v2494 = vunpack.c.l.b16 %v1361
        %v2495 = vunpack.c.h.b16 %v1361
        %v2496 = vunpack.c.l.b16 %v1362
        %v2497 = vunpack.c.h.b16 %v1362
        %v2498 = vunpack.c.l.b16 %v1363
        %v2499 = vunpack.c.h.b16 %v1363
        %v2500 = vunpack.c.l.b16 %v1364
        %v2501 = vunpack.c.h.b16 %v1364
        %v2502 = vunpack.c.l.b16 %v1365
        %v2503 = vunpack.c.h.b16 %v1365
        %v2504 = vunpack.c.l.b16 %v1366
        %v2505 = vunpack.c.h.b16 %v1366
        %v2506 = vunpack.c.l.b16 %v1367
        %v2507 = vunpack.c.h.b16 %v1367
        %v2508 = vunpack.c.l.b16 %v1368
        %v2509 = vunpack.c.h.b16 %v1368
        %v2510 = vunpack.c.l.b16 %v1369
        %v2511 = vunpack.c.h.b16 %v1369
        %v2512 = vunpack.c.l.b16 %v1370
        %v2513 = vunpack.c.h.b16 %v1370
        %v2514 = vunpack.c.l.b16 %v1371
        %v2515 = vunpack.c.h.b16 %v1371
        %v2516 = vunpack.c.l.b16 %v1372
        %v2517 = vunpack.c.h.b16 %v1372
        %v2518 = vunpack.c.l.b16 %v1373
        %v2519 = vunpack.c.h.b16 %v1373
        %v2520 = vunpack.c.l.b16 %v1374
        %v2521 = vunpack.c.h.b16 %v1374
        %v2522 = vunpack.c.l.b16 %v1375
        %v2523 = vunpack.c.h.b16 %v1375
        %v2524 = vunpack.c.l.b16 %v1376
        %v2525 = vunpack.c.h.b16 %v1376
        %v2526 = vunpack.c.l.b16 %v1377
        %v2527 = vunpack.c.h.b16 %v1377
        %v2528 = vunpack.c.l.b16 %v1378
        %v2529 = vunpack.c.h.b16 %v1378
        %v2530 = vunpack.c.l.b16 %v1379
        %v2531 = vunpack.c.h.b16 %v1379
        %v2532 = vunpack.c.l.b16 %v1380
        %v2533 = vunpack.c.h.b16 %v1380
        %v2534 = vunpack.c.l.b16 %v1381
        %v2535 = vunpack.c.h.b16 %v1381
        %v2536 = vunpack.c.l.b16 %v1382
        %v2537 = vunpack.c.h.b16 %v1382
        %v2538 = vunpack.c.l.b16 %v1383
        %v2539 = vunpack.c.h.b16 %v1383
        %v2540 = vunpack.c.l.b16 %v1384
        %v2541 = vunpack.c.h.b16 %v1384
        %v2542 = vunpack.c.l.b16 %v1385
        %v2543 = vunpack.c.h.b16 %v1385
        %v2544 = vunpack.c.l.b16 %v1386
        %v2545 = vunpack.c.h.b16 %v1386
        %v2546 = vunpack.c.l.b16 %v1387
        %v2547 = vunpack.c.h.b16 %v1387
        %v2548 = vunpack.c.l.b16 %v1388
        %v2549 = vunpack.c.h.b16 %v1388
        %v2550 = vunpack.c.l.b16 %v1389
        %v2551 = vunpack.c.h.b16 %v1389
        %v2552 = vunpack.c.l.b16 %v1390
        %v2553 = vunpack.c.h.b16 %v1390
        %v2554 = vunpack.c.l.b16 %v1391
        %v2555 = vunpack.c.h.b16 %v1391
        %v2556 = vunpack.c.l.b16 %v1392
        %v2557 = vunpack.c.h.b16 %v1392
        %v2558 = vunpack.c.l.b16 %v1393
        %v2559 = vunpack.c.h.b16 %v1393
        %v2560 = vunpack.c.l.b16 %v1394
        %v2561 = vunpack.c.h.b16 %v1394
        %v2562 = vunpack.c.l.b16 %v1395
        %v2563 = vunpack.c.h.b16 %v1395
        %v2564 = vunpack.c.l.b16 %v1396
        %v2565 = vunpack.c.h.b16 %v1396
        %v2566 = vunpack.c.l.b16 %v1397
        %v2567 = vunpack.c.h.b16 %v1397
        %v2568 = vunpack.c.l.b16 %v1398
        %v2569 = vunpack.c.h.b16 %v1398
        %v2570 = vunpack.c.l.b16 %v1399
        %v2571 = vunpack.c.h.b16 %v1399
        %v2572 = vunpack.c.l.b16 %v1400
        %v2573 = vunpack.c.h.b16 %v1400
        %v2574 = vunpack.c.l.b16 %v1401
        %v2575 = vunpack.c.h.b16 %v1401
        %v2576 = vunpack.c.l.b16 %v1402
        %v2577 = vunpack.c.h.b16 %v1402
        %v2578 = vunpack.c.l.b16 %v1403
        %v2579 = vunpack.c.h.b16 %v1403
        %v2580 = vunpack.c.l.b16 %v1404
        %v2581 = vunpack.c.h.b16 %v1404
        %v2582 = vunpack.c.l.b16 %v1405
        %v2583 = vunpack.c.h.b16 %v1405
        %v2584 = vunpack.c.l.b16 %v1406
        %v2585 = vunpack.c.h.b16 %v1406
        %v2586 = vunpack.c.l.b16 %v1407
        %v2587 = vunpack.c.h.b16 %v1407
        %v2588 = vunpack.c.l.b16 %v1408
        %v2589 = vunpack.c.h.b16 %v1408
        %v2590 = vunpack.c.l.b16 %v1409
        %v2591 = vunpack.c.h.b16 %v1409
        %v2592 = vunpack.c.l.b16 %v1410
        %v2593 = vunpack.c.h.b16 %v1410
        %v2594 = vunpack.c.l.b16 %v1411
        %v2595 = vunpack.c.h.b16 %v1411
        %v2596 = vunpack.c.l.b16 %v1412
        %v2597 = vunpack.c.h.b16 %v1412
        %v2598 = vunpack.c.l.b16 %v1413
        %v2599 = vunpack.c.h.b16 %v1413
        %v2600 = vunpack.c.l.b16 %v1414
        %v2601 = vunpack.c.h.b16 %v1414
        %v2602 = vunpack.c.l.b16 %v1415
        %v2603 = vunpack.c.h.b16 %v1415
        %v2604 = vunpack.c.l.b16 %v1416
        %v2605 = vunpack.c.h.b16 %v1416
        %v2606 = vunpack.c.l.b16 %v1417
        %v2607 = vunpack.c.h.b16 %v1417
        %v2608 = vunpack.c.l.b16 %v1418
        %v2609 = vunpack.c.h.b16 %v1418
        %v2610 = vunpack.c.l.b16 %v1419
        %v2611 = vunpack.c.h.b16 %v1419
        %v2612 = vunpack.c.l.b16 %v1420
        %v2613 = vunpack.c.h.b16 %v1420
        %v2614 = vunpack.c.l.b16 %v1421
        %v2615 = vunpack.c.h.b16 %v1421
        %v2616 = vunpack.c.l.b16 %v1422
        %v2617 = vunpack.c.h.b16 %v1422
        %v2618 = vunpack.c.l.b16 %v1423
        %v2619 = vunpack.c.h.b16 %v1423
        %v2620 = vunpack.c.l.b16 %v1424
        %v2621 = vunpack.c.h.b16 %v1424
        %v2622 = vunpack.c.l.b16 %v1425
        %v2623 = vunpack.c.h.b16 %v1425
        %v2624 = vunpack.c.l.b16 %v1426
        %v2625 = vunpack.c.h.b16 %v1426
        %v2626 = vunpack.c.l.b16 %v1427
        %v2627 = vunpack.c.h.b16 %v1427
        %v2628 = vunpack.c.l.b16 %v1428
        %v2629 = vunpack.c.h.b16 %v1428
        %v2630 = vunpack.c.l.b16 %v1429
        %v2631 = vunpack.c.h.b16 %v1429
        %v2632 = vunpack.c.l.b16 %v1430
        %v2633 = vunpack.c.h.b16 %v1430
        %v2634 = vunpack.c.l.b16 %v1431
        %v2635 = vunpack.c.h.b16 %v1431
        %v2636 = vunpack.c.l.b16 %v1432
        %v2637 = vunpack.c.h.b16 %v1432
        %v2638 = vunpack.c.l.b16 %v1433
        %v2639 = vunpack.c.h.b16 %v1433
        %v2640 = vunpack.c.l.b16 %v1434
        %v2641 = vunpack.c.h.b16 %v1434
        %v2642 = vunpack.c.l.b16 %v1435
        %v2643 = vunpack.c.h.b16 %v1435
        %v2644 = vunpack.c.l.b16 %v1436
        %v2645 = vunpack.c.h.b16 %v1436
        %v2646 = vunpack.c.l.b16 %v1437
        %v2647 = vunpack.c.h.b16 %v1437
        %v2648 = vunpack.c.l.b16 %v1438
        %v2649 = vunpack.c.h.b16 %v1438
        %v2650 = vunpack.c.l.b16 %v1439
        %v2651 = vunpack.c.h.b16 %v1439
        %v2652 = vunpack.c.l.b16 %v1440
        %v2653 = vunpack.c.h.b16 %v1440
        %v2654 = vunpack.c.l.b16 %v1441
        %v2655 = vunpack.c.h.b16 %v1441
        %v2656 = vunpack.c.l.b16 %v1442
        %v2657 = vunpack.c.h.b16 %v1442
        %v2658 = vunpack.c.l.b16 %v1443
        %v2659 = vunpack.c.h.b16 %v1443
        %v2660 = vpack.c.b16 %v1904, %v1892
        %v2661 = vpack.c.b16 %v1905, %v1893
        %v2662 = vpack.c.b16 %v1906, %v1894
        %v2663 = vpack.c.b16 %v1907, %v1895
        %v2664 = vpack.c.b16 %v1908, %v1896
        %v2665 = vpack.c.b16 %v1909, %v1897
        %v2666 = vpack.c.b16 %v1910, %v1898
        %v2667 = vpack.c.b16 %v1911, %v1899
        %v2668 = vpack.c.b16 %v1912, %v1900
        %v2669 = vpack.c.b16 %v1913, %v1901
        %v2670 = vpack.c.b16 %v1914, %v1902
        %v2671 = vpack.c.b16 %v1915, %v1903
        %v2672 = vpack.c.b16 %v1928, %v1916
        %v2673 = vpack.c.b16 %v1929, %v1917
        %v2674 = vpack.c.b16 %v1930, %v1918
        %v2675 = vpack.c.b16 %v1931, %v1919
        %v2676 = vpack.c.b16 %v1932, %v1920
        %v2677 = vpack.c.b16 %v1933, %v1921
        %v2678 = vpack.c.b16 %v1934, %v1922
        %v2679 = vpack.c.b16 %v1935, %v1923
        %v2680 = vpack.c.b16 %v1936, %v1924
        %v2681 = vpack.c.b16 %v1937, %v1925
        %v2682 = vpack.c.b16 %v1938, %v1926
        %v2683 = vpack.c.b16 %v1939, %v1927
        %v2684 = vpack.c.b16 %v1952, %v1940
        %v2685 = vpack.c.b16 %v1953, %v1941
        %v2686 = vpack.c.b16 %v1954, %v1942
        %v2687 = vpack.c.b16 %v1955, %v1943
        %v2688 = vpack.c.b16 %v1956, %v1944
        %v2689 = vpack.c.b16 %v1957, %v1945
        %v2690 = vpack.c.b16 %v1958, %v1946
        %v2691 = vpack.c.b16 %v1959, %v1947
        %v2692 = vpack.c.b16 %v1960, %v1948
        %v2693 = vpack.c.b16 %v1961, %v1949
        %v2694 = vpack.c.b16 %v1962, %v1950
        %v2695 = vpack.c.b16 %v1963, %v1951
        %v2696 = vpack.c.b16 %v1976, %v1964
        %v2697 = vpack.c.b16 %v1977, %v1965
        %v2698 = vpack.c.b16 %v1978, %v1966
        %v2699 = vpack.c.b16 %v1979, %v1967
        %v2700 = vpack.c.b16 %v1980, %v1968
        %v2701 = vpack.c.b16 %v1981, %v1969
        %v2702 = vpack.c.b16 %v1982, %v1970
        %v2703 = vpack.c.b16 %v1983, %v1971
        %v2704 = vpack.c.b16 %v1984, %v1972
        %v2705 = vpack.c.b16 %v1985, %v1973
        %v2706 = vpack.c.b16 %v1986, %v1974
        %v2707 = vpack.c.b16 %v1987, %v1975
        %v2708 = vpack.c.b16 %v2000, %v1988
        %v2709 = vpack.c.b16 %v2001, %v1989
        %v2710 = vpack.c.b16 %v2002, %v1990
        %v2711 = vpack.c.b16 %v2003, %v1991
        %v2712 = vpack.c.b16 %v2004, %v1992
        %v2713 = vpack.c.b16 %v2005, %v1993
        %v2714 = vpack.c.b16 %v2006, %v1994
        %v2715 = vpack.c.b16 %v2007, %v1995
        %v2716 = vpack.c.b16 %v2008, %v1996
        %v2717 = vpack.c.b16 %v2009, %v1997
        %v2718 = vpack.c.b16 %v2010, %v1998
        %v2719 = vpack.c.b16 %v2011, %v1999
        %v2720 = vpack.c.b16 %v2024, %v2012
        %v2721 = vpack.c.b16 %v2025, %v2013
        %v2722 = vpack.c.b16 %v2026, %v2014
        %v2723 = vpack.c.b16 %v2027, %v2015
        %v2724 = vpack.c.b16 %v2028, %v2016
        %v2725 = vpack.c.b16 %v2029, %v2017
        %v2726 = vpack.c.b16 %v2030, %v2018
        %v2727 = vpack.c.b16 %v2031, %v2019
        %v2728 = vpack.c.b16 %v2032, %v2020
        %v2729 = vpack.c.b16 %v2033, %v2021
        %v2730 = vpack.c.b16 %v2034, %v2022
        %v2731 = vpack.c.b16 %v2035, %v2023
        %v2732 = vpack.c.b16 %v2048, %v2036
        %v2733 = vpack.c.b16 %v2049, %v2037
        %v2734 = vpack.c.b16 %v2050, %v2038
        %v2735 = vpack.c.b16 %v2051, %v2039
        %v2736 = vpack.c.b16 %v2052, %v2040
        %v2737 = vpack.c.b16 %v2053, %v2041
        %v2738 = vpack.c.b16 %v2054, %v2042
        %v2739 = vpack.c.b16 %v2055, %v2043
        %v2740 = vpack.c.b16 %v2056, %v2044
        %v2741 = vpack.c.b16 %v2057, %v2045
        %v2742 = vpack.c.b16 %v2058, %v2046
        %v2743 = vpack.c.b16 %v2059, %v2047
        %v2744 = vpack.c.b16 %v2072, %v2060
        %v2745 = vpack.c.b16 %v2073, %v2061
        %v2746 = vpack.c.b16 %v2074, %v2062
        %v2747 = vpack.c.b16 %v2075, %v2063
        %v2748 = vpack.c.b16 %v2076, %v2064
        %v2749 = vpack.c.b16 %v2077, %v2065
        %v2750 = vpack.c.b16 %v2078, %v2066
        %v2751 = vpack.c.b16 %v2079, %v2067
        %v2752 = vpack.c.b16 %v2080, %v2068
        %v2753 = vpack.c.b16 %v2081, %v2069
        %v2754 = vpack.c.b16 %v2082, %v2070
        %v2755 = vpack.c.b16 %v2083, %v2071
        %v2756 = vpack.c.b16 %v2096, %v2084
        %v2757 = vpack.c.b16 %v2097, %v2085
        %v2758 = vpack.c.b16 %v2098, %v2086
        %v2759 = vpack.c.b16 %v2099, %v2087
        %v2760 = vpack.c.b16 %v2100, %v2088
        %v2761 = vpack.c.b16 %v2101, %v2089
        %v2762 = vpack.c.b16 %v2102, %v2090
        %v2763 = vpack.c.b16 %v2103, %v2091
        %v2764 = vpack.c.b16 %v2104, %v2092
        %v2765 = vpack.c.b16 %v2105, %v2093
        %v2766 = vpack.c.b16 %v2106, %v2094
        %v2767 = vpack.c.b16 %v2107, %v2095
        %v2768 = vpack.c.b16 %v2120, %v2108
        %v2769 = vpack.c.b16 %v2121, %v2109
        %v2770 = vpack.c.b16 %v2122, %v2110
        %v2771 = vpack.c.b16 %v2123, %v2111
        %v2772 = vpack.c.b16 %v2124, %v2112
        %v2773 = vpack.c.b16 %v2125, %v2113
        %v2774 = vpack.c.b16 %v2126, %v2114
        %v2775 = vpack.c.b16 %v2127, %v2115
        %v2776 = vpack.c.b16 %v2128, %v2116
        %v2777 = vpack.c.b16 %v2129, %v2117
        %v2778 = vpack.c.b16 %v2130, %v2118
        %v2779 = vpack.c.b16 %v2131, %v2119
        %v2780 = vpack.c.b16 %v2144, %v2132
        %v2781 = vpack.c.b16 %v2145, %v2133
        %v2782 = vpack.c.b16 %v2146, %v2134
        %v2783 = vpack.c.b16 %v2147, %v2135
        %v2784 = vpack.c.b16 %v2148, %v2136
        %v2785 = vpack.c.b16 %v2149, %v2137
        %v2786 = vpack.c.b16 %v2150, %v2138
        %v2787 = vpack.c.b16 %v2151, %v2139
        %v2788 = vpack.c.b16 %v2152, %v2140
        %v2789 = vpack.c.b16 %v2153, %v2141
        %v2790 = vpack.c.b16 %v2154, %v2142
        %v2791 = vpack.c.b16 %v2155, %v2143
        %v2792 = vpack.c.b16 %v2168, %v2156
        %v2793 = vpack.c.b16 %v2169, %v2157
        %v2794 = vpack.c.b16 %v2170, %v2158
        %v2795 = vpack.c.b16 %v2171, %v2159
        %v2796 = vpack.c.b16 %v2172, %v2160
        %v2797 = vpack.c.b16 %v2173, %v2161
        %v2798 = vpack.c.b16 %v2174, %v2162
        %v2799 = vpack.c.b16 %v2175, %v2163
        %v2800 = vpack.c.b16 %v2176, %v2164
        %v2801 = vpack.c.b16 %v2177, %v2165
        %v2802 = vpack.c.b16 %v2178, %v2166
        %v2803 = vpack.c.b16 %v2179, %v2167
        %v2804 = vpack.c.b16 %v2192, %v2180
        %v2805 = vpack.c.b16 %v2193, %v2181
        %v2806 = vpack.c.b16 %v2194, %v2182
        %v2807 = vpack.c.b16 %v2195, %v2183
        %v2808 = vpack.c.b16 %v2196, %v2184
        %v2809 = vpack.c.b16 %v2197, %v2185
        %v2810 = vpack.c.b16 %v2198, %v2186
        %v2811 = vpack.c.b16 %v2199, %v2187
        %v2812 = vpack.c.b16 %v2200, %v2188
        %v2813 = vpack.c.b16 %v2201, %v2189
        %v2814 = vpack.c.b16 %v2202, %v2190
        %v2815 = vpack.c.b16 %v2203, %v2191
        %v2816 = vpack.c.b16 %v2216, %v2204
        %v2817 = vpack.c.b16 %v2217, %v2205
        %v2818 = vpack.c.b16 %v2218, %v2206
        %v2819 = vpack.c.b16 %v2219, %v2207
        %v2820 = vpack.c.b16 %v2220, %v2208
        %v2821 = vpack.c.b16 %v2221, %v2209
        %v2822 = vpack.c.b16 %v2222, %v2210
        %v2823 = vpack.c.b16 %v2223, %v2211
        %v2824 = vpack.c.b16 %v2224, %v2212
        %v2825 = vpack.c.b16 %v2225, %v2213
        %v2826 = vpack.c.b16 %v2226, %v2214
        %v2827 = vpack.c.b16 %v2227, %v2215
        %v2828 = vpack.c.b16 %v2240, %v2228
        %v2829 = vpack.c.b16 %v2241, %v2229
        %v2830 = vpack.c.b16 %v2242, %v2230
        %v2831 = vpack.c.b16 %v2243, %v2231
        %v2832 = vpack.c.b16 %v2244, %v2232
        %v2833 = vpack.c.b16 %v2245, %v2233
        %v2834 = vpack.c.b16 %v2246, %v2234
        %v2835 = vpack.c.b16 %v2247, %v2235
        %v2836 = vpack.c.b16 %v2248, %v2236
        %v2837 = vpack.c.b16 %v2249, %v2237
        %v2838 = vpack.c.b16 %v2250, %v2238
        %v2839 = vpack.c.b16 %v2251, %v2239
        %v2840 = vpack.c.b16 %v2264, %v2252
        %v2841 = vpack.c.b16 %v2265, %v2253
        %v2842 = vpack.c.b16 %v2266, %v2254
        %v2843 = vpack.c.b16 %v2267, %v2255
        %v2844 = vpack.c.b16 %v2268, %v2256
        %v2845 = vpack.c.b16 %v2269, %v2257
        %v2846 = vpack.c.b16 %v2270, %v2258
        %v2847 = vpack.c.b16 %v2271, %v2259
        %v2848 = vpack.c.b16 %v2272, %v2260
        %v2849 = vpack.c.b16 %v2273, %v2261
        %v2850 = vpack.c.b16 %v2274, %v2262
        %v2851 = vpack.c.b16 %v2275, %v2263
        %v2852 = vpack.c.b16 %v2288, %v2276
        %v2853 = vpack.c.b16 %v2289, %v2277
        %v2854 = vpack.c.b16 %v2290, %v2278
        %v2855 = vpack.c.b16 %v2291, %v2279
        %v2856 = vpack.c.b16 %v2292, %v2280
        %v2857 = vpack.c.b16 %v2293, %v2281
        %v2858 = vpack.c.b16 %v2294, %v2282
        %v2859 = vpack.c.b16 %v2295, %v2283
        %v2860 = vpack.c.b16 %v2296, %v2284
        %v2861 = vpack.c.b16 %v2297, %v2285
        %v2862 = vpack.c.b16 %v2298, %v2286
        %v2863 = vpack.c.b16 %v2299, %v2287
        %v2864 = vpack.c.b16 %v2312, %v2300
        %v2865 = vpack.c.b16 %v2313, %v2301
        %v2866 = vpack.c.b16 %v2314, %v2302
        %v2867 = vpack.c.b16 %v2315, %v2303
        %v2868 = vpack.c.b16 %v2316, %v2304
        %v2869 = vpack.c.b16 %v2317, %v2305
        %v2870 = vpack.c.b16 %v2318, %v2306
        %v2871 = vpack.c.b16 %v2319, %v2307
        %v2872 = vpack.c.b16 %v2320, %v2308
        %v2873 = vpack.c.b16 %v2321, %v2309
        %v2874 = vpack.c.b16 %v2322, %v2310
        %v2875 = vpack.c.b16 %v2323, %v2311
        %v2876 = vpack.c.b16 %v2336, %v2324
        %v2877 = vpack.c.b16 %v2337, %v2325
        %v2878 = vpack.c.b16 %v2338, %v2326
        %v2879 = vpack.c.b16 %v2339, %v2327
        %v2880 = vpack.c.b16 %v2340, %v2328
        %v2881 = vpack.c.b16 %v2341, %v2329
        %v2882 = vpack.c.b16 %v2342, %v2330
        %v2883 = vpack.c.b16 %v2343, %v2331
        %v2884 = vpack.c.b16 %v2344, %v2332
        %v2885 = vpack.c.b16 %v2345, %v2333
        %v2886 = vpack.c.b16 %v2346, %v2334
        %v2887 = vpack.c.b16 %v2347, %v2335
        %v2888 = vpack.c.b16 %v2360, %v2348
        %v2889 = vpack.c.b16 %v2361, %v2349
        %v2890 = vpack.c.b16 %v2362, %v2350
        %v2891 = vpack.c.b16 %v2363, %v2351
        %v2892 = vpack.c.b16 %v2364, %v2352
        %v2893 = vpack.c.b16 %v2365, %v2353
        %v2894 = vpack.c.b16 %v2366, %v2354
        %v2895 = vpack.c.b16 %v2367, %v2355
        %v2896 = vpack.c.b16 %v2368, %v2356
        %v2897 = vpack.c.b16 %v2369, %v2357
        %v2898 = vpack.c.b16 %v2370, %v2358
        %v2899 = vpack.c.b16 %v2371, %v2359
        %v2900 = vpack.c.b16 %v2384, %v2372
        %v2901 = vpack.c.b16 %v2385, %v2373
        %v2902 = vpack.c.b16 %v2386, %v2374
        %v2903 = vpack.c.b16 %v2387, %v2375
        %v2904 = vpack.c.b16 %v2388, %v2376
        %v2905 = vpack.c.b16 %v2389, %v2377
        %v2906 = vpack.c.b16 %v2390, %v2378
        %v2907 = vpack.c.b16 %v2391, %v2379
        %v2908 = vpack.c.b16 %v2392, %v2380
        %v2909 = vpack.c.b16 %v2393, %v2381
        %v2910 = vpack.c.b16 %v2394, %v2382
        %v2911 = vpack.c.b16 %v2395, %v2383
        %v2912 = vpack.c.b16 %v2408, %v2396
        %v2913 = vpack.c.b16 %v2409, %v2397
        %v2914 = vpack.c.b16 %v2410, %v2398
        %v2915 = vpack.c.b16 %v2411, %v2399
        %v2916 = vpack.c.b16 %v2412, %v2400
        %v2917 = vpack.c.b16 %v2413, %v2401
        %v2918 = vpack.c.b16 %v2414, %v2402
        %v2919 = vpack.c.b16 %v2415, %v2403
        %v2920 = vpack.c.b16 %v2416, %v2404
        %v2921 = vpack.c.b16 %v2417, %v2405
        %v2922 = vpack.c.b16 %v2418, %v2406
        %v2923 = vpack.c.b16 %v2419, %v2407
        %v2924 = vpack.c.b16 %v2432, %v2420
        %v2925 = vpack.c.b16 %v2433, %v2421
        %v2926 = vpack.c.b16 %v2434, %v2422
        %v2927 = vpack.c.b16 %v2435, %v2423
        %v2928 = vpack.c.b16 %v2436, %v2424
        %v2929 = vpack.c.b16 %v2437, %v2425
        %v2930 = vpack.c.b16 %v2438, %v2426
        %v2931 = vpack.c.b16 %v2439, %v2427
        %v2932 = vpack.c.b16 %v2440, %v2428
        %v2933 = vpack.c.b16 %v2441, %v2429
        %v2934 = vpack.c.b16 %v2442, %v2430
        %v2935 = vpack.c.b16 %v2443, %v2431
        %v2936 = vpack.c.b16 %v2456, %v2444
        %v2937 = vpack.c.b16 %v2457, %v2445
        %v2938 = vpack.c.b16 %v2458, %v2446
        %v2939 = vpack.c.b16 %v2459, %v2447
        %v2940 = vpack.c.b16 %v2460, %v2448
        %v2941 = vpack.c.b16 %v2461, %v2449
        %v2942 = vpack.c.b16 %v2462, %v2450
        %v2943 = vpack.c.b16 %v2463, %v2451
        %v2944 = vpack.c.b16 %v2464, %v2452
        %v2945 = vpack.c.b16 %v2465, %v2453
        %v2946 = vpack.c.b16 %v2466, %v2454
        %v2947 = vpack.c.b16 %v2467, %v2455
        %v2948 = vpack.c.b16 %v2480, %v2468
        %v2949 = vpack.c.b16 %v2481, %v2469
        %v2950 = vpack.c.b16 %v2482, %v2470
        %v2951 = vpack.c.b16 %v2483, %v2471
        %v2952 = vpack.c.b16 %v2484, %v2472
        %v2953 = vpack.c.b16 %v2485, %v2473
        %v2954 = vpack.c.b16 %v2486, %v2474
        %v2955 = vpack.c.b16 %v2487, %v2475
        %v2956 = vpack.c.b16 %v2488, %v2476
        %v2957 = vpack.c.b16 %v2489, %v2477
        %v2958 = vpack.c.b16 %v2490, %v2478
        %v2959 = vpack.c.b16 %v2491, %v2479
        %v2960 = vpack.c.b16 %v2504, %v2492
        %v2961 = vpack.c.b16 %v2505, %v2493
        %v2962 = vpack.c.b16 %v2506, %v2494
        %v2963 = vpack.c.b16 %v2507, %v2495
        %v2964 = vpack.c.b16 %v2508, %v2496
        %v2965 = vpack.c.b16 %v2509, %v2497
        %v2966 = vpack.c.b16 %v2510, %v2498
        %v2967 = vpack.c.b16 %v2511, %v2499
        %v2968 = vpack.c.b16 %v2512, %v2500
        %v2969 = vpack.c.b16 %v2513, %v2501
        %v2970 = vpack.c.b16 %v2514, %v2502
        %v2971 = vpack.c.b16 %v2515, %v2503
        %v2972 = vpack.c.b16 %v2528, %v2516
        %v2973 = vpack.c.b16 %v2529, %v2517
        %v2974 = vpack.c.b16 %v2530, %v2518
        %v2975 = vpack.c.b16 %v2531, %v2519
        %v2976 = vpack.c.b16 %v2532, %v2520
        %v2977 = vpack.c.b16 %v2533, %v2521
        %v2978 = vpack.c.b16 %v2534, %v2522
        %v2979 = vpack.c.b16 %v2535, %v2523
        %v2980 = vpack.c.b16 %v2536, %v2524
        %v2981 = vpack.c.b16 %v2537, %v2525
        %v2982 = vpack.c.b16 %v2538, %v2526
        %v2983 = vpack.c.b16 %v2539, %v2527
        %v2984 = vpack.c.b16 %v2552, %v2540
        %v2985 = vpack.c.b16 %v2553, %v2541
        %v2986 = vpack.c.b16 %v2554, %v2542
        %v2987 = vpack.c.b16 %v2555, %v2543
        %v2988 = vpack.c.b16 %v2556, %v2544
        %v2989 = vpack.c.b16 %v2557, %v2545
        %v2990 = vpack.c.b16 %v2558, %v2546
        %v2991 = vpack.c.b16 %v2559, %v2547
        %v2992 = vpack.c.b16 %v2560, %v2548
        %v2993 = vpack.c.b16 %v2561, %v2549
        %v2994 = vpack.c.b16 %v2562, %v2550
        %v2995 = vpack.c.b16 %v2563, %v2551
        %v2996 = vpack.c.b16 %v2576, %v2564
        %v2997 = vpack.c.b16 %v2577, %v2565
        %v2998 = vpack.c.b16 %v2578, %v2566
        %v2999 = vpack.c.b16 %v2579, %v2567
        %v3000 = vpack.c.b16 %v2580, %v2568
        %v3001 = vpack.c.b16 %v2581, %v2569
        %v3002 = vpack.c.b16 %v2582, %v2570
        %v3003 = vpack.c.b16 %v2583, %v2571
        %v3004 = vpack.c.b16 %v2584, %v2572
        %v3005 = vpack.c.b16 %v2585, %v2573
        %v3006 = vpack.c.b16 %v2586, %v2574
        %v3007 = vpack.c.b16 %v2587, %v2575
        %v3008 = vpack.c.b16 %v2600, %v2588
        %v3009 = vpack.c.b16 %v2601, %v2589
        %v3010 = vpack.c.b16 %v2602, %v2590
        %v3011 = vpack.c.b16 %v2603, %v2591
        %v3012 = vpack.c.b16 %v2604, %v2592
        %v3013 = vpack.c.b16 %v2605, %v2593
        %v3014 = vpack.c.b16 %v2606, %v2594
        %v3015 = vpack.c.b16 %v2607, %v2595
        %v3016 = vpack.c.b16 %v2608, %v2596
        %v3017 = vpack.c.b16 %v2609, %v2597
        %v3018 = vpack.c.b16 %v2610, %v2598
        %v3019 = vpack.c.b16 %v2611, %v2599
        %v3020 = vpack.c.b16 %v2624, %v2612
        %v3021 = vpack.c.b16 %v2625, %v2613
        %v3022 = vpack.c.b16 %v2626, %v2614
        %v3023 = vpack.c.b16 %v2627, %v2615
        %v3024 = vpack.c.b16 %v2628, %v2616
        %v3025 = vpack.c.b16 %v2629, %v2617
        %v3026 = vpack.c.b16 %v2630, %v2618
        %v3027 = vpack.c.b16 %v2631, %v2619
        %v3028 = vpack.c.b16 %v2632, %v2620
        %v3029 = vpack.c.b16 %v2633, %v2621
        %v3030 = vpack.c.b16 %v2634, %v2622
        %v3031 = vpack.c.b16 %v2635, %v2623
        %v3032 = vpack.c.b16 %v2648, %v2636
        %v3033 = vpack.c.b16 %v2649, %v2637
        %v3034 = vpack.c.b16 %v2650, %v2638
        %v3035 = vpack.c.b16 %v2651, %v2639
        %v3036 = vpack.c.b16 %v2652, %v2640
        %v3037 = vpack.c.b16 %v2653, %v2641
        %v3038 = vpack.c.b16 %v2654, %v2642
        %v3039 = vpack.c.b16 %v2655, %v2643
        %v3040 = vpack.c.b16 %v2656, %v2644
        %v3041 = vpack.c.b16 %v2657, %v2645
        %v3042 = vpack.c.b16 %v2658, %v2646
        %v3043 = vpack.c.b16 %v2659, %v2647
        %3428 = vmatprep.subr.bf16.mxu0 %v2745
        %3429 = vmatpush1.bf16.msra.mxu0 %v2744
        %3430 = vmatprep.subr.bf16.mxu0 %v2733
        %3431 = vmatpush1.bf16.msra.mxu0 %v2732
        %3432 = vmatprep.subr.bf16.mxu0 %v2721
        %3433 = vmatpush1.bf16.msra.mxu0 %v2720
        %3434 = vmatprep.subr.bf16.mxu0 %v2709
        %3435 = vmatpush1.bf16.msra.mxu0 %v2708
        %3436 = vmatprep.subr.bf16.mxu0 %v2697
        %3437 = vmatpush1.bf16.msra.mxu0 %v2696
        %3438 = vmatprep.subr.bf16.mxu0 %v2685
        %3439 = vmatpush1.bf16.msra.mxu0 %v2684
        %3440 = vmatprep.subr.bf16.mxu0 %v2673
        %3441 = vmatpush1.bf16.msra.mxu0 %v2672
        %3442 = vmatprep.subr.bf16.mxu0 %v2661
        %3443 = vmatpush1.bf16.msra.mxu0 %v2660
        %3444 = vmatprep.subr.bf16.mxu0 %v2841
        %3445 = vmatpush2.bf16.msra.mxu0 %v2840
        %3446 = vmatprep.subr.bf16.mxu0 %v2829
        %3447 = vmatpush2.bf16.msra.mxu0 %v2828
        %3448 = vmatprep.subr.bf16.mxu0 %v2817
        %3449 = vmatpush2.bf16.msra.mxu0 %v2816
        %3450 = vmatprep.subr.bf16.mxu0 %v2805
        %3451 = vmatpush2.bf16.msra.mxu0 %v2804
        %3452 = vmatprep.subr.bf16.mxu0 %v2793
        %3453 = vmatpush2.bf16.msra.mxu0 %v2792
        %3454 = vmatprep.subr.bf16.mxu0 %v2781
        %3455 = vmatpush2.bf16.msra.mxu0 %v2780
        %3456 = vmatprep.subr.bf16.mxu0 %v2769
        %3457 = vmatpush2.bf16.msra.mxu0 %v2768
        %3458 = vmatprep.subr.bf16.mxu0 %v2757
        %3459 = vmatpush2.bf16.msra.mxu0 %v2756
        %3460 = vmatprep.mubr.bf16.mxu0 %v1057
        %3461 = vmatmul.mubr.bf16.gmra.mxu0 %v1056
        %v3462 = vpop.f32.mrf.mxu0
        %v3463 = vadd.f32 %v1451, %v3462
        %v3464 = vpop.f32.mrf.mxu0
        %v3465 = vadd.f32 %v1455, %v3464
        %v3466 = vpop.f32.mrf.mxu0
        %v3467 = vpop.f32.mrf.mxu0
        %3468 = vdwg.mxu0
        %3469 = vmatprep.subr.bf16.mxu0 %v2937
        %3470 = vmatpush1.bf16.msra.mxu0 %v2936
        %3471 = vmatprep.subr.bf16.mxu0 %v2925
        %3472 = vmatpush1.bf16.msra.mxu0 %v2924
        %3473 = vmatprep.subr.bf16.mxu0 %v2913
        %3474 = vmatpush1.bf16.msra.mxu0 %v2912
        %3475 = vmatprep.subr.bf16.mxu0 %v2901
        %3476 = vmatpush1.bf16.msra.mxu0 %v2900
        %3477 = vmatprep.subr.bf16.mxu0 %v2889
        %3478 = vmatpush1.bf16.msra.mxu0 %v2888
        %3479 = vmatprep.subr.bf16.mxu0 %v2877
        %3480 = vmatpush1.bf16.msra.mxu0 %v2876
        %3481 = vmatprep.subr.bf16.mxu0 %v2865
        %3482 = vmatpush1.bf16.msra.mxu0 %v2864
        %3483 = vmatprep.subr.bf16.mxu0 %v2853
        %3484 = vmatpush1.bf16.msra.mxu0 %v2852
        %3485 = vmatprep.subr.bf16.mxu0 %v3033
        %3486 = vmatpush2.bf16.msra.mxu0 %v3032
        %3487 = vmatprep.subr.bf16.mxu0 %v3021
        %3488 = vmatpush2.bf16.msra.mxu0 %v3020
        %3489 = vmatprep.subr.bf16.mxu0 %v3009
        %3490 = vmatpush2.bf16.msra.mxu0 %v3008
        %3491 = vmatprep.subr.bf16.mxu0 %v2997
        %3492 = vmatpush2.bf16.msra.mxu0 %v2996
        %3493 = vmatprep.subr.bf16.mxu0 %v2985
        %3494 = vmatpush2.bf16.msra.mxu0 %v2984
        %3495 = vmatprep.subr.bf16.mxu0 %v2973
        %3496 = vmatpush2.bf16.msra.mxu0 %v2972
        %3497 = vmatprep.subr.bf16.mxu0 %v2961
        %3498 = vmatpush2.bf16.msra.mxu0 %v2960
        %3499 = vmatprep.subr.bf16.mxu0 %v2949
        %3500 = vmatpush2.bf16.msra.mxu0 %v2948
        %3501 = vmatprep.mubr.bf16.mxu0 %v1059
        %3502 = vmatmul.mubr.bf16.gmra.mxu0 %v1058
        %v3503 = vpop.f32.mrf.mxu0
        %v3504 = vadd.f32 %v3463, %v3503
        %v3505 = vpop.f32.mrf.mxu0
        %v3506 = vadd.f32 %v3465, %v3505
        %v3507 = vpop.f32.mrf.mxu0
        %v3508 = vpop.f32.mrf.mxu0
        %3509 = vdwg.mxu0
        %3510 = vmatprep.subr.bf16.mxu0 %v2747
        %3511 = vmatpush1.bf16.msra.mxu0 %v2746
        %3512 = vmatprep.subr.bf16.mxu0 %v2735
        %3513 = vmatpush1.bf16.msra.mxu0 %v2734
        %3514 = vmatprep.subr.bf16.mxu0 %v2723
        %3515 = vmatpush1.bf16.msra.mxu0 %v2722
        %3516 = vmatprep.subr.bf16.mxu0 %v2711
        %3517 = vmatpush1.bf16.msra.mxu0 %v2710
        %3518 = vmatprep.subr.bf16.mxu0 %v2699
        %3519 = vmatpush1.bf16.msra.mxu0 %v2698
        %3520 = vmatprep.subr.bf16.mxu0 %v2687
        %3521 = vmatpush1.bf16.msra.mxu0 %v2686
        %3522 = vmatprep.subr.bf16.mxu0 %v2675
        %3523 = vmatpush1.bf16.msra.mxu0 %v2674
        %3524 = vmatprep.subr.bf16.mxu0 %v2663
        %3525 = vmatpush1.bf16.msra.mxu0 %v2662
        %3526 = vmatprep.subr.bf16.mxu0 %v2843
        %3527 = vmatpush2.bf16.msra.mxu0 %v2842
        %3528 = vmatprep.subr.bf16.mxu0 %v2831
        %3529 = vmatpush2.bf16.msra.mxu0 %v2830
        %3530 = vmatprep.subr.bf16.mxu0 %v2819
        %3531 = vmatpush2.bf16.msra.mxu0 %v2818
        %3532 = vmatprep.subr.bf16.mxu0 %v2807
        %3533 = vmatpush2.bf16.msra.mxu0 %v2806
        %3534 = vmatprep.subr.bf16.mxu0 %v2795
        %3535 = vmatpush2.bf16.msra.mxu0 %v2794
        %3536 = vmatprep.subr.bf16.mxu0 %v2783
        %3537 = vmatpush2.bf16.msra.mxu0 %v2782
        %3538 = vmatprep.subr.bf16.mxu0 %v2771
        %3539 = vmatpush2.bf16.msra.mxu0 %v2770
        %3540 = vmatprep.subr.bf16.mxu0 %v2759
        %3541 = vmatpush2.bf16.msra.mxu0 %v2758
        %3542 = vmatprep.mubr.bf16.mxu0 %v1057
        %3543 = vmatmul.mubr.bf16.gmra.mxu0 %v1056
        %v3544 = vpop.f32.mrf.mxu0
        %v3545 = vadd.f32 %v1459, %v3544
        %v3546 = vpop.f32.mrf.mxu0
        %v3547 = vadd.f32 %v1463, %v3546
        %v3548 = vpop.f32.mrf.mxu0
        %v3549 = vpop.f32.mrf.mxu0
        %3550 = vdwg.mxu0
        %3551 = vmatprep.subr.bf16.mxu0 %v2939
        %3552 = vmatpush1.bf16.msra.mxu0 %v2938
        %3553 = vmatprep.subr.bf16.mxu0 %v2927
        %3554 = vmatpush1.bf16.msra.mxu0 %v2926
        %3555 = vmatprep.subr.bf16.mxu0 %v2915
        %3556 = vmatpush1.bf16.msra.mxu0 %v2914
        %3557 = vmatprep.subr.bf16.mxu0 %v2903
        %3558 = vmatpush1.bf16.msra.mxu0 %v2902
        %3559 = vmatprep.subr.bf16.mxu0 %v2891
        %3560 = vmatpush1.bf16.msra.mxu0 %v2890
        %3561 = vmatprep.subr.bf16.mxu0 %v2879
        %3562 = vmatpush1.bf16.msra.mxu0 %v2878
        %3563 = vmatprep.subr.bf16.mxu0 %v2867
        %3564 = vmatpush1.bf16.msra.mxu0 %v2866
        %3565 = vmatprep.subr.bf16.mxu0 %v2855
        %3566 = vmatpush1.bf16.msra.mxu0 %v2854
        %3567 = vmatprep.subr.bf16.mxu0 %v3035
        %3568 = vmatpush2.bf16.msra.mxu0 %v3034
        %3569 = vmatprep.subr.bf16.mxu0 %v3023
        %3570 = vmatpush2.bf16.msra.mxu0 %v3022
        %3571 = vmatprep.subr.bf16.mxu0 %v3011
        %3572 = vmatpush2.bf16.msra.mxu0 %v3010
        %3573 = vmatprep.subr.bf16.mxu0 %v2999
        %3574 = vmatpush2.bf16.msra.mxu0 %v2998
        %3575 = vmatprep.subr.bf16.mxu0 %v2987
        %3576 = vmatpush2.bf16.msra.mxu0 %v2986
        %3577 = vmatprep.subr.bf16.mxu0 %v2975
        %3578 = vmatpush2.bf16.msra.mxu0 %v2974
        %3579 = vmatprep.subr.bf16.mxu0 %v2963
        %3580 = vmatpush2.bf16.msra.mxu0 %v2962
        %3581 = vmatprep.subr.bf16.mxu0 %v2951
        %3582 = vmatpush2.bf16.msra.mxu0 %v2950
        %3583 = vmatprep.mubr.bf16.mxu0 %v1059
        %3584 = vmatmul.mubr.bf16.gmra.mxu0 %v1058
        %v3585 = vpop.f32.mrf.mxu0
        %v3586 = vadd.f32 %v3545, %v3585
        %v3587 = vpop.f32.mrf.mxu0
        %v3588 = vadd.f32 %v3547, %v3587
        %v3589 = vpop.f32.mrf.mxu0
        %v3590 = vpop.f32.mrf.mxu0
        %3591 = vdwg.mxu0
        %3592 = vmatprep.subr.bf16.mxu0 %v2749
        %3593 = vmatpush1.bf16.msra.mxu0 %v2748
        %3594 = vmatprep.subr.bf16.mxu0 %v2737
        %3595 = vmatpush1.bf16.msra.mxu0 %v2736
        %3596 = vmatprep.subr.bf16.mxu0 %v2725
        %3597 = vmatpush1.bf16.msra.mxu0 %v2724
        %3598 = vmatprep.subr.bf16.mxu0 %v2713
        %3599 = vmatpush1.bf16.msra.mxu0 %v2712
        %3600 = vmatprep.subr.bf16.mxu0 %v2701
        %3601 = vmatpush1.bf16.msra.mxu0 %v2700
        %3602 = vmatprep.subr.bf16.mxu0 %v2689
        %3603 = vmatpush1.bf16.msra.mxu0 %v2688
        %3604 = vmatprep.subr.bf16.mxu0 %v2677
        %3605 = vmatpush1.bf16.msra.mxu0 %v2676
        %3606 = vmatprep.subr.bf16.mxu0 %v2665
        %3607 = vmatpush1.bf16.msra.mxu0 %v2664
        %3608 = vmatprep.subr.bf16.mxu0 %v2845
        %3609 = vmatpush2.bf16.msra.mxu0 %v2844
        %3610 = vmatprep.subr.bf16.mxu0 %v2833
        %3611 = vmatpush2.bf16.msra.mxu0 %v2832
        %3612 = vmatprep.subr.bf16.mxu0 %v2821
        %3613 = vmatpush2.bf16.msra.mxu0 %v2820
        %3614 = vmatprep.subr.bf16.mxu0 %v2809
        %3615 = vmatpush2.bf16.msra.mxu0 %v2808
        %3616 = vmatprep.subr.bf16.mxu0 %v2797
        %3617 = vmatpush2.bf16.msra.mxu0 %v2796
        %3618 = vmatprep.subr.bf16.mxu0 %v2785
        %3619 = vmatpush2.bf16.msra.mxu0 %v2784
        %3620 = vmatprep.subr.bf16.mxu0 %v2773
        %3621 = vmatpush2.bf16.msra.mxu0 %v2772
        %3622 = vmatprep.subr.bf16.mxu0 %v2761
        %3623 = vmatpush2.bf16.msra.mxu0 %v2760
        %3624 = vmatprep.mubr.bf16.mxu0 %v1057
        %3625 = vmatmul.mubr.bf16.gmra.mxu0 %v1056
        %v3626 = vpop.f32.mrf.mxu0
        %v3627 = vadd.f32 %v1467, %v3626
        %v3628 = vpop.f32.mrf.mxu0
        %v3629 = vadd.f32 %v1471, %v3628
        %v3630 = vpop.f32.mrf.mxu0
        %v3631 = vpop.f32.mrf.mxu0
        %3632 = vdwg.mxu0
        %3633 = vmatprep.subr.bf16.mxu0 %v2941
        %3634 = vmatpush1.bf16.msra.mxu0 %v2940
        %3635 = vmatprep.subr.bf16.mxu0 %v2929
        %3636 = vmatpush1.bf16.msra.mxu0 %v2928
        %3637 = vmatprep.subr.bf16.mxu0 %v2917
        %3638 = vmatpush1.bf16.msra.mxu0 %v2916
        %3639 = vmatprep.subr.bf16.mxu0 %v2905
        %3640 = vmatpush1.bf16.msra.mxu0 %v2904
        %3641 = vmatprep.subr.bf16.mxu0 %v2893
        %3642 = vmatpush1.bf16.msra.mxu0 %v2892
        %3643 = vmatprep.subr.bf16.mxu0 %v2881
        %3644 = vmatpush1.bf16.msra.mxu0 %v2880
        %3645 = vmatprep.subr.bf16.mxu0 %v2869
        %3646 = vmatpush1.bf16.msra.mxu0 %v2868
        %3647 = vmatprep.subr.bf16.mxu0 %v2857
        %3648 = vmatpush1.bf16.msra.mxu0 %v2856
        %3649 = vmatprep.subr.bf16.mxu0 %v3037
        %3650 = vmatpush2.bf16.msra.mxu0 %v3036
        %3651 = vmatprep.subr.bf16.mxu0 %v3025
        %3652 = vmatpush2.bf16.msra.mxu0 %v3024
        %3653 = vmatprep.subr.bf16.mxu0 %v3013
        %3654 = vmatpush2.bf16.msra.mxu0 %v3012
        %3655 = vmatprep.subr.bf16.mxu0 %v3001
        %3656 = vmatpush2.bf16.msra.mxu0 %v3000
        %3657 = vmatprep.subr.bf16.mxu0 %v2989
        %3658 = vmatpush2.bf16.msra.mxu0 %v2988
        %3659 = vmatprep.subr.bf16.mxu0 %v2977
        %3660 = vmatpush2.bf16.msra.mxu0 %v2976
        %3661 = vmatprep.subr.bf16.mxu0 %v2965
        %3662 = vmatpush2.bf16.msra.mxu0 %v2964
        %3663 = vmatprep.subr.bf16.mxu0 %v2953
        %3664 = vmatpush2.bf16.msra.mxu0 %v2952
        %3665 = vmatprep.mubr.bf16.mxu0 %v1059
        %3666 = vmatmul.mubr.bf16.gmra.mxu0 %v1058
        %v3667 = vpop.f32.mrf.mxu0
        %v3668 = vadd.f32 %v3627, %v3667
        %v3669 = vpop.f32.mrf.mxu0
        %v3670 = vadd.f32 %v3629, %v3669
        %v3671 = vpop.f32.mrf.mxu0
        %v3672 = vpop.f32.mrf.mxu0
        %3673 = vdwg.mxu0
        %3674 = vmatprep.subr.bf16.mxu0 %v2751
        %3675 = vmatpush1.bf16.msra.mxu0 %v2750
        %3676 = vmatprep.subr.bf16.mxu0 %v2739
        %3677 = vmatpush1.bf16.msra.mxu0 %v2738
        %3678 = vmatprep.subr.bf16.mxu0 %v2727
        %3679 = vmatpush1.bf16.msra.mxu0 %v2726
        %3680 = vmatprep.subr.bf16.mxu0 %v2715
        %3681 = vmatpush1.bf16.msra.mxu0 %v2714
        %3682 = vmatprep.subr.bf16.mxu0 %v2703
        %3683 = vmatpush1.bf16.msra.mxu0 %v2702
        %3684 = vmatprep.subr.bf16.mxu0 %v2691
        %3685 = vmatpush1.bf16.msra.mxu0 %v2690
        %3686 = vmatprep.subr.bf16.mxu0 %v2679
        %3687 = vmatpush1.bf16.msra.mxu0 %v2678
        %3688 = vmatprep.subr.bf16.mxu0 %v2667
        %3689 = vmatpush1.bf16.msra.mxu0 %v2666
        %3690 = vmatprep.subr.bf16.mxu0 %v2847
        %3691 = vmatpush2.bf16.msra.mxu0 %v2846
        %3692 = vmatprep.subr.bf16.mxu0 %v2835
        %3693 = vmatpush2.bf16.msra.mxu0 %v2834
        %3694 = vmatprep.subr.bf16.mxu0 %v2823
        %3695 = vmatpush2.bf16.msra.mxu0 %v2822
        %3696 = vmatprep.subr.bf16.mxu0 %v2811
        %3697 = vmatpush2.bf16.msra.mxu0 %v2810
        %3698 = vmatprep.subr.bf16.mxu0 %v2799
        %3699 = vmatpush2.bf16.msra.mxu0 %v2798
        %3700 = vmatprep.subr.bf16.mxu0 %v2787
        %3701 = vmatpush2.bf16.msra.mxu0 %v2786
        %3702 = vmatprep.subr.bf16.mxu0 %v2775
        %3703 = vmatpush2.bf16.msra.mxu0 %v2774
        %3704 = vmatprep.subr.bf16.mxu0 %v2763
        %3705 = vmatpush2.bf16.msra.mxu0 %v2762
        %3706 = vmatprep.mubr.bf16.mxu0 %v1057
        %3707 = vmatmul.mubr.bf16.gmra.mxu0 %v1056
        %v3708 = vpop.f32.mrf.mxu0
        %v3709 = vadd.f32 %v1475, %v3708
        %v3710 = vpop.f32.mrf.mxu0
        %v3711 = vadd.f32 %v1479, %v3710
        %v3712 = vpop.f32.mrf.mxu0
        %v3713 = vpop.f32.mrf.mxu0
        %3714 = vdwg.mxu0
        %3715 = vmatprep.subr.bf16.mxu0 %v2943
        %3716 = vmatpush1.bf16.msra.mxu0 %v2942
        %3717 = vmatprep.subr.bf16.mxu0 %v2931
        %3718 = vmatpush1.bf16.msra.mxu0 %v2930
        %3719 = vmatprep.subr.bf16.mxu0 %v2919
        %3720 = vmatpush1.bf16.msra.mxu0 %v2918
        %3721 = vmatprep.subr.bf16.mxu0 %v2907
        %3722 = vmatpush1.bf16.msra.mxu0 %v2906
        %3723 = vmatprep.subr.bf16.mxu0 %v2895
        %3724 = vmatpush1.bf16.msra.mxu0 %v2894
        %3725 = vmatprep.subr.bf16.mxu0 %v2883
        %3726 = vmatpush1.bf16.msra.mxu0 %v2882
        %3727 = vmatprep.subr.bf16.mxu0 %v2871
        %3728 = vmatpush1.bf16.msra.mxu0 %v2870
        %3729 = vmatprep.subr.bf16.mxu0 %v2859
        %3730 = vmatpush1.bf16.msra.mxu0 %v2858
        %3731 = vmatprep.subr.bf16.mxu0 %v3039
        %3732 = vmatpush2.bf16.msra.mxu0 %v3038
        %3733 = vmatprep.subr.bf16.mxu0 %v3027
        %3734 = vmatpush2.bf16.msra.mxu0 %v3026
        %3735 = vmatprep.subr.bf16.mxu0 %v3015
        %3736 = vmatpush2.bf16.msra.mxu0 %v3014
        %3737 = vmatprep.subr.bf16.mxu0 %v3003
        %3738 = vmatpush2.bf16.msra.mxu0 %v3002
        %3739 = vmatprep.subr.bf16.mxu0 %v2991
        %3740 = vmatpush2.bf16.msra.mxu0 %v2990
        %3741 = vmatprep.subr.bf16.mxu0 %v2979
        %3742 = vmatpush2.bf16.msra.mxu0 %v2978
        %3743 = vmatprep.subr.bf16.mxu0 %v2967
        %3744 = vmatpush2.bf16.msra.mxu0 %v2966
        %3745 = vmatprep.subr.bf16.mxu0 %v2955
        %3746 = vmatpush2.bf16.msra.mxu0 %v2954
        %3747 = vmatprep.mubr.bf16.mxu0 %v1059
        %3748 = vmatmul.mubr.bf16.gmra.mxu0 %v1058
        %v3749 = vpop.f32.mrf.mxu0
        %v3750 = vadd.f32 %v3709, %v3749
        %v3751 = vpop.f32.mrf.mxu0
        %v3752 = vadd.f32 %v3711, %v3751
        %v3753 = vpop.f32.mrf.mxu0
        %v3754 = vpop.f32.mrf.mxu0
        %3755 = vdwg.mxu0
        %3756 = vmatprep.subr.bf16.mxu0 %v2753
        %3757 = vmatpush1.bf16.msra.mxu0 %v2752
        %3758 = vmatprep.subr.bf16.mxu0 %v2741
        %3759 = vmatpush1.bf16.msra.mxu0 %v2740
        %3760 = vmatprep.subr.bf16.mxu0 %v2729
        %3761 = vmatpush1.bf16.msra.mxu0 %v2728
        %3762 = vmatprep.subr.bf16.mxu0 %v2717
        %3763 = vmatpush1.bf16.msra.mxu0 %v2716
        %3764 = vmatprep.subr.bf16.mxu0 %v2705
        %3765 = vmatpush1.bf16.msra.mxu0 %v2704
        %3766 = vmatprep.subr.bf16.mxu0 %v2693
        %3767 = vmatpush1.bf16.msra.mxu0 %v2692
        %3768 = vmatprep.subr.bf16.mxu0 %v2681
        %3769 = vmatpush1.bf16.msra.mxu0 %v2680
        %3770 = vmatprep.subr.bf16.mxu0 %v2669
        %3771 = vmatpush1.bf16.msra.mxu0 %v2668
        %3772 = vmatprep.subr.bf16.mxu0 %v2849
        %3773 = vmatpush2.bf16.msra.mxu0 %v2848
        %3774 = vmatprep.subr.bf16.mxu0 %v2837
        %3775 = vmatpush2.bf16.msra.mxu0 %v2836
        %3776 = vmatprep.subr.bf16.mxu0 %v2825
        %3777 = vmatpush2.bf16.msra.mxu0 %v2824
        %3778 = vmatprep.subr.bf16.mxu0 %v2813
        %3779 = vmatpush2.bf16.msra.mxu0 %v2812
        %3780 = vmatprep.subr.bf16.mxu0 %v2801
        %3781 = vmatpush2.bf16.msra.mxu0 %v2800
        %3782 = vmatprep.subr.bf16.mxu0 %v2789
        %3783 = vmatpush2.bf16.msra.mxu0 %v2788
        %3784 = vmatprep.subr.bf16.mxu0 %v2777
        %3785 = vmatpush2.bf16.msra.mxu0 %v2776
        %3786 = vmatprep.subr.bf16.mxu0 %v2765
        %3787 = vmatpush2.bf16.msra.mxu0 %v2764
        %3788 = vmatprep.mubr.bf16.mxu0 %v1057
        %3789 = vmatmul.mubr.bf16.gmra.mxu0 %v1056
        %v3790 = vpop.f32.mrf.mxu0
        %v3791 = vadd.f32 %v1483, %v3790
        %v3792 = vpop.f32.mrf.mxu0
        %v3793 = vadd.f32 %v1487, %v3792
        %v3794 = vpop.f32.mrf.mxu0
        %v3795 = vpop.f32.mrf.mxu0
        %3796 = vdwg.mxu0
        %3797 = vmatprep.subr.bf16.mxu0 %v2945
        %3798 = vmatpush1.bf16.msra.mxu0 %v2944
        %3799 = vmatprep.subr.bf16.mxu0 %v2933
        %3800 = vmatpush1.bf16.msra.mxu0 %v2932
        %3801 = vmatprep.subr.bf16.mxu0 %v2921
        %3802 = vmatpush1.bf16.msra.mxu0 %v2920
        %3803 = vmatprep.subr.bf16.mxu0 %v2909
        %3804 = vmatpush1.bf16.msra.mxu0 %v2908
        %3805 = vmatprep.subr.bf16.mxu0 %v2897
        %3806 = vmatpush1.bf16.msra.mxu0 %v2896
        %3807 = vmatprep.subr.bf16.mxu0 %v2885
        %3808 = vmatpush1.bf16.msra.mxu0 %v2884
        %3809 = vmatprep.subr.bf16.mxu0 %v2873
        %3810 = vmatpush1.bf16.msra.mxu0 %v2872
        %3811 = vmatprep.subr.bf16.mxu0 %v2861
        %3812 = vmatpush1.bf16.msra.mxu0 %v2860
        %3813 = vmatprep.subr.bf16.mxu0 %v3041
        %3814 = vmatpush2.bf16.msra.mxu0 %v3040
        %3815 = vmatprep.subr.bf16.mxu0 %v3029
        %3816 = vmatpush2.bf16.msra.mxu0 %v3028
        %3817 = vmatprep.subr.bf16.mxu0 %v3017
        %3818 = vmatpush2.bf16.msra.mxu0 %v3016
        %3819 = vmatprep.subr.bf16.mxu0 %v3005
        %3820 = vmatpush2.bf16.msra.mxu0 %v3004
        %3821 = vmatprep.subr.bf16.mxu0 %v2993
        %3822 = vmatpush2.bf16.msra.mxu0 %v2992
        %3823 = vmatprep.subr.bf16.mxu0 %v2981
        %3824 = vmatpush2.bf16.msra.mxu0 %v2980
        %3825 = vmatprep.subr.bf16.mxu0 %v2969
        %3826 = vmatpush2.bf16.msra.mxu0 %v2968
        %3827 = vmatprep.subr.bf16.mxu0 %v2957
        %3828 = vmatpush2.bf16.msra.mxu0 %v2956
        %3829 = vmatprep.mubr.bf16.mxu0 %v1059
        %3830 = vmatmul.mubr.bf16.gmra.mxu0 %v1058
        %v3831 = vpop.f32.mrf.mxu0
        %v3832 = vadd.f32 %v3791, %v3831
        %v3833 = vpop.f32.mrf.mxu0
        %v3834 = vadd.f32 %v3793, %v3833
        %v3835 = vpop.f32.mrf.mxu0
        %v3836 = vpop.f32.mrf.mxu0
        %3837 = vdwg.mxu0
        %3838 = vmatprep.subr.bf16.mxu0 %v2755
        %3839 = vmatpush1.bf16.msra.mxu0 %v2754
        %3840 = vmatprep.subr.bf16.mxu0 %v2743
        %3841 = vmatpush1.bf16.msra.mxu0 %v2742
        %3842 = vmatprep.subr.bf16.mxu0 %v2731
        %3843 = vmatpush1.bf16.msra.mxu0 %v2730
        %3844 = vmatprep.subr.bf16.mxu0 %v2719
        %3845 = vmatpush1.bf16.msra.mxu0 %v2718
        %3846 = vmatprep.subr.bf16.mxu0 %v2707
        %3847 = vmatpush1.bf16.msra.mxu0 %v2706
        %3848 = vmatprep.subr.bf16.mxu0 %v2695
        %3849 = vmatpush1.bf16.msra.mxu0 %v2694
        %3850 = vmatprep.subr.bf16.mxu0 %v2683
        %3851 = vmatpush1.bf16.msra.mxu0 %v2682
        %3852 = vmatprep.subr.bf16.mxu0 %v2671
        %3853 = vmatpush1.bf16.msra.mxu0 %v2670
        %3854 = vmatprep.subr.bf16.mxu0 %v2851
        %3855 = vmatpush2.bf16.msra.mxu0 %v2850
        %3856 = vmatprep.subr.bf16.mxu0 %v2839
        %3857 = vmatpush2.bf16.msra.mxu0 %v2838
        %3858 = vmatprep.subr.bf16.mxu0 %v2827
        %3859 = vmatpush2.bf16.msra.mxu0 %v2826
        %3860 = vmatprep.subr.bf16.mxu0 %v2815
        %3861 = vmatpush2.bf16.msra.mxu0 %v2814
        %3862 = vmatprep.subr.bf16.mxu0 %v2803
        %3863 = vmatpush2.bf16.msra.mxu0 %v2802
        %3864 = vmatprep.subr.bf16.mxu0 %v2791
        %3865 = vmatpush2.bf16.msra.mxu0 %v2790
        %3866 = vmatprep.subr.bf16.mxu0 %v2779
        %3867 = vmatpush2.bf16.msra.mxu0 %v2778
        %3868 = vmatprep.subr.bf16.mxu0 %v2767
        %3869 = vmatpush2.bf16.msra.mxu0 %v2766
        %3870 = vmatprep.mubr.bf16.mxu0 %v1057
        %3871 = vmatmul.mubr.bf16.gmra.mxu0 %v1056
        %v3872 = vpop.f32.mrf.mxu0
        %v3873 = vadd.f32 %v1491, %v3872
        %v3874 = vpop.f32.mrf.mxu0
        %v3875 = vadd.f32 %v1495, %v3874
        %v3876 = vpop.f32.mrf.mxu0
        %v3877 = vpop.f32.mrf.mxu0
        %3878 = vdwg.mxu0
        %3879 = vmatprep.subr.bf16.mxu0 %v2947
        %3880 = vmatpush1.bf16.msra.mxu0 %v2946
        %3881 = vmatprep.subr.bf16.mxu0 %v2935
        %3882 = vmatpush1.bf16.msra.mxu0 %v2934
        %3883 = vmatprep.subr.bf16.mxu0 %v2923
        %3884 = vmatpush1.bf16.msra.mxu0 %v2922
        %3885 = vmatprep.subr.bf16.mxu0 %v2911
        %3886 = vmatpush1.bf16.msra.mxu0 %v2910
        %3887 = vmatprep.subr.bf16.mxu0 %v2899
        %3888 = vmatpush1.bf16.msra.mxu0 %v2898
        %3889 = vmatprep.subr.bf16.mxu0 %v2887
        %3890 = vmatpush1.bf16.msra.mxu0 %v2886
        %3891 = vmatprep.subr.bf16.mxu0 %v2875
        %3892 = vmatpush1.bf16.msra.mxu0 %v2874
        %3893 = vmatprep.subr.bf16.mxu0 %v2863
        %3894 = vmatpush1.bf16.msra.mxu0 %v2862
        %3895 = vmatprep.subr.bf16.mxu0 %v3043
        %3896 = vmatpush2.bf16.msra.mxu0 %v3042
        %3897 = vmatprep.subr.bf16.mxu0 %v3031
        %3898 = vmatpush2.bf16.msra.mxu0 %v3030
        %3899 = vmatprep.subr.bf16.mxu0 %v3019
        %3900 = vmatpush2.bf16.msra.mxu0 %v3018
        %3901 = vmatprep.subr.bf16.mxu0 %v3007
        %3902 = vmatpush2.bf16.msra.mxu0 %v3006
        %3903 = vmatprep.subr.bf16.mxu0 %v2995
        %3904 = vmatpush2.bf16.msra.mxu0 %v2994
        %3905 = vmatprep.subr.bf16.mxu0 %v2983
        %3906 = vmatpush2.bf16.msra.mxu0 %v2982
        %3907 = vmatprep.subr.bf16.mxu0 %v2971
        %3908 = vmatpush2.bf16.msra.mxu0 %v2970
        %3909 = vmatprep.subr.bf16.mxu0 %v2959
        %3910 = vmatpush2.bf16.msra.mxu0 %v2958
        %3911 = vmatprep.mubr.bf16.mxu0 %v1059
        %3912 = vmatmul.mubr.bf16.gmra.mxu0 %v1058
        %v3913 = vpop.f32.mrf.mxu0
        %v3914 = vadd.f32 %v3873, %v3913
        %v3915 = vpop.f32.mrf.mxu0
        %v3916 = vadd.f32 %v3875, %v3915
        %v3917 = vpop.f32.mrf.mxu0
        %v3918 = vpop.f32.mrf.mxu0
        %3919 = vdwg.mxu0
        %v3920 = vmul.f32 %v3504, 0.5
        %v3921 = vmul.f32 %v3506, 0.5
        %v3922 = vmul.f32 %v3586, 0.5
        %v3923 = vmul.f32 %v3588, 0.5
        %v3924 = vtanh.pop %v3920
        %v3925 = vtanh.pop %v3921
        %v3926 = vtanh.pop %v3922
        %v3927 = vtanh.pop %v3923
        %v3928 = vadd.f32 %v3924, 1.0
        %v3929 = vadd.f32 %v3925, 1.0
        %v3930 = vadd.f32 %v3926, 1.0
        %v3931 = vadd.f32 %v3927, 1.0
        %v3932 = vmul.f32 %v3928, 0.5
        %v3933 = vmul.f32 %v3929, 0.5
        %v3934 = vmul.f32 %v3930, 0.5
        %v3935 = vmul.f32 %v3931, 0.5
        %v3936 = vtanh.pop %v3668
        %v3937 = vtanh.pop %v3670
        %v3938 = vtanh.pop %v3750
        %v3939 = vtanh.pop %v3752
        %v3940 = vmul.f32 %v3932, %v3936
        %v3941 = vmul.f32 %v3933, %v3937
        %v3942 = vmul.f32 %v3934, %v3938
        %v3943 = vmul.f32 %v3935, %v3939
        %v3944 = vmul.f32 %v3832, 0.5
        %v3945 = vmul.f32 %v3834, 0.5
        %v3946 = vmul.f32 %v3914, 0.5
        %v3947 = vmul.f32 %v3916, 0.5
        %v3948 = vtanh.pop %v3944
        %v3949 = vtanh.pop %v3945
        %v3950 = vtanh.pop %v3946
        %v3951 = vtanh.pop %v3947
        %v3952 = vadd.f32 %v3948, 1.0
        %v3953 = vadd.f32 %v3949, 1.0
        %v3954 = vadd.f32 %v3950, 1.0
        %v3955 = vadd.f32 %v3951, 1.0
        %v3956 = vmul.f32 %v3952, 0.5
        %v3957 = vmul.f32 %v3953, 0.5
        %v3958 = vmul.f32 %v3954, 0.5
        %v3959 = vmul.f32 %v3955, 0.5
        %v3960 = vtanh.pop %v3940
        %v3961 = vtanh.pop %v3941
        %v3962 = vtanh.pop %v3942
        %v3963 = vtanh.pop %v3943
        %v3964 = vmul.f32 %v3956, %v3960
        %v3965 = vmul.f32 %v3957, %v3961
        %v3966 = vmul.f32 %v3958, %v3962
        %v3967 = vmul.f32 %v3959, %v3963
        %v3968 = vpack.c.bf16 %v3964, %v3964
        %v3969 = vpack.c.bf16 %v3965, %v3965
        %v3970 = vpack.c.bf16 %v3966, %v3966
        %v3971 = vpack.c.bf16 %v3967, %v3967
        %v3972 = vld [vmem:[#allocation11] sm:$0xf]
        %v3973 = vld [vmem:[#allocation11 + $0x4] sm:$0xf]
        %v3974 = vld [vmem:[#allocation11 + $0x8] sm:$0xf]
        %v3975 = vld [vmem:[#allocation11 + $0xc] sm:$0xf]
        %v3976 = vld [vmem:[#allocation11 + $0x10] sm:$0xf]
        %v3977 = vld [vmem:[#allocation11 + $0x14] sm:$0xf]
        %v3978 = vld [vmem:[#allocation11 + $0x18] sm:$0xf]
        %v3979 = vld [vmem:[#allocation11 + $0x1c] sm:$0xf]
        %v3980 = vld [vmem:[#allocation11 + $0x20] sm:$0xf]
        %v3981 = vld [vmem:[#allocation11 + $0x24] sm:$0xf]
        %v3982 = vld [vmem:[#allocation11 + $0x28] sm:$0xf]
        %v3983 = vld [vmem:[#allocation11 + $0x2c] sm:$0xf]
        %v3984 = vld [vmem:[#allocation11 + $0x30] sm:$0xf]
        %v3985 = vld [vmem:[#allocation11 + $0x34] sm:$0xf]
        %v3986 = vld [vmem:[#allocation11 + $0x38] sm:$0xf]
        %v3987 = vld [vmem:[#allocation11 + $0x3c] sm:$0xf]
        %v3988 = vld [vmem:[#allocation11 + $0x40] sm:$0xf]
        %v3989 = vld [vmem:[#allocation11 + $0x44] sm:$0xf]
        %v3990 = vld [vmem:[#allocation11 + $0x48] sm:$0xf]
        %v3991 = vld [vmem:[#allocation11 + $0x4c] sm:$0xf]
        %v3992 = vld [vmem:[#allocation11 + $0x50] sm:$0xf]
        %v3993 = vld [vmem:[#allocation11 + $0x54] sm:$0xf]
        %v3994 = vld [vmem:[#allocation11 + $0x58] sm:$0xf]
        %v3995 = vld [vmem:[#allocation11 + $0x5c] sm:$0xf]
        %v3996 = vld [vmem:[#allocation11 + $0x60] sm:$0xf]
        %v3997 = vld [vmem:[#allocation11 + $0x64] sm:$0xf]
        %v3998 = vld [vmem:[#allocation11 + $0x68] sm:$0xf]
        %v3999 = vld [vmem:[#allocation11 + $0x6c] sm:$0xf]
        %v4000 = vld [vmem:[#allocation11 + $0x70] sm:$0xf]
        %v4001 = vld [vmem:[#allocation11 + $0x74] sm:$0xf]
        %v4002 = vld [vmem:[#allocation11 + $0x78] sm:$0xf]
        %v4003 = vld [vmem:[#allocation11 + $0x7c] sm:$0xf]
        %v4004 = vld [vmem:[#allocation11 + $0x80] sm:$0xf]
        %v4005 = vld [vmem:[#allocation11 + $0x84] sm:$0xf]
        %v4006 = vld [vmem:[#allocation11 + $0x88] sm:$0xf]
        %v4007 = vld [vmem:[#allocation11 + $0x8c] sm:$0xf]
        %v4008 = vld [vmem:[#allocation11 + $0x90] sm:$0xf]
        %v4009 = vld [vmem:[#allocation11 + $0x94] sm:$0xf]
        %v4010 = vld [vmem:[#allocation11 + $0x98] sm:$0xf]
        %v4011 = vld [vmem:[#allocation11 + $0x9c] sm:$0xf]
        %v4012 = vld [vmem:[#allocation11 + $0xa0] sm:$0xf]
        %v4013 = vld [vmem:[#allocation11 + $0xa4] sm:$0xf]
        %v4014 = vld [vmem:[#allocation11 + $0xa8] sm:$0xf]
        %v4015 = vld [vmem:[#allocation11 + $0xac] sm:$0xf]
        %v4016 = vld [vmem:[#allocation11 + $0xb0] sm:$0xf]
        %v4017 = vld [vmem:[#allocation11 + $0xb4] sm:$0xf]
        %v4018 = vld [vmem:[#allocation11 + $0xb8] sm:$0xf]
        %v4019 = vld [vmem:[#allocation11 + $0xbc] sm:$0xf]
        %v4020 = vld [vmem:[#allocation11 + $0xc0] sm:$0xf]
        %v4021 = vld [vmem:[#allocation11 + $0xc4] sm:$0xf]
        %v4022 = vld [vmem:[#allocation11 + $0xc8] sm:$0xf]
        %v4023 = vld [vmem:[#allocation11 + $0xcc] sm:$0xf]
        %v4024 = vld [vmem:[#allocation11 + $0xd0] sm:$0xf]
        %v4025 = vld [vmem:[#allocation11 + $0xd4] sm:$0xf]
        %v4026 = vld [vmem:[#allocation11 + $0xd8] sm:$0xf]
        %v4027 = vld [vmem:[#allocation11 + $0xdc] sm:$0xf]
        %v4028 = vld [vmem:[#allocation11 + $0xe0] sm:$0xf]
        %v4029 = vld [vmem:[#allocation11 + $0xe4] sm:$0xf]
        %v4030 = vld [vmem:[#allocation11 + $0xe8] sm:$0xf]
        %v4031 = vld [vmem:[#allocation11 + $0xec] sm:$0xf]
        %v4032 = vld [vmem:[#allocation11 + $0xf0] sm:$0xf]
        %v4033 = vld [vmem:[#allocation11 + $0xf4] sm:$0xf]
        %v4034 = vld [vmem:[#allocation11 + $0xf8] sm:$0xf]
        %v4035 = vld [vmem:[#allocation11 + $0xfc] sm:$0xf]
        %v4036 = vld [vmem:[#allocation13] sm:$0x1]
        %v4038 = vlaneseq
        %v4039 = vshrl.u32 %v4038, 7
        %v4040 = vsub.s32 0, %v4039
        %v4041 = vrot.slane %v4036, %v4040
        %v4107 = vunpack.c.l.b16 %v3972
        %v4108 = vunpack.c.l.b16 %v3973
        %v4109 = vunpack.c.l.b16 %v3974
        %v4110 = vunpack.c.l.b16 %v3975
        %v4111 = vunpack.c.l.b16 %v3976
        %v4112 = vunpack.c.l.b16 %v3977
        %v4113 = vunpack.c.l.b16 %v3978
        %v4114 = vunpack.c.l.b16 %v3979
        %v4115 = vunpack.c.l.b16 %v3980
        %v4116 = vunpack.c.l.b16 %v3981
        %v4117 = vunpack.c.l.b16 %v3982
        %v4118 = vunpack.c.l.b16 %v3983
        %v4119 = vunpack.c.l.b16 %v3984
        %v4120 = vunpack.c.l.b16 %v3985
        %v4121 = vunpack.c.l.b16 %v3986
        %v4122 = vunpack.c.l.b16 %v3987
        %v4123 = vunpack.c.l.b16 %v3988
        %v4124 = vunpack.c.l.b16 %v3989
        %v4125 = vunpack.c.l.b16 %v3990
        %v4126 = vunpack.c.l.b16 %v3991
        %v4127 = vunpack.c.l.b16 %v3992
        %v4128 = vunpack.c.l.b16 %v3993
        %v4129 = vunpack.c.l.b16 %v3994
        %v4130 = vunpack.c.l.b16 %v3995
        %v4131 = vunpack.c.l.b16 %v3996
        %v4132 = vunpack.c.l.b16 %v3997
        %v4133 = vunpack.c.l.b16 %v3998
        %v4134 = vunpack.c.l.b16 %v3999
        %v4135 = vunpack.c.l.b16 %v4000
        %v4136 = vunpack.c.l.b16 %v4001
        %v4137 = vunpack.c.l.b16 %v4002
        %v4138 = vunpack.c.l.b16 %v4003
        %v4139 = vunpack.c.l.b16 %v4004
        %v4140 = vunpack.c.l.b16 %v4005
        %v4141 = vunpack.c.l.b16 %v4006
        %v4142 = vunpack.c.l.b16 %v4007
        %v4143 = vunpack.c.l.b16 %v4008
        %v4144 = vunpack.c.l.b16 %v4009
        %v4145 = vunpack.c.l.b16 %v4010
        %v4146 = vunpack.c.l.b16 %v4011
        %v4147 = vunpack.c.l.b16 %v4012
        %v4148 = vunpack.c.l.b16 %v4013
        %v4149 = vunpack.c.l.b16 %v4014
        %v4150 = vunpack.c.l.b16 %v4015
        %v4151 = vunpack.c.l.b16 %v4016
        %v4152 = vunpack.c.l.b16 %v4017
        %v4153 = vunpack.c.l.b16 %v4018
        %v4154 = vunpack.c.l.b16 %v4019
        %v4155 = vunpack.c.l.b16 %v4020
        %v4156 = vunpack.c.l.b16 %v4021
        %v4157 = vunpack.c.l.b16 %v4022
        %v4158 = vunpack.c.l.b16 %v4023
        %v4159 = vunpack.c.l.b16 %v4024
        %v4160 = vunpack.c.l.b16 %v4025
        %v4161 = vunpack.c.l.b16 %v4026
        %v4162 = vunpack.c.l.b16 %v4027
        %v4163 = vunpack.c.l.b16 %v4028
        %v4164 = vunpack.c.l.b16 %v4029
        %v4165 = vunpack.c.l.b16 %v4030
        %v4166 = vunpack.c.l.b16 %v4031
        %v4167 = vunpack.c.l.b16 %v4032
        %v4168 = vunpack.c.l.b16 %v4033
        %v4169 = vunpack.c.l.b16 %v4034
        %v4170 = vunpack.c.l.b16 %v4035
        %v4171 = vpack.c.b16 %v4108, %v4107
        %v4172 = vpack.c.b16 %v4110, %v4109
        %v4173 = vpack.c.b16 %v4112, %v4111
        %v4174 = vpack.c.b16 %v4114, %v4113
        %v4175 = vpack.c.b16 %v4116, %v4115
        %v4176 = vpack.c.b16 %v4118, %v4117
        %v4177 = vpack.c.b16 %v4120, %v4119
        %v4178 = vpack.c.b16 %v4122, %v4121
        %v4179 = vpack.c.b16 %v4124, %v4123
        %v4180 = vpack.c.b16 %v4126, %v4125
        %v4181 = vpack.c.b16 %v4128, %v4127
        %v4182 = vpack.c.b16 %v4130, %v4129
        %v4183 = vpack.c.b16 %v4132, %v4131
        %v4184 = vpack.c.b16 %v4134, %v4133
        %v4185 = vpack.c.b16 %v4136, %v4135
        %v4186 = vpack.c.b16 %v4138, %v4137
        %v4187 = vpack.c.b16 %v4140, %v4139
        %v4188 = vpack.c.b16 %v4142, %v4141
        %v4189 = vpack.c.b16 %v4144, %v4143
        %v4190 = vpack.c.b16 %v4146, %v4145
        %v4191 = vpack.c.b16 %v4148, %v4147
        %v4192 = vpack.c.b16 %v4150, %v4149
        %v4193 = vpack.c.b16 %v4152, %v4151
        %v4194 = vpack.c.b16 %v4154, %v4153
        %v4195 = vpack.c.b16 %v4156, %v4155
        %v4196 = vpack.c.b16 %v4158, %v4157
        %v4197 = vpack.c.b16 %v4160, %v4159
        %v4198 = vpack.c.b16 %v4162, %v4161
        %v4199 = vpack.c.b16 %v4164, %v4163
        %v4200 = vpack.c.b16 %v4166, %v4165
        %v4201 = vpack.c.b16 %v4168, %v4167
        %v4202 = vpack.c.b16 %v4170, %v4169
        %4235 = vmatprep.subr.bf16.mxu0 0
        %4236 = vmatpush1.bf16.msra.mxu0 %v4178
        %4237 = vmatprep.subr.bf16.mxu0 0
        %4238 = vmatpush1.bf16.msra.mxu0 %v4177
        %4239 = vmatprep.subr.bf16.mxu0 0
        %4240 = vmatpush1.bf16.msra.mxu0 %v4176
        %4241 = vmatprep.subr.bf16.mxu0 0
        %4242 = vmatpush1.bf16.msra.mxu0 %v4175
        %4243 = vmatprep.subr.bf16.mxu0 0
        %4244 = vmatpush1.bf16.msra.mxu0 %v4174
        %4245 = vmatprep.subr.bf16.mxu0 0
        %4246 = vmatpush1.bf16.msra.mxu0 %v4173
        %4247 = vmatprep.subr.bf16.mxu0 0
        %4248 = vmatpush1.bf16.msra.mxu0 %v4172
        %4249 = vmatprep.subr.bf16.mxu0 0
        %4250 = vmatpush1.bf16.msra.mxu0 %v4171
        %4251 = vmatprep.subr.bf16.mxu0 0
        %4252 = vmatpush2.bf16.msra.mxu0 %v4186
        %4253 = vmatprep.subr.bf16.mxu0 0
        %4254 = vmatpush2.bf16.msra.mxu0 %v4185
        %4255 = vmatprep.subr.bf16.mxu0 0
        %4256 = vmatpush2.bf16.msra.mxu0 %v4184
        %4257 = vmatprep.subr.bf16.mxu0 0
        %4258 = vmatpush2.bf16.msra.mxu0 %v4183
        %4259 = vmatprep.subr.bf16.mxu0 0
        %4260 = vmatpush2.bf16.msra.mxu0 %v4182
        %4261 = vmatprep.subr.bf16.mxu0 0
        %4262 = vmatpush2.bf16.msra.mxu0 %v4181
        %4263 = vmatprep.subr.bf16.mxu0 0
        %4264 = vmatpush2.bf16.msra.mxu0 %v4180
        %4265 = vmatprep.subr.bf16.mxu0 0
        %4266 = vmatpush2.bf16.msra.mxu0 %v4179
        %4267 = vmatprep.mubr.bf16.mxu0 %v3969
        %4268 = vmatmul.mubr.bf16.gmra.mxu0 %v3968
        %v4269 = vpop.f32.mrf.mxu0
        %v4270 = vadd.f32 %v4041, %v4269
        %v4271 = vpop.f32.mrf.mxu0
        %v4272 = vpop.f32.mrf.mxu0
        %v4273 = vpop.f32.mrf.mxu0
        %4274 = vdwg.mxu0
        %4275 = vmatprep.subr.bf16.mxu0 0
        %4276 = vmatpush1.bf16.msra.mxu0 %v4194
        %4277 = vmatprep.subr.bf16.mxu0 0
        %4278 = vmatpush1.bf16.msra.mxu0 %v4193
        %4279 = vmatprep.subr.bf16.mxu0 0
        %4280 = vmatpush1.bf16.msra.mxu0 %v4192
        %4281 = vmatprep.subr.bf16.mxu0 0
        %4282 = vmatpush1.bf16.msra.mxu0 %v4191
        %4283 = vmatprep.subr.bf16.mxu0 0
        %4284 = vmatpush1.bf16.msra.mxu0 %v4190
        %4285 = vmatprep.subr.bf16.mxu0 0
        %4286 = vmatpush1.bf16.msra.mxu0 %v4189
        %4287 = vmatprep.subr.bf16.mxu0 0
        %4288 = vmatpush1.bf16.msra.mxu0 %v4188
        %4289 = vmatprep.subr.bf16.mxu0 0
        %4290 = vmatpush1.bf16.msra.mxu0 %v4187
        %4291 = vmatprep.subr.bf16.mxu0 0
        %4292 = vmatpush2.bf16.msra.mxu0 %v4202
        %4293 = vmatprep.subr.bf16.mxu0 0
        %4294 = vmatpush2.bf16.msra.mxu0 %v4201
        %4295 = vmatprep.subr.bf16.mxu0 0
        %4296 = vmatpush2.bf16.msra.mxu0 %v4200
        %4297 = vmatprep.subr.bf16.mxu0 0
        %4298 = vmatpush2.bf16.msra.mxu0 %v4199
        %4299 = vmatprep.subr.bf16.mxu0 0
        %4300 = vmatpush2.bf16.msra.mxu0 %v4198
        %4301 = vmatprep.subr.bf16.mxu0 0
        %4302 = vmatpush2.bf16.msra.mxu0 %v4197
        %4303 = vmatprep.subr.bf16.mxu0 0
        %4304 = vmatpush2.bf16.msra.mxu0 %v4196
        %4305 = vmatprep.subr.bf16.mxu0 0
        %4306 = vmatpush2.bf16.msra.mxu0 %v4195
        %4307 = vmatprep.mubr.bf16.mxu0 %v3971
        %4308 = vmatmul.mubr.bf16.gmra.mxu0 %v3970
        %v4309 = vpop.f32.mrf.mxu0
        %v4310 = vadd.f32 %v4270, %v4309
        %v4311 = vpop.f32.mrf.mxu0
        %v4312 = vpop.f32.mrf.mxu0
        %v4313 = vpop.f32.mrf.mxu0
        %4314 = vdwg.mxu0
        %4315 = vst [vmem:[%s374] sm:$0xff] %v4310
        %s4316 = sand.u32 %s187, 1
        %s4317 = scalar_lea.sflag [#allocation4], %s4316
        %s4318 = sand.u32 %s187, 1
        %s4319 = smul.addr %s4318, 8
        %s4320 = scalar_lea.vmem [#allocation14], %s4319
        // Predicated region
        $region77: #{tpu_custom_call.1} parent=47 // pred_check
          %p4321 = pneg %p197
        $region78: #{tpu_custom_call.1} parent=47 // pred_check_branch
          %4323 = sbr.rel (%p4321) target = $region80
        $region79: #{tpu_custom_call.1} parent=47 // pred_region
          %s4325 = ssub.s32 128, 128
          %4326 = vsyncadd %s4317, %s4325
          %s4327 = smul.addr %s27, 128
          %s4328 = scalar_lea.hbm %s7, %s4327
          %s4330 = sshll.u32 %s4320, 4
          %s4331 = int_to_ptr.vmem [resolvable:$true] %s4330
          %4333 = dma.vmem_to_hbm [thread:$0]  %s4331, 128, %s4328, %s4317
        $region80: #{tpu_custom_call.1} parent=47 // pred_fallthru
          _
      $region48: #{tpu_custom_call.1} parent=5 // pred_fallthru
        _
      %p4334 = scmp.le.s32.totalorder 2, %s22
      // Predicated region
      $region81: #{tpu_custom_call.1} parent=5 // pred_check
        %p4335 = pneg %p4334
      $region82: #{tpu_custom_call.1} parent=5 // pred_check_branch
        %4337 = sbr.rel (%p4335) target = $region84
      $region83: #{tpu_custom_call.1} parent=5 // pred_region
        %s4338 = ssub.s32 %s22, 2
        // Predicated region
        $region85: #{tpu_custom_call.1} parent=83 // pred_check
          %p4339 = pneg %p203
        $region86: #{tpu_custom_call.1} parent=83 // pred_check_branch
          %4341 = sbr.rel (%p4339) target = $region88
        $region87: #{tpu_custom_call.1} parent=83 // pred_region
          %s4342 = sand.u32 %s188, 1
          %s4343 = scalar_lea.sflag [#allocation4], %s4342
          %s4344 = sand.u32 %s188, 1
          %s4345 = smul.addr %s4344, 8
          %s4346 = scalar_lea.vmem [#allocation14], %s4345
          %4347 = dma.done %s4343, 128
        $region88: #{tpu_custom_call.1} parent=83 // pred_fallthru
          _
      $region84: #{tpu_custom_call.1} parent=5 // pred_fallthru
        _
    $region6: #{tpu_custom_call.1} parent=1 // loop_footer
      %s26 = sadd.s32 1, %s22
    $region7: #{tpu_custom_call.1} parent=1 // loop_footer_branch
      %21 = sbr.rel target = $region3
    $region8: #{tpu_custom_call.1} parent=1 // loop_exit
      _
    %4348 = vsyncpa [#allocation3], 1
    %s4349 = scalar_lea.sflag [#allocation3], 1
    %4350 = vsyncpa %s4349, 1
    %4351 = vsyncpa [#allocation6], 1
    %4352 = vsyncpa [#allocation9], 1
    %4353 = vsyncpa [#allocation12], 1
    %4354 = vsyncpa [#allocation4], 1
    %s4355 = scalar_lea.sflag [#allocation4], 1
    %4356 = vsyncpa %s4355, 1

</llo_original>
